<compile_context>
chip_gen: v5e
topology: v5e:2x2
jax: 0.10.0
libtpu: 0.0.40
codegen_flags: <defaults>
</compile_context>

<pallas_src>
import functools

import jax
import jax.numpy as jnp
from jax.experimental import pallas as pl
from jax.experimental.pallas import tpu as pltpu

D_MODEL = 32
NUM_HEADS = 4
HEAD_DIM = D_MODEL // NUM_HEADS
DIM_FF = 4 * D_MODEL
NUM_BLOCKS = 2
LN_EPS = 1e-5
USE_PRE_NORM = False        # nn.TransformerEncoderLayer(norm_first=False)
NEG_INF = -1e9              # additive mask for cross-group attention

_STACK_NAMES = ('wq', 'wk', 'wv', 'bq', 'bk', 'bv', 'wo', 'bo',
                'w1', 'b1', 'w2', 'b2', 'g1', 'be1', 'g2', 'be2')


def _mtr_decoder_kernel(x_ref, gkr_ref, gkc_ref, gar_ref, gac_ref,
                        wq_ref, wk_ref, wv_ref, bq_ref, bk_ref, bv_ref,
                        wo_ref, bo_ref, w1_ref, b1_ref, w2_ref, b2_ref,
                        g1_ref, be1_ref, g2_ref, be2_ref,
                        o_ref):
    """Fused MTRDecoder forward for one block of rows.

    x_ref  : [R, D]      activations, canonical (b, k, a) row-major order
    g*_ref : [R,1]/[1,R] i32 group ids (K-attn groups share (b,a); A-attn share (b,k))
    w*/b*  : last-block weights stacked over 2 layers (0: attn_K, 1: attn_A);
             matmul weights bf16 (per-head slabs), biases / LN params f32.
    """
    x0 = x_ref[...].astype(jnp.float32)                      # [R, D]
    R, D = x0.shape

    # Additive group masks from tiny id vectors (no O(R^2) HBM constants).
    mask_k = jnp.where(gkr_ref[...] == gkc_ref[...], 0.0, NEG_INF).astype(jnp.float32)
    mask_a = jnp.where(gar_ref[...] == gac_ref[...], 0.0, NEG_INF).astype(jnp.float32)

    def layer_norm(v, g, b):
        mu = jnp.mean(v, axis=-1, keepdims=True)
        var = jnp.mean((v - mu) ** 2, axis=-1, keepdims=True)
        return (v - mu) * jax.lax.rsqrt(var + LN_EPS) * g + b

    def encoder_layer(h_in, mask, li):
        g1, be1 = g1_ref[li], be1_ref[li]
        g2, be2 = g2_ref[li], be2_ref[li]

        def sa_block(h):
            hb = h.astype(jnp.bfloat16)
            acc = jnp.zeros((R, D), jnp.float32)
            for hh in range(NUM_HEADS):            # static unroll, full-batch matmuls
                # Per-head QKV on pre-sliced weight slabs (no lane extracts of a
                # fused [R, 3D] result). 1/sqrt(HEAD_DIM) is folded into wq/bq.
                qh = jnp.dot(hb, wq_ref[li, hh],
                             preferred_element_type=jnp.float32) + bq_ref[li, hh]
                kh = jnp.dot(hb, wk_ref[li, hh],
                             preferred_element_type=jnp.float32) + bk_ref[li, hh]
                vh = jnp.dot(hb, wv_ref[li, hh],
                             preferred_element_type=jnp.float32) + bv_ref[li, hh]
                s = jax.lax.dot_general(                      # q @ k^T
                    qh.astype(jnp.bfloat16), kh.astype(jnp.bfloat16),
                    (((1,), (1,)), ((), ())),
                    preferred_element_type=jnp.float32)
                s = s + mask                                  # f32 softmax path
                s = s - jnp.max(s, axis=-1, keepdims=True)
                e = jnp.exp(s)
                p = e * pl.reciprocal(jnp.sum(e, axis=-1, keepdims=True),
                                      approx=True)            # EUP slot
                ctx_h = jnp.dot(p.astype(jnp.bfloat16), vh.astype(jnp.bfloat16),
                                preferred_element_type=jnp.float32)
                # Per-head accumulation into the out-projection: replaces the
                # 4-way lane concat + [R, D] x [D, D] matmul.
                acc = acc + jnp.dot(ctx_h.astype(jnp.bfloat16), wo_ref[li, hh],
                                    preferred_element_type=jnp.float32)
            return acc + bo_ref[li]

        def ff_block(h):
            u = jnp.dot(h.astype(jnp.bfloat16), w1_ref[li],
                        preferred_element_type=jnp.float32) + b1_ref[li]
            u = jnp.maximum(u, 0.0)                           # relu
            return jnp.dot(u.astype(jnp.bfloat16), w2_ref[li],
                           preferred_element_type=jnp.float32) + b2_ref[li]

        if USE_PRE_NORM:
            h1 = h_in + sa_block(layer_norm(h_in, g1, be1))
            return h1 + ff_block(layer_norm(h1, g2, be2))
        # post-norm (norm_first=False); dropout = identity (eval mode)
        h1 = layer_norm(h_in + sa_block(h_in), g1, be1)
        return layer_norm(h1 + ff_block(h1), g2, be2)

    # Only the LAST decoder block reaches the output (every block restarts from
    # the original query_token in the reference), so only its two layers are
    # traced at all.  The A-attention consumes the K-attention output, matching
    # the reference dataflow.
    hk = encoder_layer(x0, mask_k, 0)      # layer 0 = attn_K[-1]  (groups over K)
    out = encoder_layer(hk, mask_a, 1)     # layer 1 = attn_A[-1]  (groups over A)
    o_ref[...] = out.astype(o_ref.dtype)


def _prep_last_block_params(params):
    """Per-head weight slabs for the LAST decoder block only; attention scale
    folded into (wq, bq); matmul weights cast to bf16 (f32 accumulation in-kernel)."""
    D, H, Hd, F = D_MODEL, NUM_HEADS, HEAD_DIM, DIM_FF
    scale = 1.0 / float(HEAD_DIM) ** 0.5
    layers = (params['attn_K'][NUM_BLOCKS - 1], params['attn_A'][NUM_BLOCKS - 1])

    def prep(lp):
        wqkv = lp['w_qkv']                                   # [D, 3D] ("x @ W" layout)
        bqkv = lp['b_qkv'].reshape(3 * D)
        per_head = lambda w: w.reshape(D, H, Hd).transpose(1, 0, 2)   # [H, D, Hd]
        return dict(
            wq=(per_head(wqkv[:, :D]) * scale).astype(jnp.bfloat16),
            wk=per_head(wqkv[:, D:2 * D]).astype(jnp.bfloat16),
            wv=per_head(wqkv[:, 2 * D:]).astype(jnp.bfloat16),
            bq=(bqkv[:D] * scale).reshape(H, 1, Hd),
            bk=bqkv[D:2 * D].reshape(H, 1, Hd),
            bv=bqkv[2 * D:].reshape(H, 1, Hd),
            wo=lp['w_o'].reshape(H, Hd, D).astype(jnp.bfloat16),      # per-head rows
            bo=lp['b_o'].reshape(1, D),
            w1=lp['w1'].astype(jnp.bfloat16), b1=lp['b1'].reshape(1, F),
            w2=lp['w2'].astype(jnp.bfloat16), b2=lp['b2'].reshape(1, D),
            g1=lp['ln1_g'].reshape(1, D), be1=lp['ln1_b'].reshape(1, D),
            g2=lp['ln2_g'].reshape(1, D), be2=lp['ln2_b'].reshape(1, D))

    p0, p1 = prep(layers[0]), prep(layers[1])
    return [jnp.stack([p0[n], p1[n]], axis=0) for n in _STACK_NAMES]


def mtr_decoder_forward(query_token, time_emb, params, *, batch_grid_threshold=4):
    """query_token: [B, K, A, D]; time_emb: [B, D].

    The adaLN/modulate path of the reference is dead (its result is overwritten
    by the rearrange of query_token before it is ever used, and the final
    Linear is zero-initialized), so it is dropped at trace time.
    """
    del time_emb
    B, K, A, D = query_token.shape
    assert D == D_MODEL
    R = B * K * A

    # v7x: shard the batch over the two TensorCores once B is large enough to
    # amortize the ~0.35 us/step grid overhead; single fused step otherwise.
    use_batch_grid = B >= batch_grid_threshold
    B_blk = B if not use_batch_grid else 1
    R_blk = B_blk * K * A

    # Block-local group-id vectors (row + column orientation) replace the two
    # [R, R] f32 masks: O(R) instead of O(R^2) bytes, identical for every block.
    rloc = jnp.arange(R_blk, dtype=jnp.int32)
    b_loc, k_loc, a_loc = rloc // (K * A), (rloc // A) % K, rloc % A
    gk = b_loc * A + a_loc               # K-attention groups: rows sharing (b, a)
    ga = b_loc * K + k_loc               # A-attention groups: rows sharing (b, k)
    id_vecs = [gk.reshape(R_blk, 1), gk.reshape(1, R_blk),
               ga.reshape(R_blk, 1), ga.reshape(1, R_blk)]

    stacked = _prep_last_block_params(params)
    x2 = query_token.reshape(R, D)       # canonical (b, k, a) row order

    def _full(arr):                      # grid-invariant resident operand
        n = arr.ndim
        return pl.BlockSpec(arr.shape, lambda b: (0,) * n)

    row_spec = pl.BlockSpec((R_blk, D), lambda b: (b, 0))

    # TODO(synk): if this decoder is called once per diffusion step, fuse steps
    # into one pallas_call (grid over steps) so the ~100 KB of bf16 weights and
    # the launch cost are amortized across calls.
    out2 = pl.pallas_call(
        _mtr_decoder_kernel,
        out_shape=jax.ShapeDtypeStruct((R, D), query_token.dtype),
        grid_spec=pltpu.PrefetchScalarGridSpec(
            num_scalar_prefetch=0,
            grid=(B // B_blk,),
            in_specs=[row_spec] + [_full(a) for a in id_vecs]
                     + [_full(w) for w in stacked],
            out_specs=row_spec),
        compiler_params=pltpu.CompilerParams(
            dimension_semantics=("parallel",),
            vmem_limit_bytes=32 * 1024 * 1024),
    )(x2, *id_vecs, *stacked)
    return out2.reshape(B, K, A, D)


def init_params(key):
    """Deterministic synthetic parameters (shapes match the PyTorch module).
    Linear weights are stored pre-transposed as [in, out] so the kernel does
    x @ W + b (equivalent to PyTorch's x @ W_pt.T + b)."""
    D, F = D_MODEL, DIM_FF

    def enc_params(k):
        ks = jax.random.split(k, 8)
        return dict(
            w_qkv=jax.random.normal(ks[0], (D, 3 * D), jnp.float32) * 0.02,
            b_qkv=jax.random.normal(ks[1], (3 * D,), jnp.float32) * 0.02,
            w_o=jax.random.normal(ks[2], (D, D), jnp.float32) * 0.02,
            b_o=jax.random.normal(ks[3], (D,), jnp.float32) * 0.02,
            w1=jax.random.normal(ks[4], (D, F), jnp.float32) * 0.02,
            b1=jax.random.normal(ks[5], (F,), jnp.float32) * 0.02,
            w2=jax.random.normal(ks[6], (F, D), jnp.float32) * 0.02,
            b2=jax.random.normal(ks[7], (D,), jnp.float32) * 0.02,
            ln1_g=jnp.ones((D,), jnp.float32), ln1_b=jnp.zeros((D,), jnp.float32),
            ln2_g=jnp.ones((D,), jnp.float32), ln2_b=jnp.zeros((D,), jnp.float32))

    params = {'attn_K': [], 'attn_A': [], 'adaln': []}
    keys = jax.random.split(key, 2 * NUM_BLOCKS)
    for i in range(NUM_BLOCKS):
        params['attn_K'].append(enc_params(keys[2 * i]))
        params['attn_A'].append(enc_params(keys[2 * i + 1]))
        # adaLN = Sequential(SiLU, Linear(D, 2D)); final Linear zero-initialized.
        # Kept for structural fidelity; dead in the reference forward.
        params['adaln'].append(dict(w=jnp.zeros((D, 2 * D), jnp.float32),
                                    b=jnp.zeros((2 * D,), jnp.float32)))
    return params


if __name__ == "__main__":
    key = jax.random.PRNGKey(0)
    kq, kt, kp = jax.random.split(key, 3)
    B, K, A = 2, 6, 4
    query_token = jax.random.normal(kq, (B, K, A, D_MODEL), jnp.float32)
    time_emb = jax.random.normal(kt, (B, D_MODEL), jnp.float32)
    params = init_params(kp)

    # Default path: single fused step (whole working set resident in VMEM).
    fwd = jax.jit(mtr_decoder_forward)
    out = fwd(query_token, time_emb, params)
    jax.block_until_ready(out)
    assert out.shape == (B, K, A, D_MODEL) and out.dtype == jnp.float32
    assert bool(jnp.all(jnp.isfinite(out)))

    # Batch-gridded path (v7x dual-TensorCore sharding); must agree with the
    # fused path (same math, per-batch blocks, cross-batch terms exactly 0).
    fwd_grid = jax.jit(functools.partial(mtr_decoder_forward,
                                         batch_grid_threshold=1))
    out_grid = fwd_grid(query_token, time_emb, params)
    jax.block_until_ready(out_grid)
    assert out_grid.shape == out.shape
    assert bool(jnp.allclose(out, out_grid, rtol=2e-3, atol=2e-3))

    print("KERNEL_OK")
</pallas_src>

<mosaic_0001>
module attributes {stable_mosaic.version = 11 : i64} {
  func.func @_mtr_decoder_kernel(%arg0: i32, %arg1: memref<48x32xf32, #tpu.memory_space<vmem>>, %arg2: memref<48x1xi32, #tpu.memory_space<vmem>>, %arg3: memref<1x48xi32, #tpu.memory_space<vmem>>, %arg4: memref<48x1xi32, #tpu.memory_space<vmem>>, %arg5: memref<1x48xi32, #tpu.memory_space<vmem>>, %arg6: memref<2x4x32x8xbf16, #tpu.memory_space<vmem>>, %arg7: memref<2x4x32x8xbf16, #tpu.memory_space<vmem>>, %arg8: memref<2x4x32x8xbf16, #tpu.memory_space<vmem>>, %arg9: memref<2x4x1x8xf32, #tpu.memory_space<vmem>>, %arg10: memref<2x4x1x8xf32, #tpu.memory_space<vmem>>, %arg11: memref<2x4x1x8xf32, #tpu.memory_space<vmem>>, %arg12: memref<2x4x8x32xbf16, #tpu.memory_space<vmem>>, %arg13: memref<2x1x32xf32, #tpu.memory_space<vmem>>, %arg14: memref<2x32x128xbf16, #tpu.memory_space<vmem>>, %arg15: memref<2x1x128xf32, #tpu.memory_space<vmem>>, %arg16: memref<2x128x32xbf16, #tpu.memory_space<vmem>>, %arg17: memref<2x1x32xf32, #tpu.memory_space<vmem>>, %arg18: memref<2x1x32xf32, #tpu.memory_space<vmem>>, %arg19: memref<2x1x32xf32, #tpu.memory_space<vmem>>, %arg20: memref<2x1x32xf32, #tpu.memory_space<vmem>>, %arg21: memref<2x1x32xf32, #tpu.memory_space<vmem>>, %arg22: memref<48x32xf32, #tpu.memory_space<vmem>>) attributes {dimension_semantics = [#tpu.dimension_semantics<parallel>], iteration_bounds = array<i64: 1>, scalar_prefetch = 0 : i64, scratch_operands = 0 : i64, tpu.core_type = #tpu.core_type<tc>, window_params = [{transform_indices = @transform_0, window_bounds = array<i64: 48, 32>}, {pipeline_mode = #tpu.pipeline_mode<synchronous>, transform_indices = @transform_1, window_bounds = array<i64: 48, 1>}, {pipeline_mode = #tpu.pipeline_mode<synchronous>, transform_indices = @transform_2, window_bounds = array<i64: 1, 48>}, {pipeline_mode = #tpu.pipeline_mode<synchronous>, transform_indices = @transform_3, window_bounds = array<i64: 48, 1>}, {pipeline_mode = #tpu.pipeline_mode<synchronous>, transform_indices = @transform_4, window_bounds = array<i64: 1, 48>}, {pipeline_mode = #tpu.pipeline_mode<synchronous>, transform_indices = @transform_5, window_bounds = array<i64: 2, 4, 32, 8>}, {pipeline_mode = #tpu.pipeline_mode<synchronous>, transform_indices = @transform_6, window_bounds = array<i64: 2, 4, 32, 8>}, {pipeline_mode = #tpu.pipeline_mode<synchronous>, transform_indices = @transform_7, window_bounds = array<i64: 2, 4, 32, 8>}, {pipeline_mode = #tpu.pipeline_mode<synchronous>, transform_indices = @transform_8, window_bounds = array<i64: 2, 4, 1, 8>}, {pipeline_mode = #tpu.pipeline_mode<synchronous>, transform_indices = @transform_9, window_bounds = array<i64: 2, 4, 1, 8>}, {pipeline_mode = #tpu.pipeline_mode<synchronous>, transform_indices = @transform_10, window_bounds = array<i64: 2, 4, 1, 8>}, {pipeline_mode = #tpu.pipeline_mode<synchronous>, transform_indices = @transform_11, window_bounds = array<i64: 2, 4, 8, 32>}, {pipeline_mode = #tpu.pipeline_mode<synchronous>, transform_indices = @transform_12, window_bounds = array<i64: 2, 1, 32>}, {pipeline_mode = #tpu.pipeline_mode<synchronous>, transform_indices = @transform_13, window_bounds = array<i64: 2, 32, 128>}, {pipeline_mode = #tpu.pipeline_mode<synchronous>, transform_indices = @transform_14, window_bounds = array<i64: 2, 1, 128>}, {pipeline_mode = #tpu.pipeline_mode<synchronous>, transform_indices = @transform_15, window_bounds = array<i64: 2, 128, 32>}, {pipeline_mode = #tpu.pipeline_mode<synchronous>, transform_indices = @transform_16, window_bounds = array<i64: 2, 1, 32>}, {pipeline_mode = #tpu.pipeline_mode<synchronous>, transform_indices = @transform_17, window_bounds = array<i64: 2, 1, 32>}, {pipeline_mode = #tpu.pipeline_mode<synchronous>, transform_indices = @transform_18, window_bounds = array<i64: 2, 1, 32>}, {pipeline_mode = #tpu.pipeline_mode<synchronous>, transform_indices = @transform_19, window_bounds = array<i64: 2, 1, 32>}, {pipeline_mode = #tpu.pipeline_mode<synchronous>, transform_indices = @transform_20, window_bounds = array<i64: 2, 1, 32>}, {transform_indices = @transform_21, window_bounds = array<i64: 48, 32>}]} {
    %c0 = arith.constant 0 : index
    %c0_0 = arith.constant 0 : index
    %0 = vector.load %arg1[%c0, %c0_0] : memref<48x32xf32, #tpu.memory_space<vmem>>, vector<48x32xf32>
    %c0_1 = arith.constant 0 : index
    %c0_2 = arith.constant 0 : index
    %1 = vector.load %arg2[%c0_1, %c0_2] : memref<48x1xi32, #tpu.memory_space<vmem>>, vector<48x1xi32>
    %c0_3 = arith.constant 0 : index
    %c0_4 = arith.constant 0 : index
    %2 = vector.load %arg3[%c0_3, %c0_4] : memref<1x48xi32, #tpu.memory_space<vmem>>, vector<1x48xi32>
    %3 = vector.broadcast %1 : vector<48x1xi32> to vector<48x48xi32>
    %4 = vector.broadcast %2 : vector<1x48xi32> to vector<48x48xi32>
    %5 = arith.cmpi eq, %3, %4 : vector<48x48xi32>
    %cst = arith.constant 0.000000e+00 : f32
    %cst_5 = arith.constant -1.000000e+09 : f32
    %6 = vector.broadcast %cst : f32 to vector<48x48xf32>
    %7 = vector.broadcast %cst_5 : f32 to vector<48x48xf32>
    %8 = arith.select %5, %6, %7 : vector<48x48xi1>, vector<48x48xf32>
    %c0_6 = arith.constant 0 : index
    %c0_7 = arith.constant 0 : index
    %9 = vector.load %arg4[%c0_6, %c0_7] : memref<48x1xi32, #tpu.memory_space<vmem>>, vector<48x1xi32>
    %c0_8 = arith.constant 0 : index
    %c0_9 = arith.constant 0 : index
    %10 = vector.load %arg5[%c0_8, %c0_9] : memref<1x48xi32, #tpu.memory_space<vmem>>, vector<1x48xi32>
    %11 = vector.broadcast %9 : vector<48x1xi32> to vector<48x48xi32>
    %12 = vector.broadcast %10 : vector<1x48xi32> to vector<48x48xi32>
    %13 = arith.cmpi eq, %11, %12 : vector<48x48xi32>
    %cst_10 = arith.constant 0.000000e+00 : f32
    %cst_11 = arith.constant -1.000000e+09 : f32
    %14 = vector.broadcast %cst_10 : f32 to vector<48x48xf32>
    %15 = vector.broadcast %cst_11 : f32 to vector<48x48xf32>
    %16 = arith.select %13, %14, %15 : vector<48x48xi1>, vector<48x48xf32>
    %c0_12 = arith.constant 0 : index
    %c0_13 = arith.constant 0 : index
    %c0_14 = arith.constant 0 : index
    %17 = vector.load %arg18[%c0_12, %c0_13, %c0_14] : memref<2x1x32xf32, #tpu.memory_space<vmem>>, vector<1x1x32xf32>
    %18 = vector.shape_cast %17 : vector<1x1x32xf32> to vector<1x32xf32>
    %c0_15 = arith.constant 0 : index
    %c0_16 = arith.constant 0 : index
    %c0_17 = arith.constant 0 : index
    %19 = vector.load %arg19[%c0_15, %c0_16, %c0_17] : memref<2x1x32xf32, #tpu.memory_space<vmem>>, vector<1x1x32xf32>
    %20 = vector.shape_cast %19 : vector<1x1x32xf32> to vector<1x32xf32>
    %c0_18 = arith.constant 0 : index
    %c0_19 = arith.constant 0 : index
    %c0_20 = arith.constant 0 : index
    %21 = vector.load %arg20[%c0_18, %c0_19, %c0_20] : memref<2x1x32xf32, #tpu.memory_space<vmem>>, vector<1x1x32xf32>
    %22 = vector.shape_cast %21 : vector<1x1x32xf32> to vector<1x32xf32>
    %c0_21 = arith.constant 0 : index
    %c0_22 = arith.constant 0 : index
    %c0_23 = arith.constant 0 : index
    %23 = vector.load %arg21[%c0_21, %c0_22, %c0_23] : memref<2x1x32xf32, #tpu.memory_space<vmem>>, vector<1x1x32xf32>
    %24 = vector.shape_cast %23 : vector<1x1x32xf32> to vector<1x32xf32>
    %25 = arith.truncf %0 : vector<48x32xf32> to vector<48x32xbf16>
    %cst_24 = arith.constant 0.000000e+00 : f32
    %26 = vector.broadcast %cst_24 : f32 to vector<48x32xf32>
    %c0_25 = arith.constant 0 : index
    %c0_26 = arith.constant 0 : index
    %c0_27 = arith.constant 0 : index
    %c0_28 = arith.constant 0 : index
    %27 = vector.load %arg6[%c0_25, %c0_26, %c0_27, %c0_28] : memref<2x4x32x8xbf16, #tpu.memory_space<vmem>>, vector<1x1x32x8xbf16>
    %28 = vector.shape_cast %27 : vector<1x1x32x8xbf16> to vector<32x8xbf16>
    %cst_29 = arith.constant dense<0.000000e+00> : vector<48x8xf32>
    %29 = tpu.matmul %25, %28, %cst_29 {dimension_numbers = #tpu.dot_dimension_numbers<[1], [0], [0], [1], [0, 0, 1, 1], [], []>} : vector<48x32xbf16>, vector<32x8xbf16>, vector<48x8xf32> -> vector<48x8xf32>
    %c0_30 = arith.constant 0 : index
    %c0_31 = arith.constant 0 : index
    %c0_32 = arith.constant 0 : index
    %c0_33 = arith.constant 0 : index
    %30 = vector.load %arg9[%c0_30, %c0_31, %c0_32, %c0_33] : memref<2x4x1x8xf32, #tpu.memory_space<vmem>>, vector<1x1x1x8xf32>
    %31 = vector.shape_cast %30 : vector<1x1x1x8xf32> to vector<1x8xf32>
    %32 = vector.broadcast %31 : vector<1x8xf32> to vector<48x8xf32>
    %33 = arith.addf %29, %32 : vector<48x8xf32>
    %c0_34 = arith.constant 0 : index
    %c0_35 = arith.constant 0 : index
    %c0_36 = arith.constant 0 : index
    %c0_37 = arith.constant 0 : index
    %34 = vector.load %arg7[%c0_34, %c0_35, %c0_36, %c0_37] : memref<2x4x32x8xbf16, #tpu.memory_space<vmem>>, vector<1x1x32x8xbf16>
    %35 = vector.shape_cast %34 : vector<1x1x32x8xbf16> to vector<32x8xbf16>
    %cst_38 = arith.constant dense<0.000000e+00> : vector<48x8xf32>
    %36 = tpu.matmul %25, %35, %cst_38 {dimension_numbers = #tpu.dot_dimension_numbers<[1], [0], [0], [1], [0, 0, 1, 1], [], []>} : vector<48x32xbf16>, vector<32x8xbf16>, vector<48x8xf32> -> vector<48x8xf32>
    %c0_39 = arith.constant 0 : index
    %c0_40 = arith.constant 0 : index
    %c0_41 = arith.constant 0 : index
    %c0_42 = arith.constant 0 : index
    %37 = vector.load %arg10[%c0_39, %c0_40, %c0_41, %c0_42] : memref<2x4x1x8xf32, #tpu.memory_space<vmem>>, vector<1x1x1x8xf32>
    %38 = vector.shape_cast %37 : vector<1x1x1x8xf32> to vector<1x8xf32>
    %39 = vector.broadcast %38 : vector<1x8xf32> to vector<48x8xf32>
    %40 = arith.addf %36, %39 : vector<48x8xf32>
    %c0_43 = arith.constant 0 : index
    %c0_44 = arith.constant 0 : index
    %c0_45 = arith.constant 0 : index
    %c0_46 = arith.constant 0 : index
    %41 = vector.load %arg8[%c0_43, %c0_44, %c0_45, %c0_46] : memref<2x4x32x8xbf16, #tpu.memory_space<vmem>>, vector<1x1x32x8xbf16>
    %42 = vector.shape_cast %41 : vector<1x1x32x8xbf16> to vector<32x8xbf16>
    %cst_47 = arith.constant dense<0.000000e+00> : vector<48x8xf32>
    %43 = tpu.matmul %25, %42, %cst_47 {dimension_numbers = #tpu.dot_dimension_numbers<[1], [0], [0], [1], [0, 0, 1, 1], [], []>} : vector<48x32xbf16>, vector<32x8xbf16>, vector<48x8xf32> -> vector<48x8xf32>
    %c0_48 = arith.constant 0 : index
    %c0_49 = arith.constant 0 : index
    %c0_50 = arith.constant 0 : index
    %c0_51 = arith.constant 0 : index
    %44 = vector.load %arg11[%c0_48, %c0_49, %c0_50, %c0_51] : memref<2x4x1x8xf32, #tpu.memory_space<vmem>>, vector<1x1x1x8xf32>
    %45 = vector.shape_cast %44 : vector<1x1x1x8xf32> to vector<1x8xf32>
    %46 = vector.broadcast %45 : vector<1x8xf32> to vector<48x8xf32>
    %47 = arith.addf %43, %46 : vector<48x8xf32>
    %48 = arith.truncf %33 : vector<48x8xf32> to vector<48x8xbf16>
    %49 = arith.truncf %40 : vector<48x8xf32> to vector<48x8xbf16>
    %cst_52 = arith.constant dense<0.000000e+00> : vector<48x48xf32>
    %50 = tpu.matmul %48, %49, %cst_52 {dimension_numbers = #tpu.dot_dimension_numbers<[1], [1], [0], [0], [0, 0, 1, 0], [], []>} : vector<48x8xbf16>, vector<48x8xbf16>, vector<48x48xf32> -> vector<48x48xf32>
    %51 = arith.addf %50, %8 : vector<48x48xf32>
    %cst_53 = arith.constant dense<0xFF800000> : vector<48xf32>
    %52 = vector.multi_reduction <maximumf>, %51, %cst_53 [1] : vector<48x48xf32> to vector<48xf32>
    %53 = vector.shape_cast %52 : vector<48xf32> to vector<48x1xf32>
    %54 = vector.broadcast %53 : vector<48x1xf32> to vector<48x48xf32>
    %55 = arith.subf %51, %54 : vector<48x48xf32>
    %56 = math.exp %55 : vector<48x48xf32>
    %cst_54 = arith.constant dense<0.000000e+00> : vector<48xf32>
    %57 = vector.multi_reduction <add>, %56, %cst_54 [1] : vector<48x48xf32> to vector<48xf32>
    %58 = vector.shape_cast %57 : vector<48xf32> to vector<48x1xf32>
    %59 = tpu.reciprocal %58 {approx = true} : vector<48x1xf32> -> vector<48x1xf32>
    %60 = vector.broadcast %59 : vector<48x1xf32> to vector<48x48xf32>
    %61 = arith.mulf %56, %60 : vector<48x48xf32>
    %62 = arith.truncf %61 : vector<48x48xf32> to vector<48x48xbf16>
    %63 = arith.truncf %47 : vector<48x8xf32> to vector<48x8xbf16>
    %cst_55 = arith.constant dense<0.000000e+00> : vector<48x8xf32>
    %64 = tpu.matmul %62, %63, %cst_55 {dimension_numbers = #tpu.dot_dimension_numbers<[1], [0], [0], [1], [0, 0, 1, 1], [], []>} : vector<48x48xbf16>, vector<48x8xbf16>, vector<48x8xf32> -> vector<48x8xf32>
    %65 = arith.truncf %64 : vector<48x8xf32> to vector<48x8xbf16>
    %c0_56 = arith.constant 0 : index
    %c0_57 = arith.constant 0 : index
    %c0_58 = arith.constant 0 : index
    %c0_59 = arith.constant 0 : index
    %66 = vector.load %arg12[%c0_56, %c0_57, %c0_58, %c0_59] : memref<2x4x8x32xbf16, #tpu.memory_space<vmem>>, vector<1x1x8x32xbf16>
    %67 = vector.shape_cast %66 : vector<1x1x8x32xbf16> to vector<8x32xbf16>
    %cst_60 = arith.constant dense<0.000000e+00> : vector<48x32xf32>
    %68 = tpu.matmul %65, %67, %cst_60 {dimension_numbers = #tpu.dot_dimension_numbers<[1], [0], [0], [1], [0, 0, 1, 1], [], []>} : vector<48x8xbf16>, vector<8x32xbf16>, vector<48x32xf32> -> vector<48x32xf32>
    %69 = arith.addf %26, %68 : vector<48x32xf32>
    %c0_61 = arith.constant 0 : index
    %c1 = arith.constant 1 : index
    %c0_62 = arith.constant 0 : index
    %c0_63 = arith.constant 0 : index
    %70 = vector.load %arg6[%c0_61, %c1, %c0_62, %c0_63] : memref<2x4x32x8xbf16, #tpu.memory_space<vmem>>, vector<1x1x32x8xbf16>
    %71 = vector.shape_cast %70 : vector<1x1x32x8xbf16> to vector<32x8xbf16>
    %cst_64 = arith.constant dense<0.000000e+00> : vector<48x8xf32>
    %72 = tpu.matmul %25, %71, %cst_64 {dimension_numbers = #tpu.dot_dimension_numbers<[1], [0], [0], [1], [0, 0, 1, 1], [], []>} : vector<48x32xbf16>, vector<32x8xbf16>, vector<48x8xf32> -> vector<48x8xf32>
    %c0_65 = arith.constant 0 : index
    %c1_66 = arith.constant 1 : index
    %c0_67 = arith.constant 0 : index
    %c0_68 = arith.constant 0 : index
    %73 = vector.load %arg9[%c0_65, %c1_66, %c0_67, %c0_68] : memref<2x4x1x8xf32, #tpu.memory_space<vmem>>, vector<1x1x1x8xf32>
    %74 = vector.shape_cast %73 : vector<1x1x1x8xf32> to vector<1x8xf32>
    %75 = vector.broadcast %74 : vector<1x8xf32> to vector<48x8xf32>
    %76 = arith.addf %72, %75 : vector<48x8xf32>
    %c0_69 = arith.constant 0 : index
    %c1_70 = arith.constant 1 : index
    %c0_71 = arith.constant 0 : index
    %c0_72 = arith.constant 0 : index
    %77 = vector.load %arg7[%c0_69, %c1_70, %c0_71, %c0_72] : memref<2x4x32x8xbf16, #tpu.memory_space<vmem>>, vector<1x1x32x8xbf16>
    %78 = vector.shape_cast %77 : vector<1x1x32x8xbf16> to vector<32x8xbf16>
    %cst_73 = arith.constant dense<0.000000e+00> : vector<48x8xf32>
    %79 = tpu.matmul %25, %78, %cst_73 {dimension_numbers = #tpu.dot_dimension_numbers<[1], [0], [0], [1], [0, 0, 1, 1], [], []>} : vector<48x32xbf16>, vector<32x8xbf16>, vector<48x8xf32> -> vector<48x8xf32>
    %c0_74 = arith.constant 0 : index
    %c1_75 = arith.constant 1 : index
    %c0_76 = arith.constant 0 : index
    %c0_77 = arith.constant 0 : index
    %80 = vector.load %arg10[%c0_74, %c1_75, %c0_76, %c0_77] : memref<2x4x1x8xf32, #tpu.memory_space<vmem>>, vector<1x1x1x8xf32>
    %81 = vector.shape_cast %80 : vector<1x1x1x8xf32> to vector<1x8xf32>
    %82 = vector.broadcast %81 : vector<1x8xf32> to vector<48x8xf32>
    %83 = arith.addf %79, %82 : vector<48x8xf32>
    %c0_78 = arith.constant 0 : index
    %c1_79 = arith.constant 1 : index
    %c0_80 = arith.constant 0 : index
    %c0_81 = arith.constant 0 : index
    %84 = vector.load %arg8[%c0_78, %c1_79, %c0_80, %c0_81] : memref<2x4x32x8xbf16, #tpu.memory_space<vmem>>, vector<1x1x32x8xbf16>
    %85 = vector.shape_cast %84 : vector<1x1x32x8xbf16> to vector<32x8xbf16>
    %cst_82 = arith.constant dense<0.000000e+00> : vector<48x8xf32>
    %86 = tpu.matmul %25, %85, %cst_82 {dimension_numbers = #tpu.dot_dimension_numbers<[1], [0], [0], [1], [0, 0, 1, 1], [], []>} : vector<48x32xbf16>, vector<32x8xbf16>, vector<48x8xf32> -> vector<48x8xf32>
    %c0_83 = arith.constant 0 : index
    %c1_84 = arith.constant 1 : index
    %c0_85 = arith.constant 0 : index
    %c0_86 = arith.constant 0 : index
    %87 = vector.load %arg11[%c0_83, %c1_84, %c0_85, %c0_86] : memref<2x4x1x8xf32, #tpu.memory_space<vmem>>, vector<1x1x1x8xf32>
    %88 = vector.shape_cast %87 : vector<1x1x1x8xf32> to vector<1x8xf32>
    %89 = vector.broadcast %88 : vector<1x8xf32> to vector<48x8xf32>
    %90 = arith.addf %86, %89 : vector<48x8xf32>
    %91 = arith.truncf %76 : vector<48x8xf32> to vector<48x8xbf16>
    %92 = arith.truncf %83 : vector<48x8xf32> to vector<48x8xbf16>
    %cst_87 = arith.constant dense<0.000000e+00> : vector<48x48xf32>
    %93 = tpu.matmul %91, %92, %cst_87 {dimension_numbers = #tpu.dot_dimension_numbers<[1], [1], [0], [0], [0, 0, 1, 0], [], []>} : vector<48x8xbf16>, vector<48x8xbf16>, vector<48x48xf32> -> vector<48x48xf32>
    %94 = arith.addf %93, %8 : vector<48x48xf32>
    %cst_88 = arith.constant dense<0xFF800000> : vector<48xf32>
    %95 = vector.multi_reduction <maximumf>, %94, %cst_88 [1] : vector<48x48xf32> to vector<48xf32>
    %96 = vector.shape_cast %95 : vector<48xf32> to vector<48x1xf32>
    %97 = vector.broadcast %96 : vector<48x1xf32> to vector<48x48xf32>
    %98 = arith.subf %94, %97 : vector<48x48xf32>
    %99 = math.exp %98 : vector<48x48xf32>
    %cst_89 = arith.constant dense<0.000000e+00> : vector<48xf32>
    %100 = vector.multi_reduction <add>, %99, %cst_89 [1] : vector<48x48xf32> to vector<48xf32>
    %101 = vector.shape_cast %100 : vector<48xf32> to vector<48x1xf32>
    %102 = tpu.reciprocal %101 {approx = true} : vector<48x1xf32> -> vector<48x1xf32>
    %103 = vector.broadcast %102 : vector<48x1xf32> to vector<48x48xf32>
    %104 = arith.mulf %99, %103 : vector<48x48xf32>
    %105 = arith.truncf %104 : vector<48x48xf32> to vector<48x48xbf16>
    %106 = arith.truncf %90 : vector<48x8xf32> to vector<48x8xbf16>
    %cst_90 = arith.constant dense<0.000000e+00> : vector<48x8xf32>
    %107 = tpu.matmul %105, %106, %cst_90 {dimension_numbers = #tpu.dot_dimension_numbers<[1], [0], [0], [1], [0, 0, 1, 1], [], []>} : vector<48x48xbf16>, vector<48x8xbf16>, vector<48x8xf32> -> vector<48x8xf32>
    %108 = arith.truncf %107 : vector<48x8xf32> to vector<48x8xbf16>
    %c0_91 = arith.constant 0 : index
    %c1_92 = arith.constant 1 : index
    %c0_93 = arith.constant 0 : index
    %c0_94 = arith.constant 0 : index
    %109 = vector.load %arg12[%c0_91, %c1_92, %c0_93, %c0_94] : memref<2x4x8x32xbf16, #tpu.memory_space<vmem>>, vector<1x1x8x32xbf16>
    %110 = vector.shape_cast %109 : vector<1x1x8x32xbf16> to vector<8x32xbf16>
    %cst_95 = arith.constant dense<0.000000e+00> : vector<48x32xf32>
    %111 = tpu.matmul %108, %110, %cst_95 {dimension_numbers = #tpu.dot_dimension_numbers<[1], [0], [0], [1], [0, 0, 1, 1], [], []>} : vector<48x8xbf16>, vector<8x32xbf16>, vector<48x32xf32> -> vector<48x32xf32>
    %112 = arith.addf %69, %111 : vector<48x32xf32>
    %c0_96 = arith.constant 0 : index
    %c2 = arith.constant 2 : index
    %c0_97 = arith.constant 0 : index
    %c0_98 = arith.constant 0 : index
    %113 = vector.load %arg6[%c0_96, %c2, %c0_97, %c0_98] : memref<2x4x32x8xbf16, #tpu.memory_space<vmem>>, vector<1x1x32x8xbf16>
    %114 = vector.shape_cast %113 : vector<1x1x32x8xbf16> to vector<32x8xbf16>
    %cst_99 = arith.constant dense<0.000000e+00> : vector<48x8xf32>
    %115 = tpu.matmul %25, %114, %cst_99 {dimension_numbers = #tpu.dot_dimension_numbers<[1], [0], [0], [1], [0, 0, 1, 1], [], []>} : vector<48x32xbf16>, vector<32x8xbf16>, vector<48x8xf32> -> vector<48x8xf32>
    %c0_100 = arith.constant 0 : index
    %c2_101 = arith.constant 2 : index
    %c0_102 = arith.constant 0 : index
    %c0_103 = arith.constant 0 : index
    %116 = vector.load %arg9[%c0_100, %c2_101, %c0_102, %c0_103] : memref<2x4x1x8xf32, #tpu.memory_space<vmem>>, vector<1x1x1x8xf32>
    %117 = vector.shape_cast %116 : vector<1x1x1x8xf32> to vector<1x8xf32>
    %118 = vector.broadcast %117 : vector<1x8xf32> to vector<48x8xf32>
    %119 = arith.addf %115, %118 : vector<48x8xf32>
    %c0_104 = arith.constant 0 : index
    %c2_105 = arith.constant 2 : index
    %c0_106 = arith.constant 0 : index
    %c0_107 = arith.constant 0 : index
    %120 = vector.load %arg7[%c0_104, %c2_105, %c0_106, %c0_107] : memref<2x4x32x8xbf16, #tpu.memory_space<vmem>>, vector<1x1x32x8xbf16>
    %121 = vector.shape_cast %120 : vector<1x1x32x8xbf16> to vector<32x8xbf16>
    %cst_108 = arith.constant dense<0.000000e+00> : vector<48x8xf32>
    %122 = tpu.matmul %25, %121, %cst_108 {dimension_numbers = #tpu.dot_dimension_numbers<[1], [0], [0], [1], [0, 0, 1, 1], [], []>} : vector<48x32xbf16>, vector<32x8xbf16>, vector<48x8xf32> -> vector<48x8xf32>
    %c0_109 = arith.constant 0 : index
    %c2_110 = arith.constant 2 : index
    %c0_111 = arith.constant 0 : index
    %c0_112 = arith.constant 0 : index
    %123 = vector.load %arg10[%c0_109, %c2_110, %c0_111, %c0_112] : memref<2x4x1x8xf32, #tpu.memory_space<vmem>>, vector<1x1x1x8xf32>
    %124 = vector.shape_cast %123 : vector<1x1x1x8xf32> to vector<1x8xf32>
    %125 = vector.broadcast %124 : vector<1x8xf32> to vector<48x8xf32>
    %126 = arith.addf %122, %125 : vector<48x8xf32>
    %c0_113 = arith.constant 0 : index
    %c2_114 = arith.constant 2 : index
    %c0_115 = arith.constant 0 : index
    %c0_116 = arith.constant 0 : index
    %127 = vector.load %arg8[%c0_113, %c2_114, %c0_115, %c0_116] : memref<2x4x32x8xbf16, #tpu.memory_space<vmem>>, vector<1x1x32x8xbf16>
    %128 = vector.shape_cast %127 : vector<1x1x32x8xbf16> to vector<32x8xbf16>
    %cst_117 = arith.constant dense<0.000000e+00> : vector<48x8xf32>
    %129 = tpu.matmul %25, %128, %cst_117 {dimension_numbers = #tpu.dot_dimension_numbers<[1], [0], [0], [1], [0, 0, 1, 1], [], []>} : vector<48x32xbf16>, vector<32x8xbf16>, vector<48x8xf32> -> vector<48x8xf32>
    %c0_118 = arith.constant 0 : index
    %c2_119 = arith.constant 2 : index
    %c0_120 = arith.constant 0 : index
    %c0_121 = arith.constant 0 : index
    %130 = vector.load %arg11[%c0_118, %c2_119, %c0_120, %c0_121] : memref<2x4x1x8xf32, #tpu.memory_space<vmem>>, vector<1x1x1x8xf32>
    %131 = vector.shape_cast %130 : vector<1x1x1x8xf32> to vector<1x8xf32>
    %132 = vector.broadcast %131 : vector<1x8xf32> to vector<48x8xf32>
    %133 = arith.addf %129, %132 : vector<48x8xf32>
    %134 = arith.truncf %119 : vector<48x8xf32> to vector<48x8xbf16>
    %135 = arith.truncf %126 : vector<48x8xf32> to vector<48x8xbf16>
    %cst_122 = arith.constant dense<0.000000e+00> : vector<48x48xf32>
    %136 = tpu.matmul %134, %135, %cst_122 {dimension_numbers = #tpu.dot_dimension_numbers<[1], [1], [0], [0], [0, 0, 1, 0], [], []>} : vector<48x8xbf16>, vector<48x8xbf16>, vector<48x48xf32> -> vector<48x48xf32>
    %137 = arith.addf %136, %8 : vector<48x48xf32>
    %cst_123 = arith.constant dense<0xFF800000> : vector<48xf32>
    %138 = vector.multi_reduction <maximumf>, %137, %cst_123 [1] : vector<48x48xf32> to vector<48xf32>
    %139 = vector.shape_cast %138 : vector<48xf32> to vector<48x1xf32>
    %140 = vector.broadcast %139 : vector<48x1xf32> to vector<48x48xf32>
    %141 = arith.subf %137, %140 : vector<48x48xf32>
    %142 = math.exp %141 : vector<48x48xf32>
    %cst_124 = arith.constant dense<0.000000e+00> : vector<48xf32>
    %143 = vector.multi_reduction <add>, %142, %cst_124 [1] : vector<48x48xf32> to vector<48xf32>
    %144 = vector.shape_cast %143 : vector<48xf32> to vector<48x1xf32>
    %145 = tpu.reciprocal %144 {approx = true} : vector<48x1xf32> -> vector<48x1xf32>
    %146 = vector.broadcast %145 : vector<48x1xf32> to vector<48x48xf32>
    %147 = arith.mulf %142, %146 : vector<48x48xf32>
    %148 = arith.truncf %147 : vector<48x48xf32> to vector<48x48xbf16>
    %149 = arith.truncf %133 : vector<48x8xf32> to vector<48x8xbf16>
    %cst_125 = arith.constant dense<0.000000e+00> : vector<48x8xf32>
    %150 = tpu.matmul %148, %149, %cst_125 {dimension_numbers = #tpu.dot_dimension_numbers<[1], [0], [0], [1], [0, 0, 1, 1], [], []>} : vector<48x48xbf16>, vector<48x8xbf16>, vector<48x8xf32> -> vector<48x8xf32>
    %151 = arith.truncf %150 : vector<48x8xf32> to vector<48x8xbf16>
    %c0_126 = arith.constant 0 : index
    %c2_127 = arith.constant 2 : index
    %c0_128 = arith.constant 0 : index
    %c0_129 = arith.constant 0 : index
    %152 = vector.load %arg12[%c0_126, %c2_127, %c0_128, %c0_129] : memref<2x4x8x32xbf16, #tpu.memory_space<vmem>>, vector<1x1x8x32xbf16>
    %153 = vector.shape_cast %152 : vector<1x1x8x32xbf16> to vector<8x32xbf16>
    %cst_130 = arith.constant dense<0.000000e+00> : vector<48x32xf32>
    %154 = tpu.matmul %151, %153, %cst_130 {dimension_numbers = #tpu.dot_dimension_numbers<[1], [0], [0], [1], [0, 0, 1, 1], [], []>} : vector<48x8xbf16>, vector<8x32xbf16>, vector<48x32xf32> -> vector<48x32xf32>
    %155 = arith.addf %112, %154 : vector<48x32xf32>
    %c0_131 = arith.constant 0 : index
    %c3 = arith.constant 3 : index
    %c0_132 = arith.constant 0 : index
    %c0_133 = arith.constant 0 : index
    %156 = vector.load %arg6[%c0_131, %c3, %c0_132, %c0_133] : memref<2x4x32x8xbf16, #tpu.memory_space<vmem>>, vector<1x1x32x8xbf16>
    %157 = vector.shape_cast %156 : vector<1x1x32x8xbf16> to vector<32x8xbf16>
    %cst_134 = arith.constant dense<0.000000e+00> : vector<48x8xf32>
    %158 = tpu.matmul %25, %157, %cst_134 {dimension_numbers = #tpu.dot_dimension_numbers<[1], [0], [0], [1], [0, 0, 1, 1], [], []>} : vector<48x32xbf16>, vector<32x8xbf16>, vector<48x8xf32> -> vector<48x8xf32>
    %c0_135 = arith.constant 0 : index
    %c3_136 = arith.constant 3 : index
    %c0_137 = arith.constant 0 : index
    %c0_138 = arith.constant 0 : index
    %159 = vector.load %arg9[%c0_135, %c3_136, %c0_137, %c0_138] : memref<2x4x1x8xf32, #tpu.memory_space<vmem>>, vector<1x1x1x8xf32>
    %160 = vector.shape_cast %159 : vector<1x1x1x8xf32> to vector<1x8xf32>
    %161 = vector.broadcast %160 : vector<1x8xf32> to vector<48x8xf32>
    %162 = arith.addf %158, %161 : vector<48x8xf32>
    %c0_139 = arith.constant 0 : index
    %c3_140 = arith.constant 3 : index
    %c0_141 = arith.constant 0 : index
    %c0_142 = arith.constant 0 : index
    %163 = vector.load %arg7[%c0_139, %c3_140, %c0_141, %c0_142] : memref<2x4x32x8xbf16, #tpu.memory_space<vmem>>, vector<1x1x32x8xbf16>
    %164 = vector.shape_cast %163 : vector<1x1x32x8xbf16> to vector<32x8xbf16>
    %cst_143 = arith.constant dense<0.000000e+00> : vector<48x8xf32>
    %165 = tpu.matmul %25, %164, %cst_143 {dimension_numbers = #tpu.dot_dimension_numbers<[1], [0], [0], [1], [0, 0, 1, 1], [], []>} : vector<48x32xbf16>, vector<32x8xbf16>, vector<48x8xf32> -> vector<48x8xf32>
    %c0_144 = arith.constant 0 : index
    %c3_145 = arith.constant 3 : index
    %c0_146 = arith.constant 0 : index
    %c0_147 = arith.constant 0 : index
    %166 = vector.load %arg10[%c0_144, %c3_145, %c0_146, %c0_147] : memref<2x4x1x8xf32, #tpu.memory_space<vmem>>, vector<1x1x1x8xf32>
    %167 = vector.shape_cast %166 : vector<1x1x1x8xf32> to vector<1x8xf32>
    %168 = vector.broadcast %167 : vector<1x8xf32> to vector<48x8xf32>
    %169 = arith.addf %165, %168 : vector<48x8xf32>
    %c0_148 = arith.constant 0 : index
    %c3_149 = arith.constant 3 : index
    %c0_150 = arith.constant 0 : index
    %c0_151 = arith.constant 0 : index
    %170 = vector.load %arg8[%c0_148, %c3_149, %c0_150, %c0_151] : memref<2x4x32x8xbf16, #tpu.memory_space<vmem>>, vector<1x1x32x8xbf16>
    %171 = vector.shape_cast %170 : vector<1x1x32x8xbf16> to vector<32x8xbf16>
    %cst_152 = arith.constant dense<0.000000e+00> : vector<48x8xf32>
    %172 = tpu.matmul %25, %171, %cst_152 {dimension_numbers = #tpu.dot_dimension_numbers<[1], [0], [0], [1], [0, 0, 1, 1], [], []>} : vector<48x32xbf16>, vector<32x8xbf16>, vector<48x8xf32> -> vector<48x8xf32>
    %c0_153 = arith.constant 0 : index
    %c3_154 = arith.constant 3 : index
    %c0_155 = arith.constant 0 : index
    %c0_156 = arith.constant 0 : index
    %173 = vector.load %arg11[%c0_153, %c3_154, %c0_155, %c0_156] : memref<2x4x1x8xf32, #tpu.memory_space<vmem>>, vector<1x1x1x8xf32>
    %174 = vector.shape_cast %173 : vector<1x1x1x8xf32> to vector<1x8xf32>
    %175 = vector.broadcast %174 : vector<1x8xf32> to vector<48x8xf32>
    %176 = arith.addf %172, %175 : vector<48x8xf32>
    %177 = arith.truncf %162 : vector<48x8xf32> to vector<48x8xbf16>
    %178 = arith.truncf %169 : vector<48x8xf32> to vector<48x8xbf16>
    %cst_157 = arith.constant dense<0.000000e+00> : vector<48x48xf32>
    %179 = tpu.matmul %177, %178, %cst_157 {dimension_numbers = #tpu.dot_dimension_numbers<[1], [1], [0], [0], [0, 0, 1, 0], [], []>} : vector<48x8xbf16>, vector<48x8xbf16>, vector<48x48xf32> -> vector<48x48xf32>
    %180 = arith.addf %179, %8 : vector<48x48xf32>
    %cst_158 = arith.constant dense<0xFF800000> : vector<48xf32>
    %181 = vector.multi_reduction <maximumf>, %180, %cst_158 [1] : vector<48x48xf32> to vector<48xf32>
    %182 = vector.shape_cast %181 : vector<48xf32> to vector<48x1xf32>
    %183 = vector.broadcast %182 : vector<48x1xf32> to vector<48x48xf32>
    %184 = arith.subf %180, %183 : vector<48x48xf32>
    %185 = math.exp %184 : vector<48x48xf32>
    %cst_159 = arith.constant dense<0.000000e+00> : vector<48xf32>
    %186 = vector.multi_reduction <add>, %185, %cst_159 [1] : vector<48x48xf32> to vector<48xf32>
    %187 = vector.shape_cast %186 : vector<48xf32> to vector<48x1xf32>
    %188 = tpu.reciprocal %187 {approx = true} : vector<48x1xf32> -> vector<48x1xf32>
    %189 = vector.broadcast %188 : vector<48x1xf32> to vector<48x48xf32>
    %190 = arith.mulf %185, %189 : vector<48x48xf32>
    %191 = arith.truncf %190 : vector<48x48xf32> to vector<48x48xbf16>
    %192 = arith.truncf %176 : vector<48x8xf32> to vector<48x8xbf16>
    %cst_160 = arith.constant dense<0.000000e+00> : vector<48x8xf32>
    %193 = tpu.matmul %191, %192, %cst_160 {dimension_numbers = #tpu.dot_dimension_numbers<[1], [0], [0], [1], [0, 0, 1, 1], [], []>} : vector<48x48xbf16>, vector<48x8xbf16>, vector<48x8xf32> -> vector<48x8xf32>
    %194 = arith.truncf %193 : vector<48x8xf32> to vector<48x8xbf16>
    %c0_161 = arith.constant 0 : index
    %c3_162 = arith.constant 3 : index
    %c0_163 = arith.constant 0 : index
    %c0_164 = arith.constant 0 : index
    %195 = vector.load %arg12[%c0_161, %c3_162, %c0_163, %c0_164] : memref<2x4x8x32xbf16, #tpu.memory_space<vmem>>, vector<1x1x8x32xbf16>
    %196 = vector.shape_cast %195 : vector<1x1x8x32xbf16> to vector<8x32xbf16>
    %cst_165 = arith.constant dense<0.000000e+00> : vector<48x32xf32>
    %197 = tpu.matmul %194, %196, %cst_165 {dimension_numbers = #tpu.dot_dimension_numbers<[1], [0], [0], [1], [0, 0, 1, 1], [], []>} : vector<48x8xbf16>, vector<8x32xbf16>, vector<48x32xf32> -> vector<48x32xf32>
    %198 = arith.addf %155, %197 : vector<48x32xf32>
    %c0_166 = arith.constant 0 : index
    %c0_167 = arith.constant 0 : index
    %c0_168 = arith.constant 0 : index
    %199 = vector.load %arg13[%c0_166, %c0_167, %c0_168] : memref<2x1x32xf32, #tpu.memory_space<vmem>>, vector<1x1x32xf32>
    %200 = vector.shape_cast %199 : vector<1x1x32xf32> to vector<1x32xf32>
    %201 = vector.broadcast %200 : vector<1x32xf32> to vector<48x32xf32>
    %202 = arith.addf %198, %201 : vector<48x32xf32>
    %203 = arith.addf %0, %202 : vector<48x32xf32>
    %cst_169 = arith.constant dense<0.000000e+00> : vector<48xf32>
    %204 = vector.multi_reduction <add>, %203, %cst_169 [1] : vector<48x32xf32> to vector<48xf32>
    %205 = vector.shape_cast %204 : vector<48xf32> to vector<48x1xf32>
    %cst_170 = arith.constant 3.200000e+01 : f32
    %206 = vector.broadcast %cst_170 : f32 to vector<48x1xf32>
    %207 = arith.divf %205, %206 : vector<48x1xf32>
    %208 = vector.broadcast %207 : vector<48x1xf32> to vector<48x32xf32>
    %209 = arith.subf %203, %208 : vector<48x32xf32>
    %210 = arith.mulf %209, %209 : vector<48x32xf32>
    %cst_171 = arith.constant dense<0.000000e+00> : vector<48xf32>
    %211 = vector.multi_reduction <add>, %210, %cst_171 [1] : vector<48x32xf32> to vector<48xf32>
    %212 = vector.shape_cast %211 : vector<48xf32> to vector<48x1xf32>
    %cst_172 = arith.constant 3.200000e+01 : f32
    %213 = vector.broadcast %cst_172 : f32 to vector<48x1xf32>
    %214 = arith.divf %212, %213 : vector<48x1xf32>
    %215 = vector.broadcast %207 : vector<48x1xf32> to vector<48x32xf32>
    %216 = arith.subf %203, %215 : vector<48x32xf32>
    %cst_173 = arith.constant 9.99999974E-6 : f32
    %217 = vector.broadcast %cst_173 : f32 to vector<48x1xf32>
    %218 = arith.addf %214, %217 : vector<48x1xf32>
    %219 = math.rsqrt %218 : vector<48x1xf32>
    %220 = vector.broadcast %219 : vector<48x1xf32> to vector<48x32xf32>
    %221 = arith.mulf %216, %220 : vector<48x32xf32>
    %222 = vector.broadcast %18 : vector<1x32xf32> to vector<48x32xf32>
    %223 = arith.mulf %221, %222 : vector<48x32xf32>
    %224 = vector.broadcast %20 : vector<1x32xf32> to vector<48x32xf32>
    %225 = arith.addf %223, %224 : vector<48x32xf32>
    %226 = arith.truncf %225 : vector<48x32xf32> to vector<48x32xbf16>
    %c0_174 = arith.constant 0 : index
    %c0_175 = arith.constant 0 : index
    %c0_176 = arith.constant 0 : index
    %227 = vector.load %arg14[%c0_174, %c0_175, %c0_176] : memref<2x32x128xbf16, #tpu.memory_space<vmem>>, vector<1x32x128xbf16>
    %228 = vector.shape_cast %227 : vector<1x32x128xbf16> to vector<32x128xbf16>
    %cst_177 = arith.constant dense<0.000000e+00> : vector<48x128xf32>
    %229 = tpu.matmul %226, %228, %cst_177 {dimension_numbers = #tpu.dot_dimension_numbers<[1], [0], [0], [1], [0, 0, 1, 1], [], []>} : vector<48x32xbf16>, vector<32x128xbf16>, vector<48x128xf32> -> vector<48x128xf32>
    %c0_178 = arith.constant 0 : index
    %c0_179 = arith.constant 0 : index
    %c0_180 = arith.constant 0 : index
    %230 = vector.load %arg15[%c0_178, %c0_179, %c0_180] : memref<2x1x128xf32, #tpu.memory_space<vmem>>, vector<1x1x128xf32>
    %231 = vector.shape_cast %230 : vector<1x1x128xf32> to vector<1x128xf32>
    %232 = vector.broadcast %231 : vector<1x128xf32> to vector<48x128xf32>
    %233 = arith.addf %229, %232 : vector<48x128xf32>
    %cst_181 = arith.constant 0.000000e+00 : f32
    %234 = vector.broadcast %cst_181 : f32 to vector<48x128xf32>
    %235 = arith.maximumf %233, %234 : vector<48x128xf32>
    %236 = arith.truncf %235 : vector<48x128xf32> to vector<48x128xbf16>
    %c0_182 = arith.constant 0 : index
    %c0_183 = arith.constant 0 : index
    %c0_184 = arith.constant 0 : index
    %237 = vector.load %arg16[%c0_182, %c0_183, %c0_184] : memref<2x128x32xbf16, #tpu.memory_space<vmem>>, vector<1x128x32xbf16>
    %238 = vector.shape_cast %237 : vector<1x128x32xbf16> to vector<128x32xbf16>
    %cst_185 = arith.constant dense<0.000000e+00> : vector<48x32xf32>
    %239 = tpu.matmul %236, %238, %cst_185 {dimension_numbers = #tpu.dot_dimension_numbers<[1], [0], [0], [1], [0, 0, 1, 1], [], []>} : vector<48x128xbf16>, vector<128x32xbf16>, vector<48x32xf32> -> vector<48x32xf32>
    %c0_186 = arith.constant 0 : index
    %c0_187 = arith.constant 0 : index
    %c0_188 = arith.constant 0 : index
    %240 = vector.load %arg17[%c0_186, %c0_187, %c0_188] : memref<2x1x32xf32, #tpu.memory_space<vmem>>, vector<1x1x32xf32>
    %241 = vector.shape_cast %240 : vector<1x1x32xf32> to vector<1x32xf32>
    %242 = vector.broadcast %241 : vector<1x32xf32> to vector<48x32xf32>
    %243 = arith.addf %239, %242 : vector<48x32xf32>
    %244 = arith.addf %225, %243 : vector<48x32xf32>
    %cst_189 = arith.constant dense<0.000000e+00> : vector<48xf32>
    %245 = vector.multi_reduction <add>, %244, %cst_189 [1] : vector<48x32xf32> to vector<48xf32>
    %246 = vector.shape_cast %245 : vector<48xf32> to vector<48x1xf32>
    %cst_190 = arith.constant 3.200000e+01 : f32
    %247 = vector.broadcast %cst_190 : f32 to vector<48x1xf32>
    %248 = arith.divf %246, %247 : vector<48x1xf32>
    %249 = vector.broadcast %248 : vector<48x1xf32> to vector<48x32xf32>
    %250 = arith.subf %244, %249 : vector<48x32xf32>
    %251 = arith.mulf %250, %250 : vector<48x32xf32>
    %cst_191 = arith.constant dense<0.000000e+00> : vector<48xf32>
    %252 = vector.multi_reduction <add>, %251, %cst_191 [1] : vector<48x32xf32> to vector<48xf32>
    %253 = vector.shape_cast %252 : vector<48xf32> to vector<48x1xf32>
    %cst_192 = arith.constant 3.200000e+01 : f32
    %254 = vector.broadcast %cst_192 : f32 to vector<48x1xf32>
    %255 = arith.divf %253, %254 : vector<48x1xf32>
    %256 = vector.broadcast %248 : vector<48x1xf32> to vector<48x32xf32>
    %257 = arith.subf %244, %256 : vector<48x32xf32>
    %cst_193 = arith.constant 9.99999974E-6 : f32
    %258 = vector.broadcast %cst_193 : f32 to vector<48x1xf32>
    %259 = arith.addf %255, %258 : vector<48x1xf32>
    %260 = math.rsqrt %259 : vector<48x1xf32>
    %261 = vector.broadcast %260 : vector<48x1xf32> to vector<48x32xf32>
    %262 = arith.mulf %257, %261 : vector<48x32xf32>
    %263 = vector.broadcast %22 : vector<1x32xf32> to vector<48x32xf32>
    %264 = arith.mulf %262, %263 : vector<48x32xf32>
    %265 = vector.broadcast %24 : vector<1x32xf32> to vector<48x32xf32>
    %266 = arith.addf %264, %265 : vector<48x32xf32>
    %c1_194 = arith.constant 1 : index
    %c0_195 = arith.constant 0 : index
    %c0_196 = arith.constant 0 : index
    %267 = vector.load %arg18[%c1_194, %c0_195, %c0_196] : memref<2x1x32xf32, #tpu.memory_space<vmem>>, vector<1x1x32xf32>
    %268 = vector.shape_cast %267 : vector<1x1x32xf32> to vector<1x32xf32>
    %c1_197 = arith.constant 1 : index
    %c0_198 = arith.constant 0 : index
    %c0_199 = arith.constant 0 : index
    %269 = vector.load %arg19[%c1_197, %c0_198, %c0_199] : memref<2x1x32xf32, #tpu.memory_space<vmem>>, vector<1x1x32xf32>
    %270 = vector.shape_cast %269 : vector<1x1x32xf32> to vector<1x32xf32>
    %c1_200 = arith.constant 1 : index
    %c0_201 = arith.constant 0 : index
    %c0_202 = arith.constant 0 : index
    %271 = vector.load %arg20[%c1_200, %c0_201, %c0_202] : memref<2x1x32xf32, #tpu.memory_space<vmem>>, vector<1x1x32xf32>
    %272 = vector.shape_cast %271 : vector<1x1x32xf32> to vector<1x32xf32>
    %c1_203 = arith.constant 1 : index
    %c0_204 = arith.constant 0 : index
    %c0_205 = arith.constant 0 : index
    %273 = vector.load %arg21[%c1_203, %c0_204, %c0_205] : memref<2x1x32xf32, #tpu.memory_space<vmem>>, vector<1x1x32xf32>
    %274 = vector.shape_cast %273 : vector<1x1x32xf32> to vector<1x32xf32>
    %275 = arith.truncf %266 : vector<48x32xf32> to vector<48x32xbf16>
    %cst_206 = arith.constant 0.000000e+00 : f32
    %276 = vector.broadcast %cst_206 : f32 to vector<48x32xf32>
    %c1_207 = arith.constant 1 : index
    %c0_208 = arith.constant 0 : index
    %c0_209 = arith.constant 0 : index
    %c0_210 = arith.constant 0 : index
    %277 = vector.load %arg6[%c1_207, %c0_208, %c0_209, %c0_210] : memref<2x4x32x8xbf16, #tpu.memory_space<vmem>>, vector<1x1x32x8xbf16>
    %278 = vector.shape_cast %277 : vector<1x1x32x8xbf16> to vector<32x8xbf16>
    %cst_211 = arith.constant dense<0.000000e+00> : vector<48x8xf32>
    %279 = tpu.matmul %275, %278, %cst_211 {dimension_numbers = #tpu.dot_dimension_numbers<[1], [0], [0], [1], [0, 0, 1, 1], [], []>} : vector<48x32xbf16>, vector<32x8xbf16>, vector<48x8xf32> -> vector<48x8xf32>
    %c1_212 = arith.constant 1 : index
    %c0_213 = arith.constant 0 : index
    %c0_214 = arith.constant 0 : index
    %c0_215 = arith.constant 0 : index
    %280 = vector.load %arg9[%c1_212, %c0_213, %c0_214, %c0_215] : memref<2x4x1x8xf32, #tpu.memory_space<vmem>>, vector<1x1x1x8xf32>
    %281 = vector.shape_cast %280 : vector<1x1x1x8xf32> to vector<1x8xf32>
    %282 = vector.broadcast %281 : vector<1x8xf32> to vector<48x8xf32>
    %283 = arith.addf %279, %282 : vector<48x8xf32>
    %c1_216 = arith.constant 1 : index
    %c0_217 = arith.constant 0 : index
    %c0_218 = arith.constant 0 : index
    %c0_219 = arith.constant 0 : index
    %284 = vector.load %arg7[%c1_216, %c0_217, %c0_218, %c0_219] : memref<2x4x32x8xbf16, #tpu.memory_space<vmem>>, vector<1x1x32x8xbf16>
    %285 = vector.shape_cast %284 : vector<1x1x32x8xbf16> to vector<32x8xbf16>
    %cst_220 = arith.constant dense<0.000000e+00> : vector<48x8xf32>
    %286 = tpu.matmul %275, %285, %cst_220 {dimension_numbers = #tpu.dot_dimension_numbers<[1], [0], [0], [1], [0, 0, 1, 1], [], []>} : vector<48x32xbf16>, vector<32x8xbf16>, vector<48x8xf32> -> vector<48x8xf32>
    %c1_221 = arith.constant 1 : index
    %c0_222 = arith.constant 0 : index
    %c0_223 = arith.constant 0 : index
    %c0_224 = arith.constant 0 : index
    %287 = vector.load %arg10[%c1_221, %c0_222, %c0_223, %c0_224] : memref<2x4x1x8xf32, #tpu.memory_space<vmem>>, vector<1x1x1x8xf32>
    %288 = vector.shape_cast %287 : vector<1x1x1x8xf32> to vector<1x8xf32>
    %289 = vector.broadcast %288 : vector<1x8xf32> to vector<48x8xf32>
    %290 = arith.addf %286, %289 : vector<48x8xf32>
    %c1_225 = arith.constant 1 : index
    %c0_226 = arith.constant 0 : index
    %c0_227 = arith.constant 0 : index
    %c0_228 = arith.constant 0 : index
    %291 = vector.load %arg8[%c1_225, %c0_226, %c0_227, %c0_228] : memref<2x4x32x8xbf16, #tpu.memory_space<vmem>>, vector<1x1x32x8xbf16>
    %292 = vector.shape_cast %291 : vector<1x1x32x8xbf16> to vector<32x8xbf16>
    %cst_229 = arith.constant dense<0.000000e+00> : vector<48x8xf32>
    %293 = tpu.matmul %275, %292, %cst_229 {dimension_numbers = #tpu.dot_dimension_numbers<[1], [0], [0], [1], [0, 0, 1, 1], [], []>} : vector<48x32xbf16>, vector<32x8xbf16>, vector<48x8xf32> -> vector<48x8xf32>
    %c1_230 = arith.constant 1 : index
    %c0_231 = arith.constant 0 : index
    %c0_232 = arith.constant 0 : index
    %c0_233 = arith.constant 0 : index
    %294 = vector.load %arg11[%c1_230, %c0_231, %c0_232, %c0_233] : memref<2x4x1x8xf32, #tpu.memory_space<vmem>>, vector<1x1x1x8xf32>
    %295 = vector.shape_cast %294 : vector<1x1x1x8xf32> to vector<1x8xf32>
    %296 = vector.broadcast %295 : vector<1x8xf32> to vector<48x8xf32>
    %297 = arith.addf %293, %296 : vector<48x8xf32>
    %298 = arith.truncf %283 : vector<48x8xf32> to vector<48x8xbf16>
    %299 = arith.truncf %290 : vector<48x8xf32> to vector<48x8xbf16>
    %cst_234 = arith.constant dense<0.000000e+00> : vector<48x48xf32>
    %300 = tpu.matmul %298, %299, %cst_234 {dimension_numbers = #tpu.dot_dimension_numbers<[1], [1], [0], [0], [0, 0, 1, 0], [], []>} : vector<48x8xbf16>, vector<48x8xbf16>, vector<48x48xf32> -> vector<48x48xf32>
    %301 = arith.addf %300, %16 : vector<48x48xf32>
    %cst_235 = arith.constant dense<0xFF800000> : vector<48xf32>
    %302 = vector.multi_reduction <maximumf>, %301, %cst_235 [1] : vector<48x48xf32> to vector<48xf32>
    %303 = vector.shape_cast %302 : vector<48xf32> to vector<48x1xf32>
    %304 = vector.broadcast %303 : vector<48x1xf32> to vector<48x48xf32>
    %305 = arith.subf %301, %304 : vector<48x48xf32>
    %306 = math.exp %305 : vector<48x48xf32>
    %cst_236 = arith.constant dense<0.000000e+00> : vector<48xf32>
    %307 = vector.multi_reduction <add>, %306, %cst_236 [1] : vector<48x48xf32> to vector<48xf32>
    %308 = vector.shape_cast %307 : vector<48xf32> to vector<48x1xf32>
    %309 = tpu.reciprocal %308 {approx = true} : vector<48x1xf32> -> vector<48x1xf32>
    %310 = vector.broadcast %309 : vector<48x1xf32> to vector<48x48xf32>
    %311 = arith.mulf %306, %310 : vector<48x48xf32>
    %312 = arith.truncf %311 : vector<48x48xf32> to vector<48x48xbf16>
    %313 = arith.truncf %297 : vector<48x8xf32> to vector<48x8xbf16>
    %cst_237 = arith.constant dense<0.000000e+00> : vector<48x8xf32>
    %314 = tpu.matmul %312, %313, %cst_237 {dimension_numbers = #tpu.dot_dimension_numbers<[1], [0], [0], [1], [0, 0, 1, 1], [], []>} : vector<48x48xbf16>, vector<48x8xbf16>, vector<48x8xf32> -> vector<48x8xf32>
    %315 = arith.truncf %314 : vector<48x8xf32> to vector<48x8xbf16>
    %c1_238 = arith.constant 1 : index
    %c0_239 = arith.constant 0 : index
    %c0_240 = arith.constant 0 : index
    %c0_241 = arith.constant 0 : index
    %316 = vector.load %arg12[%c1_238, %c0_239, %c0_240, %c0_241] : memref<2x4x8x32xbf16, #tpu.memory_space<vmem>>, vector<1x1x8x32xbf16>
    %317 = vector.shape_cast %316 : vector<1x1x8x32xbf16> to vector<8x32xbf16>
    %cst_242 = arith.constant dense<0.000000e+00> : vector<48x32xf32>
    %318 = tpu.matmul %315, %317, %cst_242 {dimension_numbers = #tpu.dot_dimension_numbers<[1], [0], [0], [1], [0, 0, 1, 1], [], []>} : vector<48x8xbf16>, vector<8x32xbf16>, vector<48x32xf32> -> vector<48x32xf32>
    %319 = arith.addf %276, %318 : vector<48x32xf32>
    %c1_243 = arith.constant 1 : index
    %c1_244 = arith.constant 1 : index
    %c0_245 = arith.constant 0 : index
    %c0_246 = arith.constant 0 : index
    %320 = vector.load %arg6[%c1_243, %c1_244, %c0_245, %c0_246] : memref<2x4x32x8xbf16, #tpu.memory_space<vmem>>, vector<1x1x32x8xbf16>
    %321 = vector.shape_cast %320 : vector<1x1x32x8xbf16> to vector<32x8xbf16>
    %cst_247 = arith.constant dense<0.000000e+00> : vector<48x8xf32>
    %322 = tpu.matmul %275, %321, %cst_247 {dimension_numbers = #tpu.dot_dimension_numbers<[1], [0], [0], [1], [0, 0, 1, 1], [], []>} : vector<48x32xbf16>, vector<32x8xbf16>, vector<48x8xf32> -> vector<48x8xf32>
    %c1_248 = arith.constant 1 : index
    %c1_249 = arith.constant 1 : index
    %c0_250 = arith.constant 0 : index
    %c0_251 = arith.constant 0 : index
    %323 = vector.load %arg9[%c1_248, %c1_249, %c0_250, %c0_251] : memref<2x4x1x8xf32, #tpu.memory_space<vmem>>, vector<1x1x1x8xf32>
    %324 = vector.shape_cast %323 : vector<1x1x1x8xf32> to vector<1x8xf32>
    %325 = vector.broadcast %324 : vector<1x8xf32> to vector<48x8xf32>
    %326 = arith.addf %322, %325 : vector<48x8xf32>
    %c1_252 = arith.constant 1 : index
    %c1_253 = arith.constant 1 : index
    %c0_254 = arith.constant 0 : index
    %c0_255 = arith.constant 0 : index
    %327 = vector.load %arg7[%c1_252, %c1_253, %c0_254, %c0_255] : memref<2x4x32x8xbf16, #tpu.memory_space<vmem>>, vector<1x1x32x8xbf16>
    %328 = vector.shape_cast %327 : vector<1x1x32x8xbf16> to vector<32x8xbf16>
    %cst_256 = arith.constant dense<0.000000e+00> : vector<48x8xf32>
    %329 = tpu.matmul %275, %328, %cst_256 {dimension_numbers = #tpu.dot_dimension_numbers<[1], [0], [0], [1], [0, 0, 1, 1], [], []>} : vector<48x32xbf16>, vector<32x8xbf16>, vector<48x8xf32> -> vector<48x8xf32>
    %c1_257 = arith.constant 1 : index
    %c1_258 = arith.constant 1 : index
    %c0_259 = arith.constant 0 : index
    %c0_260 = arith.constant 0 : index
    %330 = vector.load %arg10[%c1_257, %c1_258, %c0_259, %c0_260] : memref<2x4x1x8xf32, #tpu.memory_space<vmem>>, vector<1x1x1x8xf32>
    %331 = vector.shape_cast %330 : vector<1x1x1x8xf32> to vector<1x8xf32>
    %332 = vector.broadcast %331 : vector<1x8xf32> to vector<48x8xf32>
    %333 = arith.addf %329, %332 : vector<48x8xf32>
    %c1_261 = arith.constant 1 : index
    %c1_262 = arith.constant 1 : index
    %c0_263 = arith.constant 0 : index
    %c0_264 = arith.constant 0 : index
    %334 = vector.load %arg8[%c1_261, %c1_262, %c0_263, %c0_264] : memref<2x4x32x8xbf16, #tpu.memory_space<vmem>>, vector<1x1x32x8xbf16>
    %335 = vector.shape_cast %334 : vector<1x1x32x8xbf16> to vector<32x8xbf16>
    %cst_265 = arith.constant dense<0.000000e+00> : vector<48x8xf32>
    %336 = tpu.matmul %275, %335, %cst_265 {dimension_numbers = #tpu.dot_dimension_numbers<[1], [0], [0], [1], [0, 0, 1, 1], [], []>} : vector<48x32xbf16>, vector<32x8xbf16>, vector<48x8xf32> -> vector<48x8xf32>
    %c1_266 = arith.constant 1 : index
    %c1_267 = arith.constant 1 : index
    %c0_268 = arith.constant 0 : index
    %c0_269 = arith.constant 0 : index
    %337 = vector.load %arg11[%c1_266, %c1_267, %c0_268, %c0_269] : memref<2x4x1x8xf32, #tpu.memory_space<vmem>>, vector<1x1x1x8xf32>
    %338 = vector.shape_cast %337 : vector<1x1x1x8xf32> to vector<1x8xf32>
    %339 = vector.broadcast %338 : vector<1x8xf32> to vector<48x8xf32>
    %340 = arith.addf %336, %339 : vector<48x8xf32>
    %341 = arith.truncf %326 : vector<48x8xf32> to vector<48x8xbf16>
    %342 = arith.truncf %333 : vector<48x8xf32> to vector<48x8xbf16>
    %cst_270 = arith.constant dense<0.000000e+00> : vector<48x48xf32>
    %343 = tpu.matmul %341, %342, %cst_270 {dimension_numbers = #tpu.dot_dimension_numbers<[1], [1], [0], [0], [0, 0, 1, 0], [], []>} : vector<48x8xbf16>, vector<48x8xbf16>, vector<48x48xf32> -> vector<48x48xf32>
    %344 = arith.addf %343, %16 : vector<48x48xf32>
    %cst_271 = arith.constant dense<0xFF800000> : vector<48xf32>
    %345 = vector.multi_reduction <maximumf>, %344, %cst_271 [1] : vector<48x48xf32> to vector<48xf32>
    %346 = vector.shape_cast %345 : vector<48xf32> to vector<48x1xf32>
    %347 = vector.broadcast %346 : vector<48x1xf32> to vector<48x48xf32>
    %348 = arith.subf %344, %347 : vector<48x48xf32>
    %349 = math.exp %348 : vector<48x48xf32>
    %cst_272 = arith.constant dense<0.000000e+00> : vector<48xf32>
    %350 = vector.multi_reduction <add>, %349, %cst_272 [1] : vector<48x48xf32> to vector<48xf32>
    %351 = vector.shape_cast %350 : vector<48xf32> to vector<48x1xf32>
    %352 = tpu.reciprocal %351 {approx = true} : vector<48x1xf32> -> vector<48x1xf32>
    %353 = vector.broadcast %352 : vector<48x1xf32> to vector<48x48xf32>
    %354 = arith.mulf %349, %353 : vector<48x48xf32>
    %355 = arith.truncf %354 : vector<48x48xf32> to vector<48x48xbf16>
    %356 = arith.truncf %340 : vector<48x8xf32> to vector<48x8xbf16>
    %cst_273 = arith.constant dense<0.000000e+00> : vector<48x8xf32>
    %357 = tpu.matmul %355, %356, %cst_273 {dimension_numbers = #tpu.dot_dimension_numbers<[1], [0], [0], [1], [0, 0, 1, 1], [], []>} : vector<48x48xbf16>, vector<48x8xbf16>, vector<48x8xf32> -> vector<48x8xf32>
    %358 = arith.truncf %357 : vector<48x8xf32> to vector<48x8xbf16>
    %c1_274 = arith.constant 1 : index
    %c1_275 = arith.constant 1 : index
    %c0_276 = arith.constant 0 : index
    %c0_277 = arith.constant 0 : index
    %359 = vector.load %arg12[%c1_274, %c1_275, %c0_276, %c0_277] : memref<2x4x8x32xbf16, #tpu.memory_space<vmem>>, vector<1x1x8x32xbf16>
    %360 = vector.shape_cast %359 : vector<1x1x8x32xbf16> to vector<8x32xbf16>
    %cst_278 = arith.constant dense<0.000000e+00> : vector<48x32xf32>
    %361 = tpu.matmul %358, %360, %cst_278 {dimension_numbers = #tpu.dot_dimension_numbers<[1], [0], [0], [1], [0, 0, 1, 1], [], []>} : vector<48x8xbf16>, vector<8x32xbf16>, vector<48x32xf32> -> vector<48x32xf32>
    %362 = arith.addf %319, %361 : vector<48x32xf32>
    %c1_279 = arith.constant 1 : index
    %c2_280 = arith.constant 2 : index
    %c0_281 = arith.constant 0 : index
    %c0_282 = arith.constant 0 : index
    %363 = vector.load %arg6[%c1_279, %c2_280, %c0_281, %c0_282] : memref<2x4x32x8xbf16, #tpu.memory_space<vmem>>, vector<1x1x32x8xbf16>
    %364 = vector.shape_cast %363 : vector<1x1x32x8xbf16> to vector<32x8xbf16>
    %cst_283 = arith.constant dense<0.000000e+00> : vector<48x8xf32>
    %365 = tpu.matmul %275, %364, %cst_283 {dimension_numbers = #tpu.dot_dimension_numbers<[1], [0], [0], [1], [0, 0, 1, 1], [], []>} : vector<48x32xbf16>, vector<32x8xbf16>, vector<48x8xf32> -> vector<48x8xf32>
    %c1_284 = arith.constant 1 : index
    %c2_285 = arith.constant 2 : index
    %c0_286 = arith.constant 0 : index
    %c0_287 = arith.constant 0 : index
    %366 = vector.load %arg9[%c1_284, %c2_285, %c0_286, %c0_287] : memref<2x4x1x8xf32, #tpu.memory_space<vmem>>, vector<1x1x1x8xf32>
    %367 = vector.shape_cast %366 : vector<1x1x1x8xf32> to vector<1x8xf32>
    %368 = vector.broadcast %367 : vector<1x8xf32> to vector<48x8xf32>
    %369 = arith.addf %365, %368 : vector<48x8xf32>
    %c1_288 = arith.constant 1 : index
    %c2_289 = arith.constant 2 : index
    %c0_290 = arith.constant 0 : index
    %c0_291 = arith.constant 0 : index
    %370 = vector.load %arg7[%c1_288, %c2_289, %c0_290, %c0_291] : memref<2x4x32x8xbf16, #tpu.memory_space<vmem>>, vector<1x1x32x8xbf16>
    %371 = vector.shape_cast %370 : vector<1x1x32x8xbf16> to vector<32x8xbf16>
    %cst_292 = arith.constant dense<0.000000e+00> : vector<48x8xf32>
    %372 = tpu.matmul %275, %371, %cst_292 {dimension_numbers = #tpu.dot_dimension_numbers<[1], [0], [0], [1], [0, 0, 1, 1], [], []>} : vector<48x32xbf16>, vector<32x8xbf16>, vector<48x8xf32> -> vector<48x8xf32>
    %c1_293 = arith.constant 1 : index
    %c2_294 = arith.constant 2 : index
    %c0_295 = arith.constant 0 : index
    %c0_296 = arith.constant 0 : index
    %373 = vector.load %arg10[%c1_293, %c2_294, %c0_295, %c0_296] : memref<2x4x1x8xf32, #tpu.memory_space<vmem>>, vector<1x1x1x8xf32>
    %374 = vector.shape_cast %373 : vector<1x1x1x8xf32> to vector<1x8xf32>
    %375 = vector.broadcast %374 : vector<1x8xf32> to vector<48x8xf32>
    %376 = arith.addf %372, %375 : vector<48x8xf32>
    %c1_297 = arith.constant 1 : index
    %c2_298 = arith.constant 2 : index
    %c0_299 = arith.constant 0 : index
    %c0_300 = arith.constant 0 : index
    %377 = vector.load %arg8[%c1_297, %c2_298, %c0_299, %c0_300] : memref<2x4x32x8xbf16, #tpu.memory_space<vmem>>, vector<1x1x32x8xbf16>
    %378 = vector.shape_cast %377 : vector<1x1x32x8xbf16> to vector<32x8xbf16>
    %cst_301 = arith.constant dense<0.000000e+00> : vector<48x8xf32>
    %379 = tpu.matmul %275, %378, %cst_301 {dimension_numbers = #tpu.dot_dimension_numbers<[1], [0], [0], [1], [0, 0, 1, 1], [], []>} : vector<48x32xbf16>, vector<32x8xbf16>, vector<48x8xf32> -> vector<48x8xf32>
    %c1_302 = arith.constant 1 : index
    %c2_303 = arith.constant 2 : index
    %c0_304 = arith.constant 0 : index
    %c0_305 = arith.constant 0 : index
    %380 = vector.load %arg11[%c1_302, %c2_303, %c0_304, %c0_305] : memref<2x4x1x8xf32, #tpu.memory_space<vmem>>, vector<1x1x1x8xf32>
    %381 = vector.shape_cast %380 : vector<1x1x1x8xf32> to vector<1x8xf32>
    %382 = vector.broadcast %381 : vector<1x8xf32> to vector<48x8xf32>
    %383 = arith.addf %379, %382 : vector<48x8xf32>
    %384 = arith.truncf %369 : vector<48x8xf32> to vector<48x8xbf16>
    %385 = arith.truncf %376 : vector<48x8xf32> to vector<48x8xbf16>
    %cst_306 = arith.constant dense<0.000000e+00> : vector<48x48xf32>
    %386 = tpu.matmul %384, %385, %cst_306 {dimension_numbers = #tpu.dot_dimension_numbers<[1], [1], [0], [0], [0, 0, 1, 0], [], []>} : vector<48x8xbf16>, vector<48x8xbf16>, vector<48x48xf32> -> vector<48x48xf32>
    %387 = arith.addf %386, %16 : vector<48x48xf32>
    %cst_307 = arith.constant dense<0xFF800000> : vector<48xf32>
    %388 = vector.multi_reduction <maximumf>, %387, %cst_307 [1] : vector<48x48xf32> to vector<48xf32>
    %389 = vector.shape_cast %388 : vector<48xf32> to vector<48x1xf32>
    %390 = vector.broadcast %389 : vector<48x1xf32> to vector<48x48xf32>
    %391 = arith.subf %387, %390 : vector<48x48xf32>
    %392 = math.exp %391 : vector<48x48xf32>
    %cst_308 = arith.constant dense<0.000000e+00> : vector<48xf32>
    %393 = vector.multi_reduction <add>, %392, %cst_308 [1] : vector<48x48xf32> to vector<48xf32>
    %394 = vector.shape_cast %393 : vector<48xf32> to vector<48x1xf32>
    %395 = tpu.reciprocal %394 {approx = true} : vector<48x1xf32> -> vector<48x1xf32>
    %396 = vector.broadcast %395 : vector<48x1xf32> to vector<48x48xf32>
    %397 = arith.mulf %392, %396 : vector<48x48xf32>
    %398 = arith.truncf %397 : vector<48x48xf32> to vector<48x48xbf16>
    %399 = arith.truncf %383 : vector<48x8xf32> to vector<48x8xbf16>
    %cst_309 = arith.constant dense<0.000000e+00> : vector<48x8xf32>
    %400 = tpu.matmul %398, %399, %cst_309 {dimension_numbers = #tpu.dot_dimension_numbers<[1], [0], [0], [1], [0, 0, 1, 1], [], []>} : vector<48x48xbf16>, vector<48x8xbf16>, vector<48x8xf32> -> vector<48x8xf32>
    %401 = arith.truncf %400 : vector<48x8xf32> to vector<48x8xbf16>
    %c1_310 = arith.constant 1 : index
    %c2_311 = arith.constant 2 : index
    %c0_312 = arith.constant 0 : index
    %c0_313 = arith.constant 0 : index
    %402 = vector.load %arg12[%c1_310, %c2_311, %c0_312, %c0_313] : memref<2x4x8x32xbf16, #tpu.memory_space<vmem>>, vector<1x1x8x32xbf16>
    %403 = vector.shape_cast %402 : vector<1x1x8x32xbf16> to vector<8x32xbf16>
    %cst_314 = arith.constant dense<0.000000e+00> : vector<48x32xf32>
    %404 = tpu.matmul %401, %403, %cst_314 {dimension_numbers = #tpu.dot_dimension_numbers<[1], [0], [0], [1], [0, 0, 1, 1], [], []>} : vector<48x8xbf16>, vector<8x32xbf16>, vector<48x32xf32> -> vector<48x32xf32>
    %405 = arith.addf %362, %404 : vector<48x32xf32>
    %c1_315 = arith.constant 1 : index
    %c3_316 = arith.constant 3 : index
    %c0_317 = arith.constant 0 : index
    %c0_318 = arith.constant 0 : index
    %406 = vector.load %arg6[%c1_315, %c3_316, %c0_317, %c0_318] : memref<2x4x32x8xbf16, #tpu.memory_space<vmem>>, vector<1x1x32x8xbf16>
    %407 = vector.shape_cast %406 : vector<1x1x32x8xbf16> to vector<32x8xbf16>
    %cst_319 = arith.constant dense<0.000000e+00> : vector<48x8xf32>
    %408 = tpu.matmul %275, %407, %cst_319 {dimension_numbers = #tpu.dot_dimension_numbers<[1], [0], [0], [1], [0, 0, 1, 1], [], []>} : vector<48x32xbf16>, vector<32x8xbf16>, vector<48x8xf32> -> vector<48x8xf32>
    %c1_320 = arith.constant 1 : index
    %c3_321 = arith.constant 3 : index
    %c0_322 = arith.constant 0 : index
    %c0_323 = arith.constant 0 : index
    %409 = vector.load %arg9[%c1_320, %c3_321, %c0_322, %c0_323] : memref<2x4x1x8xf32, #tpu.memory_space<vmem>>, vector<1x1x1x8xf32>
    %410 = vector.shape_cast %409 : vector<1x1x1x8xf32> to vector<1x8xf32>
    %411 = vector.broadcast %410 : vector<1x8xf32> to vector<48x8xf32>
    %412 = arith.addf %408, %411 : vector<48x8xf32>
    %c1_324 = arith.constant 1 : index
    %c3_325 = arith.constant 3 : index
    %c0_326 = arith.constant 0 : index
    %c0_327 = arith.constant 0 : index
    %413 = vector.load %arg7[%c1_324, %c3_325, %c0_326, %c0_327] : memref<2x4x32x8xbf16, #tpu.memory_space<vmem>>, vector<1x1x32x8xbf16>
    %414 = vector.shape_cast %413 : vector<1x1x32x8xbf16> to vector<32x8xbf16>
    %cst_328 = arith.constant dense<0.000000e+00> : vector<48x8xf32>
    %415 = tpu.matmul %275, %414, %cst_328 {dimension_numbers = #tpu.dot_dimension_numbers<[1], [0], [0], [1], [0, 0, 1, 1], [], []>} : vector<48x32xbf16>, vector<32x8xbf16>, vector<48x8xf32> -> vector<48x8xf32>
    %c1_329 = arith.constant 1 : index
    %c3_330 = arith.constant 3 : index
    %c0_331 = arith.constant 0 : index
    %c0_332 = arith.constant 0 : index
    %416 = vector.load %arg10[%c1_329, %c3_330, %c0_331, %c0_332] : memref<2x4x1x8xf32, #tpu.memory_space<vmem>>, vector<1x1x1x8xf32>
    %417 = vector.shape_cast %416 : vector<1x1x1x8xf32> to vector<1x8xf32>
    %418 = vector.broadcast %417 : vector<1x8xf32> to vector<48x8xf32>
    %419 = arith.addf %415, %418 : vector<48x8xf32>
    %c1_333 = arith.constant 1 : index
    %c3_334 = arith.constant 3 : index
    %c0_335 = arith.constant 0 : index
    %c0_336 = arith.constant 0 : index
    %420 = vector.load %arg8[%c1_333, %c3_334, %c0_335, %c0_336] : memref<2x4x32x8xbf16, #tpu.memory_space<vmem>>, vector<1x1x32x8xbf16>
    %421 = vector.shape_cast %420 : vector<1x1x32x8xbf16> to vector<32x8xbf16>
    %cst_337 = arith.constant dense<0.000000e+00> : vector<48x8xf32>
    %422 = tpu.matmul %275, %421, %cst_337 {dimension_numbers = #tpu.dot_dimension_numbers<[1], [0], [0], [1], [0, 0, 1, 1], [], []>} : vector<48x32xbf16>, vector<32x8xbf16>, vector<48x8xf32> -> vector<48x8xf32>
    %c1_338 = arith.constant 1 : index
    %c3_339 = arith.constant 3 : index
    %c0_340 = arith.constant 0 : index
    %c0_341 = arith.constant 0 : index
    %423 = vector.load %arg11[%c1_338, %c3_339, %c0_340, %c0_341] : memref<2x4x1x8xf32, #tpu.memory_space<vmem>>, vector<1x1x1x8xf32>
    %424 = vector.shape_cast %423 : vector<1x1x1x8xf32> to vector<1x8xf32>
    %425 = vector.broadcast %424 : vector<1x8xf32> to vector<48x8xf32>
    %426 = arith.addf %422, %425 : vector<48x8xf32>
    %427 = arith.truncf %412 : vector<48x8xf32> to vector<48x8xbf16>
    %428 = arith.truncf %419 : vector<48x8xf32> to vector<48x8xbf16>
    %cst_342 = arith.constant dense<0.000000e+00> : vector<48x48xf32>
    %429 = tpu.matmul %427, %428, %cst_342 {dimension_numbers = #tpu.dot_dimension_numbers<[1], [1], [0], [0], [0, 0, 1, 0], [], []>} : vector<48x8xbf16>, vector<48x8xbf16>, vector<48x48xf32> -> vector<48x48xf32>
    %430 = arith.addf %429, %16 : vector<48x48xf32>
    %cst_343 = arith.constant dense<0xFF800000> : vector<48xf32>
    %431 = vector.multi_reduction <maximumf>, %430, %cst_343 [1] : vector<48x48xf32> to vector<48xf32>
    %432 = vector.shape_cast %431 : vector<48xf32> to vector<48x1xf32>
    %433 = vector.broadcast %432 : vector<48x1xf32> to vector<48x48xf32>
    %434 = arith.subf %430, %433 : vector<48x48xf32>
    %435 = math.exp %434 : vector<48x48xf32>
    %cst_344 = arith.constant dense<0.000000e+00> : vector<48xf32>
    %436 = vector.multi_reduction <add>, %435, %cst_344 [1] : vector<48x48xf32> to vector<48xf32>
    %437 = vector.shape_cast %436 : vector<48xf32> to vector<48x1xf32>
    %438 = tpu.reciprocal %437 {approx = true} : vector<48x1xf32> -> vector<48x1xf32>
    %439 = vector.broadcast %438 : vector<48x1xf32> to vector<48x48xf32>
    %440 = arith.mulf %435, %439 : vector<48x48xf32>
    %441 = arith.truncf %440 : vector<48x48xf32> to vector<48x48xbf16>
    %442 = arith.truncf %426 : vector<48x8xf32> to vector<48x8xbf16>
    %cst_345 = arith.constant dense<0.000000e+00> : vector<48x8xf32>
    %443 = tpu.matmul %441, %442, %cst_345 {dimension_numbers = #tpu.dot_dimension_numbers<[1], [0], [0], [1], [0, 0, 1, 1], [], []>} : vector<48x48xbf16>, vector<48x8xbf16>, vector<48x8xf32> -> vector<48x8xf32>
    %444 = arith.truncf %443 : vector<48x8xf32> to vector<48x8xbf16>
    %c1_346 = arith.constant 1 : index
    %c3_347 = arith.constant 3 : index
    %c0_348 = arith.constant 0 : index
    %c0_349 = arith.constant 0 : index
    %445 = vector.load %arg12[%c1_346, %c3_347, %c0_348, %c0_349] : memref<2x4x8x32xbf16, #tpu.memory_space<vmem>>, vector<1x1x8x32xbf16>
    %446 = vector.shape_cast %445 : vector<1x1x8x32xbf16> to vector<8x32xbf16>
    %cst_350 = arith.constant dense<0.000000e+00> : vector<48x32xf32>
    %447 = tpu.matmul %444, %446, %cst_350 {dimension_numbers = #tpu.dot_dimension_numbers<[1], [0], [0], [1], [0, 0, 1, 1], [], []>} : vector<48x8xbf16>, vector<8x32xbf16>, vector<48x32xf32> -> vector<48x32xf32>
    %448 = arith.addf %405, %447 : vector<48x32xf32>
    %c1_351 = arith.constant 1 : index
    %c0_352 = arith.constant 0 : index
    %c0_353 = arith.constant 0 : index
    %449 = vector.load %arg13[%c1_351, %c0_352, %c0_353] : memref<2x1x32xf32, #tpu.memory_space<vmem>>, vector<1x1x32xf32>
    %450 = vector.shape_cast %449 : vector<1x1x32xf32> to vector<1x32xf32>
    %451 = vector.broadcast %450 : vector<1x32xf32> to vector<48x32xf32>
    %452 = arith.addf %448, %451 : vector<48x32xf32>
    %453 = arith.addf %266, %452 : vector<48x32xf32>
    %cst_354 = arith.constant dense<0.000000e+00> : vector<48xf32>
    %454 = vector.multi_reduction <add>, %453, %cst_354 [1] : vector<48x32xf32> to vector<48xf32>
    %455 = vector.shape_cast %454 : vector<48xf32> to vector<48x1xf32>
    %cst_355 = arith.constant 3.200000e+01 : f32
    %456 = vector.broadcast %cst_355 : f32 to vector<48x1xf32>
    %457 = arith.divf %455, %456 : vector<48x1xf32>
    %458 = vector.broadcast %457 : vector<48x1xf32> to vector<48x32xf32>
    %459 = arith.subf %453, %458 : vector<48x32xf32>
    %460 = arith.mulf %459, %459 : vector<48x32xf32>
    %cst_356 = arith.constant dense<0.000000e+00> : vector<48xf32>
    %461 = vector.multi_reduction <add>, %460, %cst_356 [1] : vector<48x32xf32> to vector<48xf32>
    %462 = vector.shape_cast %461 : vector<48xf32> to vector<48x1xf32>
    %cst_357 = arith.constant 3.200000e+01 : f32
    %463 = vector.broadcast %cst_357 : f32 to vector<48x1xf32>
    %464 = arith.divf %462, %463 : vector<48x1xf32>
    %465 = vector.broadcast %457 : vector<48x1xf32> to vector<48x32xf32>
    %466 = arith.subf %453, %465 : vector<48x32xf32>
    %cst_358 = arith.constant 9.99999974E-6 : f32
    %467 = vector.broadcast %cst_358 : f32 to vector<48x1xf32>
    %468 = arith.addf %464, %467 : vector<48x1xf32>
    %469 = math.rsqrt %468 : vector<48x1xf32>
    %470 = vector.broadcast %469 : vector<48x1xf32> to vector<48x32xf32>
    %471 = arith.mulf %466, %470 : vector<48x32xf32>
    %472 = vector.broadcast %268 : vector<1x32xf32> to vector<48x32xf32>
    %473 = arith.mulf %471, %472 : vector<48x32xf32>
    %474 = vector.broadcast %270 : vector<1x32xf32> to vector<48x32xf32>
    %475 = arith.addf %473, %474 : vector<48x32xf32>
    %476 = arith.truncf %475 : vector<48x32xf32> to vector<48x32xbf16>
    %c1_359 = arith.constant 1 : index
    %c0_360 = arith.constant 0 : index
    %c0_361 = arith.constant 0 : index
    %477 = vector.load %arg14[%c1_359, %c0_360, %c0_361] : memref<2x32x128xbf16, #tpu.memory_space<vmem>>, vector<1x32x128xbf16>
    %478 = vector.shape_cast %477 : vector<1x32x128xbf16> to vector<32x128xbf16>
    %cst_362 = arith.constant dense<0.000000e+00> : vector<48x128xf32>
    %479 = tpu.matmul %476, %478, %cst_362 {dimension_numbers = #tpu.dot_dimension_numbers<[1], [0], [0], [1], [0, 0, 1, 1], [], []>} : vector<48x32xbf16>, vector<32x128xbf16>, vector<48x128xf32> -> vector<48x128xf32>
    %c1_363 = arith.constant 1 : index
    %c0_364 = arith.constant 0 : index
    %c0_365 = arith.constant 0 : index
    %480 = vector.load %arg15[%c1_363, %c0_364, %c0_365] : memref<2x1x128xf32, #tpu.memory_space<vmem>>, vector<1x1x128xf32>
    %481 = vector.shape_cast %480 : vector<1x1x128xf32> to vector<1x128xf32>
    %482 = vector.broadcast %481 : vector<1x128xf32> to vector<48x128xf32>
    %483 = arith.addf %479, %482 : vector<48x128xf32>
    %cst_366 = arith.constant 0.000000e+00 : f32
    %484 = vector.broadcast %cst_366 : f32 to vector<48x128xf32>
    %485 = arith.maximumf %483, %484 : vector<48x128xf32>
    %486 = arith.truncf %485 : vector<48x128xf32> to vector<48x128xbf16>
    %c1_367 = arith.constant 1 : index
    %c0_368 = arith.constant 0 : index
    %c0_369 = arith.constant 0 : index
    %487 = vector.load %arg16[%c1_367, %c0_368, %c0_369] : memref<2x128x32xbf16, #tpu.memory_space<vmem>>, vector<1x128x32xbf16>
    %488 = vector.shape_cast %487 : vector<1x128x32xbf16> to vector<128x32xbf16>
    %cst_370 = arith.constant dense<0.000000e+00> : vector<48x32xf32>
    %489 = tpu.matmul %486, %488, %cst_370 {dimension_numbers = #tpu.dot_dimension_numbers<[1], [0], [0], [1], [0, 0, 1, 1], [], []>} : vector<48x128xbf16>, vector<128x32xbf16>, vector<48x32xf32> -> vector<48x32xf32>
    %c1_371 = arith.constant 1 : index
    %c0_372 = arith.constant 0 : index
    %c0_373 = arith.constant 0 : index
    %490 = vector.load %arg17[%c1_371, %c0_372, %c0_373] : memref<2x1x32xf32, #tpu.memory_space<vmem>>, vector<1x1x32xf32>
    %491 = vector.shape_cast %490 : vector<1x1x32xf32> to vector<1x32xf32>
    %492 = vector.broadcast %491 : vector<1x32xf32> to vector<48x32xf32>
    %493 = arith.addf %489, %492 : vector<48x32xf32>
    %494 = arith.addf %475, %493 : vector<48x32xf32>
    %cst_374 = arith.constant dense<0.000000e+00> : vector<48xf32>
    %495 = vector.multi_reduction <add>, %494, %cst_374 [1] : vector<48x32xf32> to vector<48xf32>
    %496 = vector.shape_cast %495 : vector<48xf32> to vector<48x1xf32>
    %cst_375 = arith.constant 3.200000e+01 : f32
    %497 = vector.broadcast %cst_375 : f32 to vector<48x1xf32>
    %498 = arith.divf %496, %497 : vector<48x1xf32>
    %499 = vector.broadcast %498 : vector<48x1xf32> to vector<48x32xf32>
    %500 = arith.subf %494, %499 : vector<48x32xf32>
    %501 = arith.mulf %500, %500 : vector<48x32xf32>
    %cst_376 = arith.constant dense<0.000000e+00> : vector<48xf32>
    %502 = vector.multi_reduction <add>, %501, %cst_376 [1] : vector<48x32xf32> to vector<48xf32>
    %503 = vector.shape_cast %502 : vector<48xf32> to vector<48x1xf32>
    %cst_377 = arith.constant 3.200000e+01 : f32
    %504 = vector.broadcast %cst_377 : f32 to vector<48x1xf32>
    %505 = arith.divf %503, %504 : vector<48x1xf32>
    %506 = vector.broadcast %498 : vector<48x1xf32> to vector<48x32xf32>
    %507 = arith.subf %494, %506 : vector<48x32xf32>
    %cst_378 = arith.constant 9.99999974E-6 : f32
    %508 = vector.broadcast %cst_378 : f32 to vector<48x1xf32>
    %509 = arith.addf %505, %508 : vector<48x1xf32>
    %510 = math.rsqrt %509 : vector<48x1xf32>
    %511 = vector.broadcast %510 : vector<48x1xf32> to vector<48x32xf32>
    %512 = arith.mulf %507, %511 : vector<48x32xf32>
    %513 = vector.broadcast %272 : vector<1x32xf32> to vector<48x32xf32>
    %514 = arith.mulf %512, %513 : vector<48x32xf32>
    %515 = vector.broadcast %274 : vector<1x32xf32> to vector<48x32xf32>
    %516 = arith.addf %514, %515 : vector<48x32xf32>
    %c0_379 = arith.constant 0 : index
    %c0_380 = arith.constant 0 : index
    %517 = vector.load %arg22[%c0_379, %c0_380] : memref<48x32xf32, #tpu.memory_space<vmem>>, vector<48x32xf32>
    tpu.vector_store %arg22[%c0_379, %c0_380], %516 {strides = array<i32>} : memref<48x32xf32, #tpu.memory_space<vmem>>, vector<48x32xf32>,
    return
  }
  func.func @transform_0(%arg0: i32) -> (i32, i32) {
    %c0_i32 = arith.constant 0 : i32
    %c0_i32_0 = arith.constant 0 : i32
    return %arg0, %c0_i32 : i32, i32
  }
  func.func @transform_1(%arg0: i32) -> (i32, i32) {
    %c0_i32 = arith.constant 0 : i32
    %c0_i32_0 = arith.constant 0 : i32
    %c0_i32_1 = arith.constant 0 : i32
    return %c0_i32, %c0_i32_0 : i32, i32
  }
  func.func @transform_2(%arg0: i32) -> (i32, i32) {
    %c0_i32 = arith.constant 0 : i32
    %c0_i32_0 = arith.constant 0 : i32
    %c0_i32_1 = arith.constant 0 : i32
    return %c0_i32, %c0_i32_0 : i32, i32
  }
  func.func @transform_3(%arg0: i32) -> (i32, i32) {
    %c0_i32 = arith.constant 0 : i32
    %c0_i32_0 = arith.constant 0 : i32
    %c0_i32_1 = arith.constant 0 : i32
    return %c0_i32, %c0_i32_0 : i32, i32
  }
  func.func @transform_4(%arg0: i32) -> (i32, i32) {
    %c0_i32 = arith.constant 0 : i32
    %c0_i32_0 = arith.constant 0 : i32
    %c0_i32_1 = arith.constant 0 : i32
    return %c0_i32, %c0_i32_0 : i32, i32
  }
  func.func @transform_5(%arg0: i32) -> (i32, i32, i32, i32) {
    %c0_i32 = arith.constant 0 : i32
    %c0_i32_0 = arith.constant 0 : i32
    %c0_i32_1 = arith.constant 0 : i32
    %c0_i32_2 = arith.constant 0 : i32
    %c0_i32_3 = arith.constant 0 : i32
    return %c0_i32, %c0_i32_0, %c0_i32_1, %c0_i32_2 : i32, i32, i32, i32
  }
  func.func @transform_6(%arg0: i32) -> (i32, i32, i32, i32) {
    %c0_i32 = arith.constant 0 : i32
    %c0_i32_0 = arith.constant 0 : i32
    %c0_i32_1 = arith.constant 0 : i32
    %c0_i32_2 = arith.constant 0 : i32
    %c0_i32_3 = arith.constant 0 : i32
    return %c0_i32, %c0_i32_0, %c0_i32_1, %c0_i32_2 : i32, i32, i32, i32
  }
  func.func @transform_7(%arg0: i32) -> (i32, i32, i32, i32) {
    %c0_i32 = arith.constant 0 : i32
    %c0_i32_0 = arith.constant 0 : i32
    %c0_i32_1 = arith.constant 0 : i32
    %c0_i32_2 = arith.constant 0 : i32
    %c0_i32_3 = arith.constant 0 : i32
    return %c0_i32, %c0_i32_0, %c0_i32_1, %c0_i32_2 : i32, i32, i32, i32
  }
  func.func @transform_8(%arg0: i32) -> (i32, i32, i32, i32) {
    %c0_i32 = arith.constant 0 : i32
    %c0_i32_0 = arith.constant 0 : i32
    %c0_i32_1 = arith.constant 0 : i32
    %c0_i32_2 = arith.constant 0 : i32
    %c0_i32_3 = arith.constant 0 : i32
    return %c0_i32, %c0_i32_0, %c0_i32_1, %c0_i32_2 : i32, i32, i32, i32
  }
  func.func @transform_9(%arg0: i32) -> (i32, i32, i32, i32) {
    %c0_i32 = arith.constant 0 : i32
    %c0_i32_0 = arith.constant 0 : i32
    %c0_i32_1 = arith.constant 0 : i32
    %c0_i32_2 = arith.constant 0 : i32
    %c0_i32_3 = arith.constant 0 : i32
    return %c0_i32, %c0_i32_0, %c0_i32_1, %c0_i32_2 : i32, i32, i32, i32
  }
  func.func @transform_10(%arg0: i32) -> (i32, i32, i32, i32) {
    %c0_i32 = arith.constant 0 : i32
    %c0_i32_0 = arith.constant 0 : i32
    %c0_i32_1 = arith.constant 0 : i32
    %c0_i32_2 = arith.constant 0 : i32
    %c0_i32_3 = arith.constant 0 : i32
    return %c0_i32, %c0_i32_0, %c0_i32_1, %c0_i32_2 : i32, i32, i32, i32
  }
  func.func @transform_11(%arg0: i32) -> (i32, i32, i32, i32) {
    %c0_i32 = arith.constant 0 : i32
    %c0_i32_0 = arith.constant 0 : i32
    %c0_i32_1 = arith.constant 0 : i32
    %c0_i32_2 = arith.constant 0 : i32
    %c0_i32_3 = arith.constant 0 : i32
    return %c0_i32, %c0_i32_0, %c0_i32_1, %c0_i32_2 : i32, i32, i32, i32
  }
  func.func @transform_12(%arg0: i32) -> (i32, i32, i32) {
    %c0_i32 = arith.constant 0 : i32
    %c0_i32_0 = arith.constant 0 : i32
    %c0_i32_1 = arith.constant 0 : i32
    %c0_i32_2 = arith.constant 0 : i32
    return %c0_i32, %c0_i32_0, %c0_i32_1 : i32, i32, i32
  }
  func.func @transform_13(%arg0: i32) -> (i32, i32, i32) {
    %c0_i32 = arith.constant 0 : i32
    %c0_i32_0 = arith.constant 0 : i32
    %c0_i32_1 = arith.constant 0 : i32
    %c0_i32_2 = arith.constant 0 : i32
    return %c0_i32, %c0_i32_0, %c0_i32_1 : i32, i32, i32
  }
  func.func @transform_14(%arg0: i32) -> (i32, i32, i32) {
    %c0_i32 = arith.constant 0 : i32
    %c0_i32_0 = arith.constant 0 : i32
    %c0_i32_1 = arith.constant 0 : i32
    %c0_i32_2 = arith.constant 0 : i32
    return %c0_i32, %c0_i32_0, %c0_i32_1 : i32, i32, i32
  }
  func.func @transform_15(%arg0: i32) -> (i32, i32, i32) {
    %c0_i32 = arith.constant 0 : i32
    %c0_i32_0 = arith.constant 0 : i32
    %c0_i32_1 = arith.constant 0 : i32
    %c0_i32_2 = arith.constant 0 : i32
    return %c0_i32, %c0_i32_0, %c0_i32_1 : i32, i32, i32
  }
  func.func @transform_16(%arg0: i32) -> (i32, i32, i32) {
    %c0_i32 = arith.constant 0 : i32
    %c0_i32_0 = arith.constant 0 : i32
    %c0_i32_1 = arith.constant 0 : i32
    %c0_i32_2 = arith.constant 0 : i32
    return %c0_i32, %c0_i32_0, %c0_i32_1 : i32, i32, i32
  }
  func.func @transform_17(%arg0: i32) -> (i32, i32, i32) {
    %c0_i32 = arith.constant 0 : i32
    %c0_i32_0 = arith.constant 0 : i32
    %c0_i32_1 = arith.constant 0 : i32
    %c0_i32_2 = arith.constant 0 : i32
    return %c0_i32, %c0_i32_0, %c0_i32_1 : i32, i32, i32
  }
  func.func @transform_18(%arg0: i32) -> (i32, i32, i32) {
    %c0_i32 = arith.constant 0 : i32
    %c0_i32_0 = arith.constant 0 : i32
    %c0_i32_1 = arith.constant 0 : i32
    %c0_i32_2 = arith.constant 0 : i32
    return %c0_i32, %c0_i32_0, %c0_i32_1 : i32, i32, i32
  }
  func.func @transform_19(%arg0: i32) -> (i32, i32, i32) {
    %c0_i32 = arith.constant 0 : i32
    %c0_i32_0 = arith.constant 0 : i32
    %c0_i32_1 = arith.constant 0 : i32
    %c0_i32_2 = arith.constant 0 : i32
    return %c0_i32, %c0_i32_0, %c0_i32_1 : i32, i32, i32
  }
  func.func @transform_20(%arg0: i32) -> (i32, i32, i32) {
    %c0_i32 = arith.constant 0 : i32
    %c0_i32_0 = arith.constant 0 : i32
    %c0_i32_1 = arith.constant 0 : i32
    %c0_i32_2 = arith.constant 0 : i32
    return %c0_i32, %c0_i32_0, %c0_i32_1 : i32, i32, i32
  }
  func.func @transform_21(%arg0: i32) -> (i32, i32) {
    %c0_i32 = arith.constant 0 : i32
    %c0_i32_0 = arith.constant 0 : i32
    return %arg0, %c0_i32 : i32, i32
  }
}

</mosaic_0001>

<llo_original>
// kernel: mtr_decoder_forward.1
$region0: #{mtr_decoder_forward.1}
  #allocation0 [shape = 'u32[]', space=smem, size = 0x4, offset = 0x4, fixed_abs, tag = 'smem constant byte address 0x4 - core index']
  #allocation1 [shape = 'u32[72,128]{1,0:T(1,128)}', space=vmem, size = 0x9000, scoped, tag = 'internal scratch']
  %s0 = inlined_call_operand.vmem [shape: f32[48,32], index: 0, kind: input, shape index: {}]
  %s1 = inlined_call_operand.vmem [shape: s32[48,1], index: 1, kind: input, shape index: {}]
  %s2 = inlined_call_operand.vmem [shape: s32[1,48], index: 2, kind: input, shape index: {}]
  %s3 = inlined_call_operand.vmem [shape: s32[48,1], index: 3, kind: input, shape index: {}]
  %s4 = inlined_call_operand.vmem [shape: s32[1,48], index: 4, kind: input, shape index: {}]
  %s5 = inlined_call_operand.vmem [shape: bf16[2,4,32,8], index: 5, kind: input, shape index: {}]
  %s6 = inlined_call_operand.vmem [shape: bf16[2,4,32,8], index: 6, kind: input, shape index: {}]
  %s7 = inlined_call_operand.vmem [shape: bf16[2,4,32,8], index: 7, kind: input, shape index: {}]
  %s8 = inlined_call_operand.vmem [shape: f32[2,4,1,8], index: 8, kind: input, shape index: {}]
  %s9 = inlined_call_operand.vmem [shape: f32[2,4,1,8], index: 9, kind: input, shape index: {}]
  %s10 = inlined_call_operand.vmem [shape: f32[2,4,1,8], index: 10, kind: input, shape index: {}]
  %s11 = inlined_call_operand.vmem [shape: bf16[2,4,8,32], index: 11, kind: input, shape index: {}]
  %s12 = inlined_call_operand.vmem [shape: f32[2,1,32], index: 12, kind: input, shape index: {}]
  %s13 = inlined_call_operand.vmem [shape: bf16[2,32,128], index: 13, kind: input, shape index: {}]
  %s14 = inlined_call_operand.vmem [shape: f32[2,1,128], index: 14, kind: input, shape index: {}]
  %s15 = inlined_call_operand.vmem [shape: bf16[2,128,32], index: 15, kind: input, shape index: {}]
  %s16 = inlined_call_operand.vmem [shape: f32[2,1,32], index: 16, kind: input, shape index: {}]
  %s17 = inlined_call_operand.vmem [shape: f32[2,1,32], index: 17, kind: input, shape index: {}]
  %s18 = inlined_call_operand.vmem [shape: f32[2,1,32], index: 18, kind: input, shape index: {}]
  %s19 = inlined_call_operand.vmem [shape: f32[2,1,32], index: 19, kind: input, shape index: {}]
  %s20 = inlined_call_operand.vmem [shape: f32[2,1,32], index: 20, kind: input, shape index: {}]
  %s21 = inlined_call_operand.hbm [shape: f32[48,32], index: 21, kind: output, shape index: {}]
  %s22 = sld [smem:[#allocation0]]
  $region94: #{mtr_decoder_forward.1} parent=0
    _
  %s24 = ssub.s32 1, %s22
  %s25 = scalar_select 0, %s24, %s22
  $region1: #{mtr_decoder_forward.1} parent=0
    #allocation2 [shape = 'u8[24576]{0}', space=vmem, size = 0x6000, scoped, tag = 'output window, operand 0, single buffered']
    #allocation3 [shape = 's32[1]{0}', space=sflag, size = 0x4, scoped, tag = 'scoped memory for mtr_decoder_forward.1']
    %26 = vsyncpa [#allocation3], 0
    // Predicated region
    $region2: #{mtr_decoder_forward.1} parent=1 // pred_check
      _
    $region3: #{mtr_decoder_forward.1} parent=1 // pred_check_branch
      %28 = sbr.rel (0) target = $region5
    $region4: #{mtr_decoder_forward.1} parent=1 // pred_region
      _
    $region5: #{mtr_decoder_forward.1} parent=1 // pred_fallthru
      _
    // Predicated region
    $region6: #{mtr_decoder_forward.1} parent=1 // pred_check
      _
    $region7: #{mtr_decoder_forward.1} parent=1 // pred_check_branch
      %30 = sbr.rel (0) target = $region9
    $region8: #{mtr_decoder_forward.1} parent=1 // pred_region
      _
    $region9: #{mtr_decoder_forward.1} parent=1 // pred_fallthru
      _
    // Predicated region
    $region10: #{mtr_decoder_forward.1} parent=1 // pred_check
      _
    $region11: #{mtr_decoder_forward.1} parent=1 // pred_check_branch
      %32 = sbr.rel (0) target = $region13
    $region12: #{mtr_decoder_forward.1} parent=1 // pred_region
      _
    $region13: #{mtr_decoder_forward.1} parent=1 // pred_fallthru
      _
    // Predicated region
    $region14: #{mtr_decoder_forward.1} parent=1 // pred_check
      _
    $region15: #{mtr_decoder_forward.1} parent=1 // pred_check_branch
      %34 = sbr.rel (0) target = $region17
    $region16: #{mtr_decoder_forward.1} parent=1 // pred_region
      _
    $region17: #{mtr_decoder_forward.1} parent=1 // pred_fallthru
      _
    // Predicated region
    $region18: #{mtr_decoder_forward.1} parent=1 // pred_check
      _
    $region19: #{mtr_decoder_forward.1} parent=1 // pred_check_branch
      %36 = sbr.rel (0) target = $region21
    $region20: #{mtr_decoder_forward.1} parent=1 // pred_region
      _
    $region21: #{mtr_decoder_forward.1} parent=1 // pred_fallthru
      _
    // Predicated region
    $region22: #{mtr_decoder_forward.1} parent=1 // pred_check
      _
    $region23: #{mtr_decoder_forward.1} parent=1 // pred_check_branch
      %38 = sbr.rel (0) target = $region25
    $region24: #{mtr_decoder_forward.1} parent=1 // pred_region
      _
    $region25: #{mtr_decoder_forward.1} parent=1 // pred_fallthru
      _
    // Predicated region
    $region26: #{mtr_decoder_forward.1} parent=1 // pred_check
      _
    $region27: #{mtr_decoder_forward.1} parent=1 // pred_check_branch
      %40 = sbr.rel (0) target = $region29
    $region28: #{mtr_decoder_forward.1} parent=1 // pred_region
      _
    $region29: #{mtr_decoder_forward.1} parent=1 // pred_fallthru
      _
    // Predicated region
    $region30: #{mtr_decoder_forward.1} parent=1 // pred_check
      _
    $region31: #{mtr_decoder_forward.1} parent=1 // pred_check_branch
      %42 = sbr.rel (0) target = $region33
    $region32: #{mtr_decoder_forward.1} parent=1 // pred_region
      _
    $region33: #{mtr_decoder_forward.1} parent=1 // pred_fallthru
      _
    // Predicated region
    $region34: #{mtr_decoder_forward.1} parent=1 // pred_check
      _
    $region35: #{mtr_decoder_forward.1} parent=1 // pred_check_branch
      %44 = sbr.rel (0) target = $region37
    $region36: #{mtr_decoder_forward.1} parent=1 // pred_region
      _
    $region37: #{mtr_decoder_forward.1} parent=1 // pred_fallthru
      _
    // Predicated region
    $region38: #{mtr_decoder_forward.1} parent=1 // pred_check
      _
    $region39: #{mtr_decoder_forward.1} parent=1 // pred_check_branch
      %46 = sbr.rel (0) target = $region41
    $region40: #{mtr_decoder_forward.1} parent=1 // pred_region
      _
    $region41: #{mtr_decoder_forward.1} parent=1 // pred_fallthru
      _
    // Predicated region
    $region42: #{mtr_decoder_forward.1} parent=1 // pred_check
      _
    $region43: #{mtr_decoder_forward.1} parent=1 // pred_check_branch
      %48 = sbr.rel (0) target = $region45
    $region44: #{mtr_decoder_forward.1} parent=1 // pred_region
      _
    $region45: #{mtr_decoder_forward.1} parent=1 // pred_fallthru
      _
    // Predicated region
    $region46: #{mtr_decoder_forward.1} parent=1 // pred_check
      _
    $region47: #{mtr_decoder_forward.1} parent=1 // pred_check_branch
      %50 = sbr.rel (0) target = $region49
    $region48: #{mtr_decoder_forward.1} parent=1 // pred_region
      _
    $region49: #{mtr_decoder_forward.1} parent=1 // pred_fallthru
      _
    // Predicated region
    $region50: #{mtr_decoder_forward.1} parent=1 // pred_check
      _
    $region51: #{mtr_decoder_forward.1} parent=1 // pred_check_branch
      %52 = sbr.rel (0) target = $region53
    $region52: #{mtr_decoder_forward.1} parent=1 // pred_region
      _
    $region53: #{mtr_decoder_forward.1} parent=1 // pred_fallthru
      _
    // Predicated region
    $region54: #{mtr_decoder_forward.1} parent=1 // pred_check
      _
    $region55: #{mtr_decoder_forward.1} parent=1 // pred_check_branch
      %54 = sbr.rel (0) target = $region57
    $region56: #{mtr_decoder_forward.1} parent=1 // pred_region
      _
    $region57: #{mtr_decoder_forward.1} parent=1 // pred_fallthru
      _
    // Predicated region
    $region58: #{mtr_decoder_forward.1} parent=1 // pred_check
      _
    $region59: #{mtr_decoder_forward.1} parent=1 // pred_check_branch
      %56 = sbr.rel (0) target = $region61
    $region60: #{mtr_decoder_forward.1} parent=1 // pred_region
      _
    $region61: #{mtr_decoder_forward.1} parent=1 // pred_fallthru
      _
    // Predicated region
    $region62: #{mtr_decoder_forward.1} parent=1 // pred_check
      _
    $region63: #{mtr_decoder_forward.1} parent=1 // pred_check_branch
      %58 = sbr.rel (0) target = $region65
    $region64: #{mtr_decoder_forward.1} parent=1 // pred_region
      _
    $region65: #{mtr_decoder_forward.1} parent=1 // pred_fallthru
      _
    // Predicated region
    $region66: #{mtr_decoder_forward.1} parent=1 // pred_check
      _
    $region67: #{mtr_decoder_forward.1} parent=1 // pred_check_branch
      %60 = sbr.rel (0) target = $region69
    $region68: #{mtr_decoder_forward.1} parent=1 // pred_region
      _
    $region69: #{mtr_decoder_forward.1} parent=1 // pred_fallthru
      _
    // Predicated region
    $region70: #{mtr_decoder_forward.1} parent=1 // pred_check
      _
    $region71: #{mtr_decoder_forward.1} parent=1 // pred_check_branch
      %62 = sbr.rel (0) target = $region73
    $region72: #{mtr_decoder_forward.1} parent=1 // pred_region
      _
    $region73: #{mtr_decoder_forward.1} parent=1 // pred_fallthru
      _
    // Predicated region
    $region74: #{mtr_decoder_forward.1} parent=1 // pred_check
      _
    $region75: #{mtr_decoder_forward.1} parent=1 // pred_check_branch
      %64 = sbr.rel (0) target = $region77
    $region76: #{mtr_decoder_forward.1} parent=1 // pred_region
      _
    $region77: #{mtr_decoder_forward.1} parent=1 // pred_fallthru
      _
    // Predicated region
    $region78: #{mtr_decoder_forward.1} parent=1 // pred_check
      _
    $region79: #{mtr_decoder_forward.1} parent=1 // pred_check_branch
      %66 = sbr.rel (0) target = $region81
    $region80: #{mtr_decoder_forward.1} parent=1 // pred_region
      _
    $region81: #{mtr_decoder_forward.1} parent=1 // pred_fallthru
      _
    // Predicated region
    $region82: #{mtr_decoder_forward.1} parent=1 // pred_check
      _
    $region83: #{mtr_decoder_forward.1} parent=1 // pred_check_branch
      %68 = sbr.rel (0) target = $region85
    $region84: #{mtr_decoder_forward.1} parent=1 // pred_region
      _
    $region85: #{mtr_decoder_forward.1} parent=1 // pred_fallthru
      _
    %v70 = vld [vmem:[%s0] sm:$0xff]
    %v71 = vld [vmem:[%s0 + $0x8] sm:$0xff]
    %v72 = vld [vmem:[%s0 + $0x10] sm:$0xff]
    %v73 = vld [vmem:[%s0 + $0x18] sm:$0xff]
    %v74 = vld [vmem:[%s0 + $0x20] sm:$0xff]
    %v75 = vld [vmem:[%s0 + $0x28] sm:$0xff]
    %v76 = vld [vmem:[%s1] sm:$0xff]
    %v77 = vld [vmem:[%s1 + $0x8] sm:$0xff]
    %v78 = vld [vmem:[%s1 + $0x10] sm:$0xff]
    %v79 = vld [vmem:[%s1 + $0x18] sm:$0xff]
    %v80 = vld [vmem:[%s1 + $0x20] sm:$0xff]
    %v81 = vld [vmem:[%s1 + $0x28] sm:$0xff]
    %v82 = vld [vmem:[%s2] sm:$0x1]
    %83 = vset.pattern.permute.xlu0 0
    %84 = vperm.xlu0 %83, %v76
    %v85 = vpop.permute.xlu0 %84
    %86 = vset.pattern.permute.xlu0 0
    %87 = vperm.xlu0 %86, %v77
    %v88 = vpop.permute.xlu0 %87
    %89 = vset.pattern.permute.xlu0 0
    %90 = vperm.xlu0 %89, %v78
    %v91 = vpop.permute.xlu0 %90
    %92 = vset.pattern.permute.xlu0 0
    %93 = vperm.xlu0 %92, %v79
    %v94 = vpop.permute.xlu0 %93
    %95 = vset.pattern.permute.xlu0 0
    %96 = vperm.xlu0 %95, %v80
    %v97 = vpop.permute.xlu0 %96
    %98 = vset.pattern.permute.xlu0 0
    %99 = vperm.xlu0 %98, %v81
    %v100 = vpop.permute.xlu0 %99
    %v101 = vperm.slane %v82, 0
    %vm102 = vcmp.eq.s32.totalorder %v85, %v101
    %vm103 = vcmp.eq.s32.totalorder %v88, %v101
    %vm104 = vcmp.eq.s32.totalorder %v91, %v101
    %vm105 = vcmp.eq.s32.totalorder %v94, %v101
    %vm106 = vcmp.eq.s32.totalorder %v97, %v101
    %vm107 = vcmp.eq.s32.totalorder %v100, %v101
    %v108 = vsel %vm102, 0.0, -1e+09
    %v109 = vsel %vm103, 0.0, -1e+09
    %v110 = vsel %vm104, 0.0, -1e+09
    %v111 = vsel %vm105, 0.0, -1e+09
    %v112 = vsel %vm106, 0.0, -1e+09
    %v113 = vsel %vm107, 0.0, -1e+09
    %v114 = vld [vmem:[%s3] sm:$0xff]
    %v115 = vld [vmem:[%s3 + $0x8] sm:$0xff]
    %v116 = vld [vmem:[%s3 + $0x10] sm:$0xff]
    %v117 = vld [vmem:[%s3 + $0x18] sm:$0xff]
    %v118 = vld [vmem:[%s3 + $0x20] sm:$0xff]
    %v119 = vld [vmem:[%s3 + $0x28] sm:$0xff]
    %v120 = vld [vmem:[%s4] sm:$0x1]
    %121 = vset.pattern.permute.xlu0 0
    %122 = vperm.xlu0 %121, %v114
    %v123 = vpop.permute.xlu0 %122
    %124 = vset.pattern.permute.xlu0 0
    %125 = vperm.xlu0 %124, %v115
    %v126 = vpop.permute.xlu0 %125
    %127 = vset.pattern.permute.xlu0 0
    %128 = vperm.xlu0 %127, %v116
    %v129 = vpop.permute.xlu0 %128
    %130 = vset.pattern.permute.xlu0 0
    %131 = vperm.xlu0 %130, %v117
    %v132 = vpop.permute.xlu0 %131
    %133 = vset.pattern.permute.xlu0 0
    %134 = vperm.xlu0 %133, %v118
    %v135 = vpop.permute.xlu0 %134
    %136 = vset.pattern.permute.xlu0 0
    %137 = vperm.xlu0 %136, %v119
    %v138 = vpop.permute.xlu0 %137
    %v139 = vperm.slane %v120, 0
    %vm140 = vcmp.eq.s32.totalorder %v123, %v139
    %vm141 = vcmp.eq.s32.totalorder %v126, %v139
    %vm142 = vcmp.eq.s32.totalorder %v129, %v139
    %vm143 = vcmp.eq.s32.totalorder %v132, %v139
    %vm144 = vcmp.eq.s32.totalorder %v135, %v139
    %vm145 = vcmp.eq.s32.totalorder %v138, %v139
    %v146 = vsel %vm140, 0.0, -1e+09
    %v147 = vsel %vm141, 0.0, -1e+09
    %v148 = vsel %vm142, 0.0, -1e+09
    %v149 = vsel %vm143, 0.0, -1e+09
    %v150 = vsel %vm144, 0.0, -1e+09
    %v151 = vsel %vm145, 0.0, -1e+09
    %v152 = vld [vmem:[%s17] sm:$0x1]
    %v153 = vld [vmem:[%s18] sm:$0x1]
    %v154 = vld [vmem:[%s19] sm:$0x1]
    %v155 = vld [vmem:[%s20] sm:$0x1]
    %v156 = vpack.c.bf16 %v71, %v70
    %v157 = vpack.c.bf16 %v73, %v72
    %v158 = vpack.c.bf16 %v75, %v74
    %v159 = vld [vmem:[%s5] sm:$0xf]
    %v160 = vld [vmem:[%s5 + $0x4] sm:$0xf]
    %v161 = vld [vmem:[%s5 + $0x8] sm:$0xf]
    %v162 = vld [vmem:[%s5 + $0xc] sm:$0xf]
    %v163 = vld [vmem:[%s8] sm:$0x1]
    %v165 = vperm.slane %v163, 0
    %v171 = vunpack.c.l.b16 %v159
    %v172 = vunpack.c.l.b16 %v160
    %v173 = vunpack.c.l.b16 %v161
    %v174 = vunpack.c.l.b16 %v162
    %v175 = vpack.c.b16 %v172, %v171
    %v176 = vpack.c.b16 %v174, %v173
    %vm179 = vcmask 261120
    %v181 = vsel %vm179, %v156, 0
    %v184 = vsel %vm179, %v157, 0
    %v187 = vsel %vm179, %v158, 0
    %189 = vmatpush.bf16.msra.mxu0 0
    %190 = vmatpush.bf16.msra.mxu0 0
    %191 = vmatpush.bf16.msra.mxu0 0
    %192 = vmatpush.bf16.msra.mxu0 0
    %193 = vmatpush.bf16.msra.mxu0 0
    %194 = vmatpush.bf16.msra.mxu0 0
    %195 = vmatpush.bf16.msra.mxu0 %v176
    %196 = vmatpush.bf16.msra.mxu0 %v175
    %197 = vmatmul.bf16.gmra.mxu0 %v181
    %v198 = vpop.f32.mrf.mxu0
    %v199 = vadd.f32 %v165, %v198
    %v200 = vpop.f32.mrf.mxu0
    %v201 = vadd.f32 %v165, %v200
    %202 = vmatmul.bf16.gmra.mxu0 %v184
    %v203 = vpop.f32.mrf.mxu0
    %v204 = vadd.f32 %v165, %v203
    %v205 = vpop.f32.mrf.mxu0
    %v206 = vadd.f32 %v165, %v205
    %207 = vmatmul.bf16.gmra.mxu0 %v187
    %v208 = vpop.f32.mrf.mxu0
    %v209 = vadd.f32 %v165, %v208
    %v210 = vpop.f32.mrf.mxu0
    %v211 = vadd.f32 %v165, %v210
    %212 = vdwg.mxu0
    %v213 = vld [vmem:[%s6] sm:$0xf]
    %v214 = vld [vmem:[%s6 + $0x4] sm:$0xf]
    %v215 = vld [vmem:[%s6 + $0x8] sm:$0xf]
    %v216 = vld [vmem:[%s6 + $0xc] sm:$0xf]
    %v217 = vld [vmem:[%s9] sm:$0x1]
    %v219 = vperm.slane %v217, 0
    %v225 = vunpack.c.l.b16 %v213
    %v226 = vunpack.c.l.b16 %v214
    %v227 = vunpack.c.l.b16 %v215
    %v228 = vunpack.c.l.b16 %v216
    %v229 = vpack.c.b16 %v226, %v225
    %v230 = vpack.c.b16 %v228, %v227
    %233 = vmatpush.bf16.msra.mxu0 0
    %234 = vmatpush.bf16.msra.mxu0 0
    %235 = vmatpush.bf16.msra.mxu0 0
    %236 = vmatpush.bf16.msra.mxu0 0
    %237 = vmatpush.bf16.msra.mxu0 0
    %238 = vmatpush.bf16.msra.mxu0 0
    %239 = vmatpush.bf16.msra.mxu0 %v230
    %240 = vmatpush.bf16.msra.mxu0 %v229
    %241 = vmatmul.bf16.gmra.mxu0 %v181
    %v242 = vpop.f32.mrf.mxu0
    %v243 = vadd.f32 %v219, %v242
    %v244 = vpop.f32.mrf.mxu0
    %v245 = vadd.f32 %v219, %v244
    %246 = vmatmul.bf16.gmra.mxu0 %v184
    %v247 = vpop.f32.mrf.mxu0
    %v248 = vadd.f32 %v219, %v247
    %v249 = vpop.f32.mrf.mxu0
    %v250 = vadd.f32 %v219, %v249
    %251 = vmatmul.bf16.gmra.mxu0 %v187
    %v252 = vpop.f32.mrf.mxu0
    %v253 = vadd.f32 %v219, %v252
    %v254 = vpop.f32.mrf.mxu0
    %v255 = vadd.f32 %v219, %v254
    %256 = vdwg.mxu0
    %v257 = vld [vmem:[%s7] sm:$0xf]
    %v258 = vld [vmem:[%s7 + $0x4] sm:$0xf]
    %v259 = vld [vmem:[%s7 + $0x8] sm:$0xf]
    %v260 = vld [vmem:[%s7 + $0xc] sm:$0xf]
    %v261 = vld [vmem:[%s10] sm:$0x1]
    %v263 = vperm.slane %v261, 0
    %v269 = vunpack.c.l.b16 %v257
    %v270 = vunpack.c.l.b16 %v258
    %v271 = vunpack.c.l.b16 %v259
    %v272 = vunpack.c.l.b16 %v260
    %v273 = vpack.c.b16 %v270, %v269
    %v274 = vpack.c.b16 %v272, %v271
    %277 = vmatpush.bf16.msra.mxu0 0
    %278 = vmatpush.bf16.msra.mxu0 0
    %279 = vmatpush.bf16.msra.mxu0 0
    %280 = vmatpush.bf16.msra.mxu0 0
    %281 = vmatpush.bf16.msra.mxu0 0
    %282 = vmatpush.bf16.msra.mxu0 0
    %283 = vmatpush.bf16.msra.mxu0 %v274
    %284 = vmatpush.bf16.msra.mxu0 %v273
    %285 = vmatmul.bf16.gmra.mxu0 %v181
    %v286 = vpop.f32.mrf.mxu0
    %v287 = vadd.f32 %v263, %v286
    %v288 = vpop.f32.mrf.mxu0
    %v289 = vadd.f32 %v263, %v288
    %290 = vmatmul.bf16.gmra.mxu0 %v184
    %v291 = vpop.f32.mrf.mxu0
    %v292 = vadd.f32 %v263, %v291
    %v293 = vpop.f32.mrf.mxu0
    %v294 = vadd.f32 %v263, %v293
    %295 = vmatmul.bf16.gmra.mxu0 %v187
    %v296 = vpop.f32.mrf.mxu0
    %v297 = vadd.f32 %v263, %v296
    %v298 = vpop.f32.mrf.mxu0
    %v299 = vadd.f32 %v263, %v298
    %300 = vdwg.mxu0
    %v301 = vpack.c.bf16 %v201, %v199
    %v302 = vpack.c.bf16 %v206, %v204
    %v303 = vpack.c.bf16 %v211, %v209
    %v304 = vpack.c.bf16 %v245, %v243
    %v305 = vpack.c.bf16 %v250, %v248
    %v306 = vpack.c.bf16 %v255, %v253
    %vm307 = vcmask 64512
    %v309 = vsel %vm307, %v301, 0
    %v312 = vsel %vm307, %v302, 0
    %v315 = vsel %vm307, %v303, 0
    %v318 = vsel %vm307, %v304, 0
    %v321 = vsel %vm307, %v305, 0
    %v324 = vsel %vm307, %v306, 0
    %326 = vmatpush.bf16.xpose.msra.mxu0 0
    %327 = vmatpush.bf16.xpose.msra.mxu0 0
    %328 = vmatpush.bf16.xpose.msra.mxu0 0
    %329 = vmatpush.bf16.xpose.msra.mxu0 0
    %330 = vmatpush.bf16.xpose.msra.mxu0 0
    %331 = vmatpush.bf16.xpose.msra.mxu0 %v324
    %332 = vmatpush.bf16.xpose.msra.mxu0 %v321
    %333 = vmatpush.bf16.xpose.msra.mxu0 %v318
    %334 = vmatmul.bf16.gmra.mxu0 %v309
    %v335 = vpop.f32.mrf.mxu0
    %v336 = vadd.f32 %v108, %v335
    %v337 = vpop.f32.mrf.mxu0
    %v338 = vadd.f32 %v109, %v337
    %339 = vmatmul.bf16.gmra.mxu0 %v312
    %v340 = vpop.f32.mrf.mxu0
    %v341 = vadd.f32 %v110, %v340
    %v342 = vpop.f32.mrf.mxu0
    %v343 = vadd.f32 %v111, %v342
    %344 = vmatmul.bf16.gmra.mxu0 %v315
    %v345 = vpop.f32.mrf.mxu0
    %v346 = vadd.f32 %v112, %v345
    %v347 = vpop.f32.mrf.mxu0
    %v348 = vadd.f32 %v113, %v347
    %349 = vdwg.mxu0
    %vm350 = vcmask 392192
    %v351 = vsel %vm350, %v336, -inf
    %352 = vmax.xlane.f32.xlu0 %v351
    %v353 = vpop.xlane.xlu0 %352
    %v354 = vsel %vm350, %v338, -inf
    %355 = vmax.xlane.f32.xlu0 %v354
    %v356 = vpop.xlane.xlu0 %355
    %v357 = vsel %vm350, %v341, -inf
    %358 = vmax.xlane.f32.xlu0 %v357
    %v359 = vpop.xlane.xlu0 %358
    %v360 = vsel %vm350, %v343, -inf
    %361 = vmax.xlane.f32.xlu0 %v360
    %v362 = vpop.xlane.xlu0 %361
    %v363 = vsel %vm350, %v346, -inf
    %364 = vmax.xlane.f32.xlu0 %v363
    %v365 = vpop.xlane.xlu0 %364
    %v366 = vsel %vm350, %v348, -inf
    %367 = vmax.xlane.f32.xlu0 %v366
    %v368 = vpop.xlane.xlu0 %367
    %v369 = vsub.f32 %v336, %v353
    %v370 = vsub.f32 %v338, %v356
    %v371 = vsub.f32 %v341, %v359
    %v372 = vsub.f32 %v343, %v362
    %v373 = vsub.f32 %v346, %v365
    %v374 = vsub.f32 %v348, %v368
    %v375 = vmul.f32 %v369, 1.442695
    %v376 = vpow.pop %v375
    %v377 = vmul.f32 %v370, 1.442695
    %v378 = vpow.pop %v377
    %v379 = vmul.f32 %v371, 1.442695
    %v380 = vpow.pop %v379
    %v381 = vmul.f32 %v372, 1.442695
    %v382 = vpow.pop %v381
    %v383 = vmul.f32 %v373, 1.442695
    %v384 = vpow.pop %v383
    %v385 = vmul.f32 %v374, 1.442695
    %v386 = vpow.pop %v385
    %v387 = vsel %vm350, %v376, 0.0
    %388 = vadd.xlane.f32.xlu0 %v387
    %v389 = vpop.xlane.xlu0 %388
    %v390 = vsel %vm350, %v378, 0.0
    %391 = vadd.xlane.f32.xlu0 %v390
    %v392 = vpop.xlane.xlu0 %391
    %v393 = vsel %vm350, %v380, 0.0
    %394 = vadd.xlane.f32.xlu0 %v393
    %v395 = vpop.xlane.xlu0 %394
    %v396 = vsel %vm350, %v382, 0.0
    %397 = vadd.xlane.f32.xlu0 %v396
    %v398 = vpop.xlane.xlu0 %397
    %v399 = vsel %vm350, %v384, 0.0
    %400 = vadd.xlane.f32.xlu0 %v399
    %v401 = vpop.xlane.xlu0 %400
    %v402 = vsel %vm350, %v386, 0.0
    %403 = vadd.xlane.f32.xlu0 %v402
    %v404 = vpop.xlane.xlu0 %403
    %v405 = vrcp.pop %v389
    %v406 = vrcp.pop %v392
    %v407 = vrcp.pop %v395
    %v408 = vrcp.pop %v398
    %v409 = vrcp.pop %v401
    %v410 = vrcp.pop %v404
    %v411 = vmul.f32 %v376, %v405
    %v412 = vmul.f32 %v378, %v406
    %v413 = vmul.f32 %v380, %v407
    %v414 = vmul.f32 %v382, %v408
    %v415 = vmul.f32 %v384, %v409
    %v416 = vmul.f32 %v386, %v410
    %v417 = vpack.c.bf16 %v412, %v411
    %v418 = vpack.c.bf16 %v414, %v413
    %v419 = vpack.c.bf16 %v416, %v415
    %v420 = vpack.c.bf16 %v289, %v287
    %v421 = vpack.c.bf16 %v294, %v292
    %v422 = vpack.c.bf16 %v299, %v297
    %v424 = vsel %vm350, %v417, 0
    %v427 = vsel %vm350, %v418, 0
    %v430 = vsel %vm350, %v419, 0
    %432 = vmatpush.bf16.msra.mxu0 0
    %433 = vmatpush.bf16.msra.mxu0 0
    %434 = vmatpush.bf16.msra.mxu0 0
    %435 = vmatpush.bf16.msra.mxu0 0
    %436 = vmatpush.bf16.msra.mxu0 0
    %437 = vmatpush.bf16.msra.mxu0 %v422
    %438 = vmatpush.bf16.msra.mxu0 %v421
    %439 = vmatpush.bf16.msra.mxu0 %v420
    %440 = vmatmul.bf16.gmra.mxu0 %v424
    %v441 = vpop.f32.mrf.mxu0
    %v442 = vadd.f32 0.0, %v441
    %v443 = vpop.f32.mrf.mxu0
    %v444 = vadd.f32 0.0, %v443
    %445 = vmatmul.bf16.gmra.mxu0 %v427
    %v446 = vpop.f32.mrf.mxu0
    %v447 = vadd.f32 0.0, %v446
    %v448 = vpop.f32.mrf.mxu0
    %v449 = vadd.f32 0.0, %v448
    %450 = vmatmul.bf16.gmra.mxu0 %v430
    %v451 = vpop.f32.mrf.mxu0
    %v452 = vadd.f32 0.0, %v451
    %v453 = vpop.f32.mrf.mxu0
    %v454 = vadd.f32 0.0, %v453
    %455 = vdwg.mxu0
    %v456 = vpack.c.bf16 %v444, %v442
    %v457 = vpack.c.bf16 %v449, %v447
    %v458 = vpack.c.bf16 %v454, %v452
    %v459 = vld [vmem:[%s11] sm:$0xf]
    %s460 = scalar_lea.vmem %s5, 16
    %v461 = vld [vmem:[%s460] sm:$0xf]
    %v462 = vld [vmem:[%s460 + $0x4] sm:$0xf]
    %v463 = vld [vmem:[%s460 + $0x8] sm:$0xf]
    %v464 = vld [vmem:[%s460 + $0xc] sm:$0xf]
    %s465 = scalar_lea.vmem %s8, 1
    %v466 = vld [vmem:[%s465] sm:$0x1]
    %v468 = vperm.slane %v466, 0
    %v474 = vunpack.c.l.b16 %v461
    %v475 = vunpack.c.l.b16 %v462
    %v476 = vunpack.c.l.b16 %v463
    %v477 = vunpack.c.l.b16 %v464
    %v478 = vpack.c.b16 %v475, %v474
    %v479 = vpack.c.b16 %v477, %v476
    %482 = vmatpush.bf16.msra.mxu0 0
    %483 = vmatpush.bf16.msra.mxu0 0
    %484 = vmatpush.bf16.msra.mxu0 0
    %485 = vmatpush.bf16.msra.mxu0 0
    %486 = vmatpush.bf16.msra.mxu0 0
    %487 = vmatpush.bf16.msra.mxu0 0
    %488 = vmatpush.bf16.msra.mxu0 %v479
    %489 = vmatpush.bf16.msra.mxu0 %v478
    %490 = vmatmul.bf16.gmra.mxu0 %v181
    %v491 = vpop.f32.mrf.mxu0
    %v492 = vadd.f32 %v468, %v491
    %v493 = vpop.f32.mrf.mxu0
    %v494 = vadd.f32 %v468, %v493
    %495 = vmatmul.bf16.gmra.mxu0 %v184
    %v496 = vpop.f32.mrf.mxu0
    %v497 = vadd.f32 %v468, %v496
    %v498 = vpop.f32.mrf.mxu0
    %v499 = vadd.f32 %v468, %v498
    %500 = vmatmul.bf16.gmra.mxu0 %v187
    %v501 = vpop.f32.mrf.mxu0
    %v502 = vadd.f32 %v468, %v501
    %v503 = vpop.f32.mrf.mxu0
    %v504 = vadd.f32 %v468, %v503
    %505 = vdwg.mxu0
    %s506 = scalar_lea.vmem %s6, 16
    %v507 = vld [vmem:[%s506] sm:$0xf]
    %v508 = vld [vmem:[%s506 + $0x4] sm:$0xf]
    %v509 = vld [vmem:[%s506 + $0x8] sm:$0xf]
    %v510 = vld [vmem:[%s506 + $0xc] sm:$0xf]
    %s511 = scalar_lea.vmem %s9, 1
    %v512 = vld [vmem:[%s511] sm:$0x1]
    %v514 = vperm.slane %v512, 0
    %v520 = vunpack.c.l.b16 %v507
    %v521 = vunpack.c.l.b16 %v508
    %v522 = vunpack.c.l.b16 %v509
    %v523 = vunpack.c.l.b16 %v510
    %v524 = vpack.c.b16 %v521, %v520
    %v525 = vpack.c.b16 %v523, %v522
    %528 = vmatpush.bf16.msra.mxu0 0
    %529 = vmatpush.bf16.msra.mxu0 0
    %530 = vmatpush.bf16.msra.mxu0 0
    %531 = vmatpush.bf16.msra.mxu0 0
    %532 = vmatpush.bf16.msra.mxu0 0
    %533 = vmatpush.bf16.msra.mxu0 0
    %534 = vmatpush.bf16.msra.mxu0 %v525
    %535 = vmatpush.bf16.msra.mxu0 %v524
    %536 = vmatmul.bf16.gmra.mxu0 %v181
    %v537 = vpop.f32.mrf.mxu0
    %v538 = vadd.f32 %v514, %v537
    %v539 = vpop.f32.mrf.mxu0
    %v540 = vadd.f32 %v514, %v539
    %541 = vmatmul.bf16.gmra.mxu0 %v184
    %v542 = vpop.f32.mrf.mxu0
    %v543 = vadd.f32 %v514, %v542
    %v544 = vpop.f32.mrf.mxu0
    %v545 = vadd.f32 %v514, %v544
    %546 = vmatmul.bf16.gmra.mxu0 %v187
    %v547 = vpop.f32.mrf.mxu0
    %v548 = vadd.f32 %v514, %v547
    %v549 = vpop.f32.mrf.mxu0
    %v550 = vadd.f32 %v514, %v549
    %551 = vdwg.mxu0
    %s552 = scalar_lea.vmem %s7, 16
    %v553 = vld [vmem:[%s552] sm:$0xf]
    %v554 = vld [vmem:[%s552 + $0x4] sm:$0xf]
    %v555 = vld [vmem:[%s552 + $0x8] sm:$0xf]
    %v556 = vld [vmem:[%s552 + $0xc] sm:$0xf]
    %s557 = scalar_lea.vmem %s10, 1
    %v558 = vld [vmem:[%s557] sm:$0x1]
    %v560 = vperm.slane %v558, 0
    %v566 = vunpack.c.l.b16 %v553
    %v567 = vunpack.c.l.b16 %v554
    %v568 = vunpack.c.l.b16 %v555
    %v569 = vunpack.c.l.b16 %v556
    %v570 = vpack.c.b16 %v567, %v566
    %v571 = vpack.c.b16 %v569, %v568
    %574 = vmatpush.bf16.msra.mxu0 0
    %575 = vmatpush.bf16.msra.mxu0 0
    %576 = vmatpush.bf16.msra.mxu0 0
    %577 = vmatpush.bf16.msra.mxu0 0
    %578 = vmatpush.bf16.msra.mxu0 0
    %579 = vmatpush.bf16.msra.mxu0 0
    %580 = vmatpush.bf16.msra.mxu0 %v571
    %581 = vmatpush.bf16.msra.mxu0 %v570
    %582 = vmatmul.bf16.gmra.mxu0 %v181
    %v583 = vpop.f32.mrf.mxu0
    %v584 = vadd.f32 %v560, %v583
    %v585 = vpop.f32.mrf.mxu0
    %v586 = vadd.f32 %v560, %v585
    %587 = vmatmul.bf16.gmra.mxu0 %v184
    %v588 = vpop.f32.mrf.mxu0
    %v589 = vadd.f32 %v560, %v588
    %v590 = vpop.f32.mrf.mxu0
    %v591 = vadd.f32 %v560, %v590
    %592 = vmatmul.bf16.gmra.mxu0 %v187
    %v593 = vpop.f32.mrf.mxu0
    %v594 = vadd.f32 %v560, %v593
    %v595 = vpop.f32.mrf.mxu0
    %v596 = vadd.f32 %v560, %v595
    %597 = vdwg.mxu0
    %v598 = vpack.c.bf16 %v494, %v492
    %v599 = vpack.c.bf16 %v499, %v497
    %v600 = vpack.c.bf16 %v504, %v502
    %v601 = vpack.c.bf16 %v540, %v538
    %v602 = vpack.c.bf16 %v545, %v543
    %v603 = vpack.c.bf16 %v550, %v548
    %v605 = vsel %vm307, %v598, 0
    %v608 = vsel %vm307, %v599, 0
    %v611 = vsel %vm307, %v600, 0
    %v614 = vsel %vm307, %v601, 0
    %v617 = vsel %vm307, %v602, 0
    %v620 = vsel %vm307, %v603, 0
    %622 = vmatpush.bf16.xpose.msra.mxu0 0
    %623 = vmatpush.bf16.xpose.msra.mxu0 0
    %624 = vmatpush.bf16.xpose.msra.mxu0 0
    %625 = vmatpush.bf16.xpose.msra.mxu0 0
    %626 = vmatpush.bf16.xpose.msra.mxu0 0
    %627 = vmatpush.bf16.xpose.msra.mxu0 %v620
    %628 = vmatpush.bf16.xpose.msra.mxu0 %v617
    %629 = vmatpush.bf16.xpose.msra.mxu0 %v614
    %630 = vmatmul.bf16.gmra.mxu0 %v605
    %v631 = vpop.f32.mrf.mxu0
    %v632 = vadd.f32 %v108, %v631
    %v633 = vpop.f32.mrf.mxu0
    %v634 = vadd.f32 %v109, %v633
    %635 = vmatmul.bf16.gmra.mxu0 %v608
    %v636 = vpop.f32.mrf.mxu0
    %v637 = vadd.f32 %v110, %v636
    %v638 = vpop.f32.mrf.mxu0
    %v639 = vadd.f32 %v111, %v638
    %640 = vmatmul.bf16.gmra.mxu0 %v611
    %v641 = vpop.f32.mrf.mxu0
    %v642 = vadd.f32 %v112, %v641
    %v643 = vpop.f32.mrf.mxu0
    %v644 = vadd.f32 %v113, %v643
    %645 = vdwg.mxu0
    %v646 = vsel %vm350, %v632, -inf
    %647 = vmax.xlane.f32.xlu0 %v646
    %v648 = vpop.xlane.xlu0 %647
    %v649 = vsel %vm350, %v634, -inf
    %650 = vmax.xlane.f32.xlu0 %v649
    %v651 = vpop.xlane.xlu0 %650
    %v652 = vsel %vm350, %v637, -inf
    %653 = vmax.xlane.f32.xlu0 %v652
    %v654 = vpop.xlane.xlu0 %653
    %v655 = vsel %vm350, %v639, -inf
    %656 = vmax.xlane.f32.xlu0 %v655
    %v657 = vpop.xlane.xlu0 %656
    %v658 = vsel %vm350, %v642, -inf
    %659 = vmax.xlane.f32.xlu0 %v658
    %v660 = vpop.xlane.xlu0 %659
    %v661 = vsel %vm350, %v644, -inf
    %662 = vmax.xlane.f32.xlu0 %v661
    %v663 = vpop.xlane.xlu0 %662
    %v664 = vsub.f32 %v632, %v648
    %v665 = vsub.f32 %v634, %v651
    %v666 = vsub.f32 %v637, %v654
    %v667 = vsub.f32 %v639, %v657
    %v668 = vsub.f32 %v642, %v660
    %v669 = vsub.f32 %v644, %v663
    %v670 = vmul.f32 %v664, 1.442695
    %v671 = vpow.pop %v670
    %v672 = vmul.f32 %v665, 1.442695
    %v673 = vpow.pop %v672
    %v674 = vmul.f32 %v666, 1.442695
    %v675 = vpow.pop %v674
    %v676 = vmul.f32 %v667, 1.442695
    %v677 = vpow.pop %v676
    %v678 = vmul.f32 %v668, 1.442695
    %v679 = vpow.pop %v678
    %v680 = vmul.f32 %v669, 1.442695
    %v681 = vpow.pop %v680
    %v682 = vsel %vm350, %v671, 0.0
    %683 = vadd.xlane.f32.xlu0 %v682
    %v684 = vpop.xlane.xlu0 %683
    %v685 = vsel %vm350, %v673, 0.0
    %686 = vadd.xlane.f32.xlu0 %v685
    %v687 = vpop.xlane.xlu0 %686
    %v688 = vsel %vm350, %v675, 0.0
    %689 = vadd.xlane.f32.xlu0 %v688
    %v690 = vpop.xlane.xlu0 %689
    %v691 = vsel %vm350, %v677, 0.0
    %692 = vadd.xlane.f32.xlu0 %v691
    %v693 = vpop.xlane.xlu0 %692
    %v694 = vsel %vm350, %v679, 0.0
    %695 = vadd.xlane.f32.xlu0 %v694
    %v696 = vpop.xlane.xlu0 %695
    %v697 = vsel %vm350, %v681, 0.0
    %698 = vadd.xlane.f32.xlu0 %v697
    %v699 = vpop.xlane.xlu0 %698
    %v700 = vrcp.pop %v684
    %v701 = vrcp.pop %v687
    %v702 = vrcp.pop %v690
    %v703 = vrcp.pop %v693
    %v704 = vrcp.pop %v696
    %v705 = vrcp.pop %v699
    %v706 = vmul.f32 %v671, %v700
    %v707 = vmul.f32 %v673, %v701
    %v708 = vmul.f32 %v675, %v702
    %v709 = vmul.f32 %v677, %v703
    %v710 = vmul.f32 %v679, %v704
    %v711 = vmul.f32 %v681, %v705
    %v712 = vpack.c.bf16 %v707, %v706
    %v713 = vpack.c.bf16 %v709, %v708
    %v714 = vpack.c.bf16 %v711, %v710
    %v715 = vpack.c.bf16 %v586, %v584
    %v716 = vpack.c.bf16 %v591, %v589
    %v717 = vpack.c.bf16 %v596, %v594
    %v719 = vsel %vm350, %v712, 0
    %v722 = vsel %vm350, %v713, 0
    %v725 = vsel %vm350, %v714, 0
    %727 = vmatpush.bf16.msra.mxu0 0
    %728 = vmatpush.bf16.msra.mxu0 0
    %729 = vmatpush.bf16.msra.mxu0 0
    %730 = vmatpush.bf16.msra.mxu0 0
    %731 = vmatpush.bf16.msra.mxu0 0
    %732 = vmatpush.bf16.msra.mxu0 %v717
    %733 = vmatpush.bf16.msra.mxu0 %v716
    %734 = vmatpush.bf16.msra.mxu0 %v715
    %735 = vmatmul.bf16.gmra.mxu0 %v719
    %v736 = vpop.f32.mrf.mxu0
    %v737 = vadd.f32 0.0, %v736
    %v738 = vpop.f32.mrf.mxu0
    %v739 = vadd.f32 0.0, %v738
    %740 = vmatmul.bf16.gmra.mxu0 %v722
    %v741 = vpop.f32.mrf.mxu0
    %v742 = vadd.f32 0.0, %v741
    %v743 = vpop.f32.mrf.mxu0
    %v744 = vadd.f32 0.0, %v743
    %745 = vmatmul.bf16.gmra.mxu0 %v725
    %v746 = vpop.f32.mrf.mxu0
    %v747 = vadd.f32 0.0, %v746
    %v748 = vpop.f32.mrf.mxu0
    %v749 = vadd.f32 0.0, %v748
    %750 = vdwg.mxu0
    %v751 = vpack.c.bf16 %v739, %v737
    %v752 = vpack.c.bf16 %v744, %v742
    %v753 = vpack.c.bf16 %v749, %v747
    %s754 = scalar_lea.vmem %s11, 4
    %v755 = vld [vmem:[%s754] sm:$0xf]
    %v757 = vsel %vm307, %v751, 0
    %v760 = vsel %vm307, %v752, 0
    %v763 = vsel %vm307, %v753, 0
    %vm765 = vcmask 1043456
    %v767 = vsel %vm765, %v755, 0
    %769 = vmatpush.bf16.msra.mxu0 0
    %770 = vmatpush.bf16.msra.mxu0 0
    %771 = vmatpush.bf16.msra.mxu0 0
    %772 = vmatpush.bf16.msra.mxu0 0
    %773 = vmatpush.bf16.msra.mxu0 0
    %774 = vmatpush.bf16.msra.mxu0 0
    %775 = vmatpush.bf16.msra.mxu0 0
    %776 = vmatpush.bf16.msra.mxu0 %v767
    %777 = vmatmul.bf16.gmra.mxu0 %v757
    %v778 = vpop.f32.mrf.mxu0
    %v779 = vadd.f32 0.0, %v778
    %v780 = vpop.f32.mrf.mxu0
    %v781 = vadd.f32 0.0, %v780
    %782 = vmatmul.bf16.gmra.mxu0 %v760
    %v783 = vpop.f32.mrf.mxu0
    %v784 = vadd.f32 0.0, %v783
    %v785 = vpop.f32.mrf.mxu0
    %v786 = vadd.f32 0.0, %v785
    %787 = vmatmul.bf16.gmra.mxu0 %v763
    %v788 = vpop.f32.mrf.mxu0
    %v789 = vadd.f32 0.0, %v788
    %v790 = vpop.f32.mrf.mxu0
    %v791 = vadd.f32 0.0, %v790
    %792 = vdwg.mxu0
    %v794 = vsel %vm307, %v456, 0
    %v797 = vsel %vm307, %v457, 0
    %v800 = vsel %vm307, %v458, 0
    %v803 = vsel %vm765, %v459, 0
    %805 = vmatpush.bf16.msra.mxu0 0
    %806 = vmatpush.bf16.msra.mxu0 0
    %807 = vmatpush.bf16.msra.mxu0 0
    %808 = vmatpush.bf16.msra.mxu0 0
    %809 = vmatpush.bf16.msra.mxu0 0
    %810 = vmatpush.bf16.msra.mxu0 0
    %811 = vmatpush.bf16.msra.mxu0 0
    %812 = vmatpush.bf16.msra.mxu0 %v803
    %813 = vmatmul.bf16.gmra.mxu0 %v794
    %v814 = vpop.f32.mrf.mxu0
    %v815 = vadd.f32 %v779, %v814
    %v816 = vpop.f32.mrf.mxu0
    %v817 = vadd.f32 %v781, %v816
    %818 = vmatmul.bf16.gmra.mxu0 %v797
    %v819 = vpop.f32.mrf.mxu0
    %v820 = vadd.f32 %v784, %v819
    %v821 = vpop.f32.mrf.mxu0
    %v822 = vadd.f32 %v786, %v821
    %823 = vmatmul.bf16.gmra.mxu0 %v800
    %v824 = vpop.f32.mrf.mxu0
    %v825 = vadd.f32 %v789, %v824
    %v826 = vpop.f32.mrf.mxu0
    %v827 = vadd.f32 %v791, %v826
    %828 = vdwg.mxu0
    %s829 = scalar_lea.vmem %s5, 32
    %v830 = vld [vmem:[%s829] sm:$0xf]
    %v831 = vld [vmem:[%s829 + $0x4] sm:$0xf]
    %v832 = vld [vmem:[%s829 + $0x8] sm:$0xf]
    %v833 = vld [vmem:[%s829 + $0xc] sm:$0xf]
    %s834 = scalar_lea.vmem %s8, 2
    %v835 = vld [vmem:[%s834] sm:$0x1]
    %v837 = vperm.slane %v835, 0
    %v843 = vunpack.c.l.b16 %v830
    %v844 = vunpack.c.l.b16 %v831
    %v845 = vunpack.c.l.b16 %v832
    %v846 = vunpack.c.l.b16 %v833
    %v847 = vpack.c.b16 %v844, %v843
    %v848 = vpack.c.b16 %v846, %v845
    %851 = vmatpush.bf16.msra.mxu0 0
    %852 = vmatpush.bf16.msra.mxu0 0
    %853 = vmatpush.bf16.msra.mxu0 0
    %854 = vmatpush.bf16.msra.mxu0 0
    %855 = vmatpush.bf16.msra.mxu0 0
    %856 = vmatpush.bf16.msra.mxu0 0
    %857 = vmatpush.bf16.msra.mxu0 %v848
    %858 = vmatpush.bf16.msra.mxu0 %v847
    %859 = vmatmul.bf16.gmra.mxu0 %v181
    %v860 = vpop.f32.mrf.mxu0
    %v861 = vadd.f32 %v837, %v860
    %v862 = vpop.f32.mrf.mxu0
    %v863 = vadd.f32 %v837, %v862
    %864 = vmatmul.bf16.gmra.mxu0 %v184
    %v865 = vpop.f32.mrf.mxu0
    %v866 = vadd.f32 %v837, %v865
    %v867 = vpop.f32.mrf.mxu0
    %v868 = vadd.f32 %v837, %v867
    %869 = vmatmul.bf16.gmra.mxu0 %v187
    %v870 = vpop.f32.mrf.mxu0
    %v871 = vadd.f32 %v837, %v870
    %v872 = vpop.f32.mrf.mxu0
    %v873 = vadd.f32 %v837, %v872
    %874 = vdwg.mxu0
    %s875 = scalar_lea.vmem %s6, 32
    %v876 = vld [vmem:[%s875] sm:$0xf]
    %v877 = vld [vmem:[%s875 + $0x4] sm:$0xf]
    %v878 = vld [vmem:[%s875 + $0x8] sm:$0xf]
    %v879 = vld [vmem:[%s875 + $0xc] sm:$0xf]
    %s880 = scalar_lea.vmem %s9, 2
    %v881 = vld [vmem:[%s880] sm:$0x1]
    %v883 = vperm.slane %v881, 0
    %v889 = vunpack.c.l.b16 %v876
    %v890 = vunpack.c.l.b16 %v877
    %v891 = vunpack.c.l.b16 %v878
    %v892 = vunpack.c.l.b16 %v879
    %v893 = vpack.c.b16 %v890, %v889
    %v894 = vpack.c.b16 %v892, %v891
    %897 = vmatpush.bf16.msra.mxu0 0
    %898 = vmatpush.bf16.msra.mxu0 0
    %899 = vmatpush.bf16.msra.mxu0 0
    %900 = vmatpush.bf16.msra.mxu0 0
    %901 = vmatpush.bf16.msra.mxu0 0
    %902 = vmatpush.bf16.msra.mxu0 0
    %903 = vmatpush.bf16.msra.mxu0 %v894
    %904 = vmatpush.bf16.msra.mxu0 %v893
    %905 = vmatmul.bf16.gmra.mxu0 %v181
    %v906 = vpop.f32.mrf.mxu0
    %v907 = vadd.f32 %v883, %v906
    %v908 = vpop.f32.mrf.mxu0
    %v909 = vadd.f32 %v883, %v908
    %910 = vmatmul.bf16.gmra.mxu0 %v184
    %v911 = vpop.f32.mrf.mxu0
    %v912 = vadd.f32 %v883, %v911
    %v913 = vpop.f32.mrf.mxu0
    %v914 = vadd.f32 %v883, %v913
    %915 = vmatmul.bf16.gmra.mxu0 %v187
    %v916 = vpop.f32.mrf.mxu0
    %v917 = vadd.f32 %v883, %v916
    %v918 = vpop.f32.mrf.mxu0
    %v919 = vadd.f32 %v883, %v918
    %920 = vdwg.mxu0
    %s921 = scalar_lea.vmem %s7, 32
    %v922 = vld [vmem:[%s921] sm:$0xf]
    %v923 = vld [vmem:[%s921 + $0x4] sm:$0xf]
    %v924 = vld [vmem:[%s921 + $0x8] sm:$0xf]
    %v925 = vld [vmem:[%s921 + $0xc] sm:$0xf]
    %s926 = scalar_lea.vmem %s10, 2
    %v927 = vld [vmem:[%s926] sm:$0x1]
    %v929 = vperm.slane %v927, 0
    %v935 = vunpack.c.l.b16 %v922
    %v936 = vunpack.c.l.b16 %v923
    %v937 = vunpack.c.l.b16 %v924
    %v938 = vunpack.c.l.b16 %v925
    %v939 = vpack.c.b16 %v936, %v935
    %v940 = vpack.c.b16 %v938, %v937
    %943 = vmatpush.bf16.msra.mxu0 0
    %944 = vmatpush.bf16.msra.mxu0 0
    %945 = vmatpush.bf16.msra.mxu0 0
    %946 = vmatpush.bf16.msra.mxu0 0
    %947 = vmatpush.bf16.msra.mxu0 0
    %948 = vmatpush.bf16.msra.mxu0 0
    %949 = vmatpush.bf16.msra.mxu0 %v940
    %950 = vmatpush.bf16.msra.mxu0 %v939
    %951 = vmatmul.bf16.gmra.mxu0 %v181
    %v952 = vpop.f32.mrf.mxu0
    %v953 = vadd.f32 %v929, %v952
    %v954 = vpop.f32.mrf.mxu0
    %v955 = vadd.f32 %v929, %v954
    %956 = vmatmul.bf16.gmra.mxu0 %v184
    %v957 = vpop.f32.mrf.mxu0
    %v958 = vadd.f32 %v929, %v957
    %v959 = vpop.f32.mrf.mxu0
    %v960 = vadd.f32 %v929, %v959
    %961 = vmatmul.bf16.gmra.mxu0 %v187
    %v962 = vpop.f32.mrf.mxu0
    %v963 = vadd.f32 %v929, %v962
    %v964 = vpop.f32.mrf.mxu0
    %v965 = vadd.f32 %v929, %v964
    %966 = vdwg.mxu0
    %v967 = vpack.c.bf16 %v863, %v861
    %v968 = vpack.c.bf16 %v868, %v866
    %v969 = vpack.c.bf16 %v873, %v871
    %v970 = vpack.c.bf16 %v909, %v907
    %v971 = vpack.c.bf16 %v914, %v912
    %v972 = vpack.c.bf16 %v919, %v917
    %v974 = vsel %vm307, %v967, 0
    %v977 = vsel %vm307, %v968, 0
    %v980 = vsel %vm307, %v969, 0
    %v983 = vsel %vm307, %v970, 0
    %v986 = vsel %vm307, %v971, 0
    %v989 = vsel %vm307, %v972, 0
    %991 = vmatpush.bf16.xpose.msra.mxu0 0
    %992 = vmatpush.bf16.xpose.msra.mxu0 0
    %993 = vmatpush.bf16.xpose.msra.mxu0 0
    %994 = vmatpush.bf16.xpose.msra.mxu0 0
    %995 = vmatpush.bf16.xpose.msra.mxu0 0
    %996 = vmatpush.bf16.xpose.msra.mxu0 %v989
    %997 = vmatpush.bf16.xpose.msra.mxu0 %v986
    %998 = vmatpush.bf16.xpose.msra.mxu0 %v983
    %999 = vmatmul.bf16.gmra.mxu0 %v974
    %v1000 = vpop.f32.mrf.mxu0
    %v1001 = vadd.f32 %v108, %v1000
    %v1002 = vpop.f32.mrf.mxu0
    %v1003 = vadd.f32 %v109, %v1002
    %1004 = vmatmul.bf16.gmra.mxu0 %v977
    %v1005 = vpop.f32.mrf.mxu0
    %v1006 = vadd.f32 %v110, %v1005
    %v1007 = vpop.f32.mrf.mxu0
    %v1008 = vadd.f32 %v111, %v1007
    %1009 = vmatmul.bf16.gmra.mxu0 %v980
    %v1010 = vpop.f32.mrf.mxu0
    %v1011 = vadd.f32 %v112, %v1010
    %v1012 = vpop.f32.mrf.mxu0
    %v1013 = vadd.f32 %v113, %v1012
    %1014 = vdwg.mxu0
    %v1015 = vsel %vm350, %v1001, -inf
    %1016 = vmax.xlane.f32.xlu0 %v1015
    %v1017 = vpop.xlane.xlu0 %1016
    %v1018 = vsel %vm350, %v1003, -inf
    %1019 = vmax.xlane.f32.xlu0 %v1018
    %v1020 = vpop.xlane.xlu0 %1019
    %v1021 = vsel %vm350, %v1006, -inf
    %1022 = vmax.xlane.f32.xlu0 %v1021
    %v1023 = vpop.xlane.xlu0 %1022
    %v1024 = vsel %vm350, %v1008, -inf
    %1025 = vmax.xlane.f32.xlu0 %v1024
    %v1026 = vpop.xlane.xlu0 %1025
    %v1027 = vsel %vm350, %v1011, -inf
    %1028 = vmax.xlane.f32.xlu0 %v1027
    %v1029 = vpop.xlane.xlu0 %1028
    %v1030 = vsel %vm350, %v1013, -inf
    %1031 = vmax.xlane.f32.xlu0 %v1030
    %v1032 = vpop.xlane.xlu0 %1031
    %v1033 = vsub.f32 %v1001, %v1017
    %v1034 = vsub.f32 %v1003, %v1020
    %v1035 = vsub.f32 %v1006, %v1023
    %v1036 = vsub.f32 %v1008, %v1026
    %v1037 = vsub.f32 %v1011, %v1029
    %v1038 = vsub.f32 %v1013, %v1032
    %v1039 = vmul.f32 %v1033, 1.442695
    %v1040 = vpow.pop %v1039
    %v1041 = vmul.f32 %v1034, 1.442695
    %v1042 = vpow.pop %v1041
    %v1043 = vmul.f32 %v1035, 1.442695
    %v1044 = vpow.pop %v1043
    %v1045 = vmul.f32 %v1036, 1.442695
    %v1046 = vpow.pop %v1045
    %v1047 = vmul.f32 %v1037, 1.442695
    %v1048 = vpow.pop %v1047
    %v1049 = vmul.f32 %v1038, 1.442695
    %v1050 = vpow.pop %v1049
    %v1051 = vsel %vm350, %v1040, 0.0
    %1052 = vadd.xlane.f32.xlu0 %v1051
    %v1053 = vpop.xlane.xlu0 %1052
    %v1054 = vsel %vm350, %v1042, 0.0
    %1055 = vadd.xlane.f32.xlu0 %v1054
    %v1056 = vpop.xlane.xlu0 %1055
    %v1057 = vsel %vm350, %v1044, 0.0
    %1058 = vadd.xlane.f32.xlu0 %v1057
    %v1059 = vpop.xlane.xlu0 %1058
    %v1060 = vsel %vm350, %v1046, 0.0
    %1061 = vadd.xlane.f32.xlu0 %v1060
    %v1062 = vpop.xlane.xlu0 %1061
    %v1063 = vsel %vm350, %v1048, 0.0
    %1064 = vadd.xlane.f32.xlu0 %v1063
    %v1065 = vpop.xlane.xlu0 %1064
    %v1066 = vsel %vm350, %v1050, 0.0
    %1067 = vadd.xlane.f32.xlu0 %v1066
    %v1068 = vpop.xlane.xlu0 %1067
    %v1069 = vrcp.pop %v1053
    %v1070 = vrcp.pop %v1056
    %v1071 = vrcp.pop %v1059
    %v1072 = vrcp.pop %v1062
    %v1073 = vrcp.pop %v1065
    %v1074 = vrcp.pop %v1068
    %v1075 = vmul.f32 %v1040, %v1069
    %v1076 = vmul.f32 %v1042, %v1070
    %v1077 = vmul.f32 %v1044, %v1071
    %v1078 = vmul.f32 %v1046, %v1072
    %v1079 = vmul.f32 %v1048, %v1073
    %v1080 = vmul.f32 %v1050, %v1074
    %v1081 = vpack.c.bf16 %v1076, %v1075
    %v1082 = vpack.c.bf16 %v1078, %v1077
    %v1083 = vpack.c.bf16 %v1080, %v1079
    %v1084 = vpack.c.bf16 %v955, %v953
    %v1085 = vpack.c.bf16 %v960, %v958
    %v1086 = vpack.c.bf16 %v965, %v963
    %v1088 = vsel %vm350, %v1081, 0
    %v1091 = vsel %vm350, %v1082, 0
    %v1094 = vsel %vm350, %v1083, 0
    %1096 = vmatpush.bf16.msra.mxu0 0
    %1097 = vmatpush.bf16.msra.mxu0 0
    %1098 = vmatpush.bf16.msra.mxu0 0
    %1099 = vmatpush.bf16.msra.mxu0 0
    %1100 = vmatpush.bf16.msra.mxu0 0
    %1101 = vmatpush.bf16.msra.mxu0 %v1086
    %1102 = vmatpush.bf16.msra.mxu0 %v1085
    %1103 = vmatpush.bf16.msra.mxu0 %v1084
    %1104 = vmatmul.bf16.gmra.mxu0 %v1088
    %v1105 = vpop.f32.mrf.mxu0
    %v1106 = vadd.f32 0.0, %v1105
    %v1107 = vpop.f32.mrf.mxu0
    %v1108 = vadd.f32 0.0, %v1107
    %1109 = vmatmul.bf16.gmra.mxu0 %v1091
    %v1110 = vpop.f32.mrf.mxu0
    %v1111 = vadd.f32 0.0, %v1110
    %v1112 = vpop.f32.mrf.mxu0
    %v1113 = vadd.f32 0.0, %v1112
    %1114 = vmatmul.bf16.gmra.mxu0 %v1094
    %v1115 = vpop.f32.mrf.mxu0
    %v1116 = vadd.f32 0.0, %v1115
    %v1117 = vpop.f32.mrf.mxu0
    %v1118 = vadd.f32 0.0, %v1117
    %1119 = vdwg.mxu0
    %v1120 = vpack.c.bf16 %v1108, %v1106
    %v1121 = vpack.c.bf16 %v1113, %v1111
    %v1122 = vpack.c.bf16 %v1118, %v1116
    %s1123 = scalar_lea.vmem %s11, 8
    %v1124 = vld [vmem:[%s1123] sm:$0xf]
    %v1126 = vsel %vm307, %v1120, 0
    %v1129 = vsel %vm307, %v1121, 0
    %v1132 = vsel %vm307, %v1122, 0
    %v1135 = vsel %vm765, %v1124, 0
    %1137 = vmatpush.bf16.msra.mxu0 0
    %1138 = vmatpush.bf16.msra.mxu0 0
    %1139 = vmatpush.bf16.msra.mxu0 0
    %1140 = vmatpush.bf16.msra.mxu0 0
    %1141 = vmatpush.bf16.msra.mxu0 0
    %1142 = vmatpush.bf16.msra.mxu0 0
    %1143 = vmatpush.bf16.msra.mxu0 0
    %1144 = vmatpush.bf16.msra.mxu0 %v1135
    %1145 = vmatmul.bf16.gmra.mxu0 %v1126
    %v1146 = vpop.f32.mrf.mxu0
    %v1147 = vadd.f32 0.0, %v1146
    %v1148 = vpop.f32.mrf.mxu0
    %v1149 = vadd.f32 0.0, %v1148
    %1150 = vmatmul.bf16.gmra.mxu0 %v1129
    %v1151 = vpop.f32.mrf.mxu0
    %v1152 = vadd.f32 0.0, %v1151
    %v1153 = vpop.f32.mrf.mxu0
    %v1154 = vadd.f32 0.0, %v1153
    %1155 = vmatmul.bf16.gmra.mxu0 %v1132
    %v1156 = vpop.f32.mrf.mxu0
    %v1157 = vadd.f32 0.0, %v1156
    %v1158 = vpop.f32.mrf.mxu0
    %v1159 = vadd.f32 0.0, %v1158
    %1160 = vdwg.mxu0
    %v1161 = vadd.f32 %v815, %v1147
    %v1162 = vadd.f32 %v817, %v1149
    %v1163 = vadd.f32 %v820, %v1152
    %v1164 = vadd.f32 %v822, %v1154
    %v1165 = vadd.f32 %v825, %v1157
    %v1166 = vadd.f32 %v827, %v1159
    %s1167 = scalar_lea.vmem %s5, 48
    %v1168 = vld [vmem:[%s1167] sm:$0xf]
    %v1169 = vld [vmem:[%s1167 + $0x4] sm:$0xf]
    %v1170 = vld [vmem:[%s1167 + $0x8] sm:$0xf]
    %v1171 = vld [vmem:[%s1167 + $0xc] sm:$0xf]
    %s1172 = scalar_lea.vmem %s8, 3
    %v1173 = vld [vmem:[%s1172] sm:$0x1]
    %v1175 = vperm.slane %v1173, 0
    %v1181 = vunpack.c.l.b16 %v1168
    %v1182 = vunpack.c.l.b16 %v1169
    %v1183 = vunpack.c.l.b16 %v1170
    %v1184 = vunpack.c.l.b16 %v1171
    %v1185 = vpack.c.b16 %v1182, %v1181
    %v1186 = vpack.c.b16 %v1184, %v1183
    %1189 = vmatpush.bf16.msra.mxu0 0
    %1190 = vmatpush.bf16.msra.mxu0 0
    %1191 = vmatpush.bf16.msra.mxu0 0
    %1192 = vmatpush.bf16.msra.mxu0 0
    %1193 = vmatpush.bf16.msra.mxu0 0
    %1194 = vmatpush.bf16.msra.mxu0 0
    %1195 = vmatpush.bf16.msra.mxu0 %v1186
    %1196 = vmatpush.bf16.msra.mxu0 %v1185
    %1197 = vmatmul.bf16.gmra.mxu0 %v181
    %v1198 = vpop.f32.mrf.mxu0
    %v1199 = vadd.f32 %v1175, %v1198
    %v1200 = vpop.f32.mrf.mxu0
    %v1201 = vadd.f32 %v1175, %v1200
    %1202 = vmatmul.bf16.gmra.mxu0 %v184
    %v1203 = vpop.f32.mrf.mxu0
    %v1204 = vadd.f32 %v1175, %v1203
    %v1205 = vpop.f32.mrf.mxu0
    %v1206 = vadd.f32 %v1175, %v1205
    %1207 = vmatmul.bf16.gmra.mxu0 %v187
    %v1208 = vpop.f32.mrf.mxu0
    %v1209 = vadd.f32 %v1175, %v1208
    %v1210 = vpop.f32.mrf.mxu0
    %v1211 = vadd.f32 %v1175, %v1210
    %1212 = vdwg.mxu0
    %s1213 = scalar_lea.vmem %s6, 48
    %v1214 = vld [vmem:[%s1213] sm:$0xf]
    %v1215 = vld [vmem:[%s1213 + $0x4] sm:$0xf]
    %v1216 = vld [vmem:[%s1213 + $0x8] sm:$0xf]
    %v1217 = vld [vmem:[%s1213 + $0xc] sm:$0xf]
    %s1218 = scalar_lea.vmem %s9, 3
    %v1219 = vld [vmem:[%s1218] sm:$0x1]
    %v1221 = vperm.slane %v1219, 0
    %v1227 = vunpack.c.l.b16 %v1214
    %v1228 = vunpack.c.l.b16 %v1215
    %v1229 = vunpack.c.l.b16 %v1216
    %v1230 = vunpack.c.l.b16 %v1217
    %v1231 = vpack.c.b16 %v1228, %v1227
    %v1232 = vpack.c.b16 %v1230, %v1229
    %1235 = vmatpush.bf16.msra.mxu0 0
    %1236 = vmatpush.bf16.msra.mxu0 0
    %1237 = vmatpush.bf16.msra.mxu0 0
    %1238 = vmatpush.bf16.msra.mxu0 0
    %1239 = vmatpush.bf16.msra.mxu0 0
    %1240 = vmatpush.bf16.msra.mxu0 0
    %1241 = vmatpush.bf16.msra.mxu0 %v1232
    %1242 = vmatpush.bf16.msra.mxu0 %v1231
    %1243 = vmatmul.bf16.gmra.mxu0 %v181
    %v1244 = vpop.f32.mrf.mxu0
    %v1245 = vadd.f32 %v1221, %v1244
    %v1246 = vpop.f32.mrf.mxu0
    %v1247 = vadd.f32 %v1221, %v1246
    %1248 = vmatmul.bf16.gmra.mxu0 %v184
    %v1249 = vpop.f32.mrf.mxu0
    %v1250 = vadd.f32 %v1221, %v1249
    %v1251 = vpop.f32.mrf.mxu0
    %v1252 = vadd.f32 %v1221, %v1251
    %1253 = vmatmul.bf16.gmra.mxu0 %v187
    %v1254 = vpop.f32.mrf.mxu0
    %v1255 = vadd.f32 %v1221, %v1254
    %v1256 = vpop.f32.mrf.mxu0
    %v1257 = vadd.f32 %v1221, %v1256
    %1258 = vdwg.mxu0
    %s1259 = scalar_lea.vmem %s7, 48
    %v1260 = vld [vmem:[%s1259] sm:$0xf]
    %v1261 = vld [vmem:[%s1259 + $0x4] sm:$0xf]
    %v1262 = vld [vmem:[%s1259 + $0x8] sm:$0xf]
    %v1263 = vld [vmem:[%s1259 + $0xc] sm:$0xf]
    %s1264 = scalar_lea.vmem %s10, 3
    %v1265 = vld [vmem:[%s1264] sm:$0x1]
    %v1267 = vperm.slane %v1265, 0
    %v1273 = vunpack.c.l.b16 %v1260
    %v1274 = vunpack.c.l.b16 %v1261
    %v1275 = vunpack.c.l.b16 %v1262
    %v1276 = vunpack.c.l.b16 %v1263
    %v1277 = vpack.c.b16 %v1274, %v1273
    %v1278 = vpack.c.b16 %v1276, %v1275
    %1281 = vmatpush.bf16.msra.mxu0 0
    %1282 = vmatpush.bf16.msra.mxu0 0
    %1283 = vmatpush.bf16.msra.mxu0 0
    %1284 = vmatpush.bf16.msra.mxu0 0
    %1285 = vmatpush.bf16.msra.mxu0 0
    %1286 = vmatpush.bf16.msra.mxu0 0
    %1287 = vmatpush.bf16.msra.mxu0 %v1278
    %1288 = vmatpush.bf16.msra.mxu0 %v1277
    %1289 = vmatmul.bf16.gmra.mxu0 %v181
    %v1290 = vpop.f32.mrf.mxu0
    %v1291 = vadd.f32 %v1267, %v1290
    %v1292 = vpop.f32.mrf.mxu0
    %v1293 = vadd.f32 %v1267, %v1292
    %1294 = vmatmul.bf16.gmra.mxu0 %v184
    %v1295 = vpop.f32.mrf.mxu0
    %v1296 = vadd.f32 %v1267, %v1295
    %v1297 = vpop.f32.mrf.mxu0
    %v1298 = vadd.f32 %v1267, %v1297
    %1299 = vmatmul.bf16.gmra.mxu0 %v187
    %v1300 = vpop.f32.mrf.mxu0
    %v1301 = vadd.f32 %v1267, %v1300
    %v1302 = vpop.f32.mrf.mxu0
    %v1303 = vadd.f32 %v1267, %v1302
    %1304 = vdwg.mxu0
    %v1305 = vpack.c.bf16 %v1201, %v1199
    %v1306 = vpack.c.bf16 %v1206, %v1204
    %v1307 = vpack.c.bf16 %v1211, %v1209
    %v1308 = vpack.c.bf16 %v1247, %v1245
    %v1309 = vpack.c.bf16 %v1252, %v1250
    %v1310 = vpack.c.bf16 %v1257, %v1255
    %v1312 = vsel %vm307, %v1305, 0
    %v1315 = vsel %vm307, %v1306, 0
    %v1318 = vsel %vm307, %v1307, 0
    %v1321 = vsel %vm307, %v1308, 0
    %v1324 = vsel %vm307, %v1309, 0
    %v1327 = vsel %vm307, %v1310, 0
    %1329 = vmatpush.bf16.xpose.msra.mxu0 0
    %1330 = vmatpush.bf16.xpose.msra.mxu0 0
    %1331 = vmatpush.bf16.xpose.msra.mxu0 0
    %1332 = vmatpush.bf16.xpose.msra.mxu0 0
    %1333 = vmatpush.bf16.xpose.msra.mxu0 0
    %1334 = vmatpush.bf16.xpose.msra.mxu0 %v1327
    %1335 = vmatpush.bf16.xpose.msra.mxu0 %v1324
    %1336 = vmatpush.bf16.xpose.msra.mxu0 %v1321
    %1337 = vmatmul.bf16.gmra.mxu0 %v1312
    %v1338 = vpop.f32.mrf.mxu0
    %v1339 = vadd.f32 %v108, %v1338
    %v1340 = vpop.f32.mrf.mxu0
    %v1341 = vadd.f32 %v109, %v1340
    %1342 = vmatmul.bf16.gmra.mxu0 %v1315
    %v1343 = vpop.f32.mrf.mxu0
    %v1344 = vadd.f32 %v110, %v1343
    %v1345 = vpop.f32.mrf.mxu0
    %v1346 = vadd.f32 %v111, %v1345
    %1347 = vmatmul.bf16.gmra.mxu0 %v1318
    %v1348 = vpop.f32.mrf.mxu0
    %v1349 = vadd.f32 %v112, %v1348
    %v1350 = vpop.f32.mrf.mxu0
    %v1351 = vadd.f32 %v113, %v1350
    %1352 = vdwg.mxu0
    %v1353 = vsel %vm350, %v1339, -inf
    %1354 = vmax.xlane.f32.xlu0 %v1353
    %v1355 = vpop.xlane.xlu0 %1354
    %v1356 = vsel %vm350, %v1341, -inf
    %1357 = vmax.xlane.f32.xlu0 %v1356
    %v1358 = vpop.xlane.xlu0 %1357
    %v1359 = vsel %vm350, %v1344, -inf
    %1360 = vmax.xlane.f32.xlu0 %v1359
    %v1361 = vpop.xlane.xlu0 %1360
    %v1362 = vsel %vm350, %v1346, -inf
    %1363 = vmax.xlane.f32.xlu0 %v1362
    %v1364 = vpop.xlane.xlu0 %1363
    %v1365 = vsel %vm350, %v1349, -inf
    %1366 = vmax.xlane.f32.xlu0 %v1365
    %v1367 = vpop.xlane.xlu0 %1366
    %v1368 = vsel %vm350, %v1351, -inf
    %1369 = vmax.xlane.f32.xlu0 %v1368
    %v1370 = vpop.xlane.xlu0 %1369
    %v1371 = vsub.f32 %v1339, %v1355
    %v1372 = vsub.f32 %v1341, %v1358
    %v1373 = vsub.f32 %v1344, %v1361
    %v1374 = vsub.f32 %v1346, %v1364
    %v1375 = vsub.f32 %v1349, %v1367
    %v1376 = vsub.f32 %v1351, %v1370
    %v1377 = vmul.f32 %v1371, 1.442695
    %v1378 = vpow.pop %v1377
    %v1379 = vmul.f32 %v1372, 1.442695
    %v1380 = vpow.pop %v1379
    %v1381 = vmul.f32 %v1373, 1.442695
    %v1382 = vpow.pop %v1381
    %v1383 = vmul.f32 %v1374, 1.442695
    %v1384 = vpow.pop %v1383
    %v1385 = vmul.f32 %v1375, 1.442695
    %v1386 = vpow.pop %v1385
    %v1387 = vmul.f32 %v1376, 1.442695
    %v1388 = vpow.pop %v1387
    %v1389 = vsel %vm350, %v1378, 0.0
    %1390 = vadd.xlane.f32.xlu0 %v1389
    %v1391 = vpop.xlane.xlu0 %1390
    %v1392 = vsel %vm350, %v1380, 0.0
    %1393 = vadd.xlane.f32.xlu0 %v1392
    %v1394 = vpop.xlane.xlu0 %1393
    %v1395 = vsel %vm350, %v1382, 0.0
    %1396 = vadd.xlane.f32.xlu0 %v1395
    %v1397 = vpop.xlane.xlu0 %1396
    %v1398 = vsel %vm350, %v1384, 0.0
    %1399 = vadd.xlane.f32.xlu0 %v1398
    %v1400 = vpop.xlane.xlu0 %1399
    %v1401 = vsel %vm350, %v1386, 0.0
    %1402 = vadd.xlane.f32.xlu0 %v1401
    %v1403 = vpop.xlane.xlu0 %1402
    %v1404 = vsel %vm350, %v1388, 0.0
    %1405 = vadd.xlane.f32.xlu0 %v1404
    %v1406 = vpop.xlane.xlu0 %1405
    %v1407 = vrcp.pop %v1391
    %v1408 = vrcp.pop %v1394
    %v1409 = vrcp.pop %v1397
    %v1410 = vrcp.pop %v1400
    %v1411 = vrcp.pop %v1403
    %v1412 = vrcp.pop %v1406
    %v1413 = vmul.f32 %v1378, %v1407
    %v1414 = vmul.f32 %v1380, %v1408
    %v1415 = vmul.f32 %v1382, %v1409
    %v1416 = vmul.f32 %v1384, %v1410
    %v1417 = vmul.f32 %v1386, %v1411
    %v1418 = vmul.f32 %v1388, %v1412
    %v1419 = vpack.c.bf16 %v1414, %v1413
    %v1420 = vpack.c.bf16 %v1416, %v1415
    %v1421 = vpack.c.bf16 %v1418, %v1417
    %v1422 = vpack.c.bf16 %v1293, %v1291
    %v1423 = vpack.c.bf16 %v1298, %v1296
    %v1424 = vpack.c.bf16 %v1303, %v1301
    %v1426 = vsel %vm350, %v1419, 0
    %v1429 = vsel %vm350, %v1420, 0
    %v1432 = vsel %vm350, %v1421, 0
    %1434 = vmatpush.bf16.msra.mxu0 0
    %1435 = vmatpush.bf16.msra.mxu0 0
    %1436 = vmatpush.bf16.msra.mxu0 0
    %1437 = vmatpush.bf16.msra.mxu0 0
    %1438 = vmatpush.bf16.msra.mxu0 0
    %1439 = vmatpush.bf16.msra.mxu0 %v1424
    %1440 = vmatpush.bf16.msra.mxu0 %v1423
    %1441 = vmatpush.bf16.msra.mxu0 %v1422
    %1442 = vmatmul.bf16.gmra.mxu0 %v1426
    %v1443 = vpop.f32.mrf.mxu0
    %v1444 = vadd.f32 0.0, %v1443
    %v1445 = vpop.f32.mrf.mxu0
    %v1446 = vadd.f32 0.0, %v1445
    %1447 = vmatmul.bf16.gmra.mxu0 %v1429
    %v1448 = vpop.f32.mrf.mxu0
    %v1449 = vadd.f32 0.0, %v1448
    %v1450 = vpop.f32.mrf.mxu0
    %v1451 = vadd.f32 0.0, %v1450
    %1452 = vmatmul.bf16.gmra.mxu0 %v1432
    %v1453 = vpop.f32.mrf.mxu0
    %v1454 = vadd.f32 0.0, %v1453
    %v1455 = vpop.f32.mrf.mxu0
    %v1456 = vadd.f32 0.0, %v1455
    %1457 = vdwg.mxu0
    %v1458 = vpack.c.bf16 %v1446, %v1444
    %v1459 = vpack.c.bf16 %v1451, %v1449
    %v1460 = vpack.c.bf16 %v1456, %v1454
    %s1461 = scalar_lea.vmem %s11, 12
    %v1462 = vld [vmem:[%s1461] sm:$0xf]
    %v1464 = vsel %vm307, %v1458, 0
    %v1467 = vsel %vm307, %v1459, 0
    %v1470 = vsel %vm307, %v1460, 0
    %v1473 = vsel %vm765, %v1462, 0
    %1475 = vmatpush.bf16.msra.mxu0 0
    %1476 = vmatpush.bf16.msra.mxu0 0
    %1477 = vmatpush.bf16.msra.mxu0 0
    %1478 = vmatpush.bf16.msra.mxu0 0
    %1479 = vmatpush.bf16.msra.mxu0 0
    %1480 = vmatpush.bf16.msra.mxu0 0
    %1481 = vmatpush.bf16.msra.mxu0 0
    %1482 = vmatpush.bf16.msra.mxu0 %v1473
    %1483 = vmatmul.bf16.gmra.mxu0 %v1464
    %v1484 = vpop.f32.mrf.mxu0
    %v1485 = vadd.f32 0.0, %v1484
    %v1486 = vpop.f32.mrf.mxu0
    %v1487 = vadd.f32 0.0, %v1486
    %1488 = vmatmul.bf16.gmra.mxu0 %v1467
    %v1489 = vpop.f32.mrf.mxu0
    %v1490 = vadd.f32 0.0, %v1489
    %v1491 = vpop.f32.mrf.mxu0
    %v1492 = vadd.f32 0.0, %v1491
    %1493 = vmatmul.bf16.gmra.mxu0 %v1470
    %v1494 = vpop.f32.mrf.mxu0
    %v1495 = vadd.f32 0.0, %v1494
    %v1496 = vpop.f32.mrf.mxu0
    %v1497 = vadd.f32 0.0, %v1496
    %1498 = vdwg.mxu0
    %v1499 = vadd.f32 %v1161, %v1485
    %v1500 = vadd.f32 %v1162, %v1487
    %v1501 = vadd.f32 %v1163, %v1490
    %v1502 = vadd.f32 %v1164, %v1492
    %v1503 = vadd.f32 %v1165, %v1495
    %v1504 = vadd.f32 %v1166, %v1497
    %v1505 = vld [vmem:[%s12] sm:$0x1]
    %v1507 = vperm.slane %v1505, 0
    %v1509 = vadd.f32 %v1499, %v1507
    %v1510 = vadd.f32 %v1500, %v1507
    %v1511 = vadd.f32 %v1501, %v1507
    %v1512 = vadd.f32 %v1502, %v1507
    %v1513 = vadd.f32 %v1503, %v1507
    %v1514 = vadd.f32 %v1504, %v1507
    %v1515 = vadd.f32 %v70, %v1509
    %v1516 = vadd.f32 %v71, %v1510
    %v1517 = vadd.f32 %v72, %v1511
    %v1518 = vadd.f32 %v73, %v1512
    %v1519 = vadd.f32 %v74, %v1513
    %v1520 = vadd.f32 %v75, %v1514
    %v1521 = vsel %vm179, %v1515, 0.0
    %1522 = vadd.xlane.f32.xlu0 %v1521
    %v1523 = vpop.xlane.xlu0 %1522
    %v1524 = vsel %vm179, %v1516, 0.0
    %1525 = vadd.xlane.f32.xlu0 %v1524
    %v1526 = vpop.xlane.xlu0 %1525
    %v1527 = vsel %vm179, %v1517, 0.0
    %1528 = vadd.xlane.f32.xlu0 %v1527
    %v1529 = vpop.xlane.xlu0 %1528
    %v1530 = vsel %vm179, %v1518, 0.0
    %1531 = vadd.xlane.f32.xlu0 %v1530
    %v1532 = vpop.xlane.xlu0 %1531
    %v1533 = vsel %vm179, %v1519, 0.0
    %1534 = vadd.xlane.f32.xlu0 %v1533
    %v1535 = vpop.xlane.xlu0 %1534
    %v1536 = vsel %vm179, %v1520, 0.0
    %1537 = vadd.xlane.f32.xlu0 %v1536
    %v1538 = vpop.xlane.xlu0 %1537
    %v1539 = vrcp.pop 32.0
    %v1540 = vmul.f32 32.0, %v1539
    %v1541 = vsub.f32 1.0, %v1540
    %v1542 = vmul.f32 %v1539, %v1541
    %v1543 = vadd.f32 %v1539, %v1542
    %vm1544 = vweird.f32 %v1539
    %v1545 = vsel %vm1544, %v1539, %v1543
    %v1546 = vmul.f32 %v1523, %v1545
    %v1547 = vmul.f32 %v1526, %v1545
    %v1548 = vmul.f32 %v1529, %v1545
    %v1549 = vmul.f32 %v1532, %v1545
    %v1550 = vmul.f32 %v1535, %v1545
    %v1551 = vmul.f32 %v1538, %v1545
    %v1552 = vsub.f32 %v1515, %v1546
    %v1553 = vsub.f32 %v1516, %v1547
    %v1554 = vsub.f32 %v1517, %v1548
    %v1555 = vsub.f32 %v1518, %v1549
    %v1556 = vsub.f32 %v1519, %v1550
    %v1557 = vsub.f32 %v1520, %v1551
    %v1558 = vmul.f32 %v1552, %v1552
    %v1559 = vmul.f32 %v1553, %v1553
    %v1560 = vmul.f32 %v1554, %v1554
    %v1561 = vmul.f32 %v1555, %v1555
    %v1562 = vmul.f32 %v1556, %v1556
    %v1563 = vmul.f32 %v1557, %v1557
    %v1564 = vsel %vm179, %v1558, 0.0
    %1565 = vadd.xlane.f32.xlu0 %v1564
    %v1566 = vpop.xlane.xlu0 %1565
    %v1567 = vsel %vm179, %v1559, 0.0
    %1568 = vadd.xlane.f32.xlu0 %v1567
    %v1569 = vpop.xlane.xlu0 %1568
    %v1570 = vsel %vm179, %v1560, 0.0
    %1571 = vadd.xlane.f32.xlu0 %v1570
    %v1572 = vpop.xlane.xlu0 %1571
    %v1573 = vsel %vm179, %v1561, 0.0
    %1574 = vadd.xlane.f32.xlu0 %v1573
    %v1575 = vpop.xlane.xlu0 %1574
    %v1576 = vsel %vm179, %v1562, 0.0
    %1577 = vadd.xlane.f32.xlu0 %v1576
    %v1578 = vpop.xlane.xlu0 %1577
    %v1579 = vsel %vm179, %v1563, 0.0
    %1580 = vadd.xlane.f32.xlu0 %v1579
    %v1581 = vpop.xlane.xlu0 %1580
    %v1582 = vmul.f32 %v1566, %v1545
    %v1583 = vmul.f32 %v1569, %v1545
    %v1584 = vmul.f32 %v1572, %v1545
    %v1585 = vmul.f32 %v1575, %v1545
    %v1586 = vmul.f32 %v1578, %v1545
    %v1587 = vmul.f32 %v1581, %v1545
    %v1588 = vadd.f32 %v1582, 1e-05
    %v1589 = vadd.f32 %v1583, 1e-05
    %v1590 = vadd.f32 %v1584, 1e-05
    %v1591 = vadd.f32 %v1585, 1e-05
    %v1592 = vadd.f32 %v1586, 1e-05
    %v1593 = vadd.f32 %v1587, 1e-05
    %v1594 = vrsqrt.pop %v1588
    %v1595 = vmul.f32 %v1594, %v1588
    %v1596 = vmul.f32 %v1595, %v1594
    %v1597 = vmul.f32 0.5, %v1596
    %v1598 = vsub.f32 1.5, %v1597
    %v1599 = vmul.f32 %v1594, %v1598
    %vm1600 = vweird.f32 %v1588
    %vm1601 = vweird.f32 %v1594
    %vm1602 = vmor %vm1600, %vm1601
    %v1603 = vsel %vm1602, %v1594, %v1599
    %v1604 = vrsqrt.pop %v1589
    %v1605 = vmul.f32 %v1604, %v1589
    %v1606 = vmul.f32 %v1605, %v1604
    %v1607 = vmul.f32 0.5, %v1606
    %v1608 = vsub.f32 1.5, %v1607
    %v1609 = vmul.f32 %v1604, %v1608
    %vm1610 = vweird.f32 %v1589
    %vm1611 = vweird.f32 %v1604
    %vm1612 = vmor %vm1610, %vm1611
    %v1613 = vsel %vm1612, %v1604, %v1609
    %v1614 = vrsqrt.pop %v1590
    %v1615 = vmul.f32 %v1614, %v1590
    %v1616 = vmul.f32 %v1615, %v1614
    %v1617 = vmul.f32 0.5, %v1616
    %v1618 = vsub.f32 1.5, %v1617
    %v1619 = vmul.f32 %v1614, %v1618
    %vm1620 = vweird.f32 %v1590
    %vm1621 = vweird.f32 %v1614
    %vm1622 = vmor %vm1620, %vm1621
    %v1623 = vsel %vm1622, %v1614, %v1619
    %v1624 = vrsqrt.pop %v1591
    %v1625 = vmul.f32 %v1624, %v1591
    %v1626 = vmul.f32 %v1625, %v1624
    %v1627 = vmul.f32 0.5, %v1626
    %v1628 = vsub.f32 1.5, %v1627
    %v1629 = vmul.f32 %v1624, %v1628
    %vm1630 = vweird.f32 %v1591
    %vm1631 = vweird.f32 %v1624
    %vm1632 = vmor %vm1630, %vm1631
    %v1633 = vsel %vm1632, %v1624, %v1629
    %v1634 = vrsqrt.pop %v1592
    %v1635 = vmul.f32 %v1634, %v1592
    %v1636 = vmul.f32 %v1635, %v1634
    %v1637 = vmul.f32 0.5, %v1636
    %v1638 = vsub.f32 1.5, %v1637
    %v1639 = vmul.f32 %v1634, %v1638
    %vm1640 = vweird.f32 %v1592
    %vm1641 = vweird.f32 %v1634
    %vm1642 = vmor %vm1640, %vm1641
    %v1643 = vsel %vm1642, %v1634, %v1639
    %v1644 = vrsqrt.pop %v1593
    %v1645 = vmul.f32 %v1644, %v1593
    %v1646 = vmul.f32 %v1645, %v1644
    %v1647 = vmul.f32 0.5, %v1646
    %v1648 = vsub.f32 1.5, %v1647
    %v1649 = vmul.f32 %v1644, %v1648
    %vm1650 = vweird.f32 %v1593
    %vm1651 = vweird.f32 %v1644
    %vm1652 = vmor %vm1650, %vm1651
    %v1653 = vsel %vm1652, %v1644, %v1649
    %v1654 = vmul.f32 %v1552, %v1603
    %v1655 = vmul.f32 %v1553, %v1613
    %v1656 = vmul.f32 %v1554, %v1623
    %v1657 = vmul.f32 %v1555, %v1633
    %v1658 = vmul.f32 %v1556, %v1643
    %v1659 = vmul.f32 %v1557, %v1653
    %v1661 = vperm.slane %v152, 0
    %v1663 = vmul.f32 %v1654, %v1661
    %v1664 = vmul.f32 %v1655, %v1661
    %v1665 = vmul.f32 %v1656, %v1661
    %v1666 = vmul.f32 %v1657, %v1661
    %v1667 = vmul.f32 %v1658, %v1661
    %v1668 = vmul.f32 %v1659, %v1661
    %v1670 = vperm.slane %v153, 0
    %v1672 = vadd.f32 %v1663, %v1670
    %v1673 = vadd.f32 %v1664, %v1670
    %v1674 = vadd.f32 %v1665, %v1670
    %v1675 = vadd.f32 %v1666, %v1670
    %v1676 = vadd.f32 %v1667, %v1670
    %v1677 = vadd.f32 %v1668, %v1670
    %v1678 = vpack.c.bf16 %v1673, %v1672
    %v1679 = vpack.c.bf16 %v1675, %v1674
    %v1680 = vpack.c.bf16 %v1677, %v1676
    %v1681 = vld [vmem:[%s13] sm:$0xf]
    %v1682 = vld [vmem:[%s13 + $0x4] sm:$0xf]
    %v1683 = vld [vmem:[%s13 + $0x8] sm:$0xf]
    %v1684 = vld [vmem:[%s13 + $0xc] sm:$0xf]
    %v1685 = vld [vmem:[%s14] sm:$0x1]
    %v1687 = vperm.slane %v1685, 0
    %v1693 = vunpack.c.l.b16 %v1681
    %v1694 = vunpack.c.l.b16 %v1682
    %v1695 = vunpack.c.l.b16 %v1683
    %v1696 = vunpack.c.l.b16 %v1684
    %v1697 = vpack.c.b16 %v1694, %v1693
    %v1698 = vpack.c.b16 %v1696, %v1695
    %v1702 = vsel %vm179, %v1678, 0
    %v1705 = vsel %vm179, %v1679, 0
    %v1708 = vsel %vm179, %v1680, 0
    %1710 = vmatpush.bf16.msra.mxu0 0
    %1711 = vmatpush.bf16.msra.mxu0 0
    %1712 = vmatpush.bf16.msra.mxu0 0
    %1713 = vmatpush.bf16.msra.mxu0 0
    %1714 = vmatpush.bf16.msra.mxu0 0
    %1715 = vmatpush.bf16.msra.mxu0 0
    %1716 = vmatpush.bf16.msra.mxu0 %v1698
    %1717 = vmatpush.bf16.msra.mxu0 %v1697
    %1718 = vmatmul.bf16.gmra.mxu0 %v1702
    %v1719 = vpop.f32.mrf.mxu0
    %v1720 = vadd.f32 %v1687, %v1719
    %v1721 = vpop.f32.mrf.mxu0
    %v1722 = vadd.f32 %v1687, %v1721
    %1723 = vmatmul.bf16.gmra.mxu0 %v1705
    %v1724 = vpop.f32.mrf.mxu0
    %v1725 = vadd.f32 %v1687, %v1724
    %v1726 = vpop.f32.mrf.mxu0
    %v1727 = vadd.f32 %v1687, %v1726
    %1728 = vmatmul.bf16.gmra.mxu0 %v1708
    %v1729 = vpop.f32.mrf.mxu0
    %v1730 = vadd.f32 %v1687, %v1729
    %v1731 = vpop.f32.mrf.mxu0
    %v1732 = vadd.f32 %v1687, %v1731
    %1733 = vdwg.mxu0
    %v1734 = vmax.f32 %v1720, 0.0
    %v1735 = vmax.f32 %v1722, 0.0
    %v1736 = vmax.f32 %v1725, 0.0
    %v1737 = vmax.f32 %v1727, 0.0
    %v1738 = vmax.f32 %v1730, 0.0
    %v1739 = vmax.f32 %v1732, 0.0
    %v1740 = vpack.c.bf16 %v1735, %v1734
    %v1741 = vpack.c.bf16 %v1737, %v1736
    %v1742 = vpack.c.bf16 %v1739, %v1738
    %v1743 = vld [vmem:[%s15] sm:$0xf]
    %v1744 = vld [vmem:[%s15 + $0x4] sm:$0xf]
    %v1745 = vld [vmem:[%s15 + $0x8] sm:$0xf]
    %v1746 = vld [vmem:[%s15 + $0xc] sm:$0xf]
    %v1747 = vld [vmem:[%s15 + $0x10] sm:$0xf]
    %v1748 = vld [vmem:[%s15 + $0x14] sm:$0xf]
    %v1749 = vld [vmem:[%s15 + $0x18] sm:$0xf]
    %v1750 = vld [vmem:[%s15 + $0x1c] sm:$0xf]
    %v1751 = vld [vmem:[%s15 + $0x20] sm:$0xf]
    %v1752 = vld [vmem:[%s15 + $0x24] sm:$0xf]
    %v1753 = vld [vmem:[%s15 + $0x28] sm:$0xf]
    %v1754 = vld [vmem:[%s15 + $0x2c] sm:$0xf]
    %v1755 = vld [vmem:[%s15 + $0x30] sm:$0xf]
    %v1756 = vld [vmem:[%s15 + $0x34] sm:$0xf]
    %v1757 = vld [vmem:[%s15 + $0x38] sm:$0xf]
    %v1758 = vld [vmem:[%s15 + $0x3c] sm:$0xf]
    %v1759 = vld [vmem:[%s16] sm:$0x1]
    %v1761 = vperm.slane %v1759, 0
    %v1779 = vunpack.c.l.b16 %v1743
    %v1780 = vunpack.c.l.b16 %v1744
    %v1781 = vunpack.c.l.b16 %v1745
    %v1782 = vunpack.c.l.b16 %v1746
    %v1783 = vunpack.c.l.b16 %v1747
    %v1784 = vunpack.c.l.b16 %v1748
    %v1785 = vunpack.c.l.b16 %v1749
    %v1786 = vunpack.c.l.b16 %v1750
    %v1787 = vunpack.c.l.b16 %v1751
    %v1788 = vunpack.c.l.b16 %v1752
    %v1789 = vunpack.c.l.b16 %v1753
    %v1790 = vunpack.c.l.b16 %v1754
    %v1791 = vunpack.c.l.b16 %v1755
    %v1792 = vunpack.c.l.b16 %v1756
    %v1793 = vunpack.c.l.b16 %v1757
    %v1794 = vunpack.c.l.b16 %v1758
    %v1795 = vpack.c.b16 %v1780, %v1779
    %v1796 = vpack.c.b16 %v1782, %v1781
    %v1797 = vpack.c.b16 %v1784, %v1783
    %v1798 = vpack.c.b16 %v1786, %v1785
    %v1799 = vpack.c.b16 %v1788, %v1787
    %v1800 = vpack.c.b16 %v1790, %v1789
    %v1801 = vpack.c.b16 %v1792, %v1791
    %v1802 = vpack.c.b16 %v1794, %v1793
    %1811 = vmatpush.bf16.msra.mxu0 %v1802
    %1812 = vmatpush.bf16.msra.mxu0 %v1801
    %1813 = vmatpush.bf16.msra.mxu0 %v1800
    %1814 = vmatpush.bf16.msra.mxu0 %v1799
    %1815 = vmatpush.bf16.msra.mxu0 %v1798
    %1816 = vmatpush.bf16.msra.mxu0 %v1797
    %1817 = vmatpush.bf16.msra.mxu0 %v1796
    %1818 = vmatpush.bf16.msra.mxu0 %v1795
    %1819 = vmatmul.bf16.gmra.mxu0 %v1740
    %v1820 = vpop.f32.mrf.mxu0
    %v1821 = vadd.f32 %v1761, %v1820
    %v1822 = vpop.f32.mrf.mxu0
    %v1823 = vadd.f32 %v1761, %v1822
    %1824 = vmatmul.bf16.gmra.mxu0 %v1741
    %v1825 = vpop.f32.mrf.mxu0
    %v1826 = vadd.f32 %v1761, %v1825
    %v1827 = vpop.f32.mrf.mxu0
    %v1828 = vadd.f32 %v1761, %v1827
    %1829 = vmatmul.bf16.gmra.mxu0 %v1742
    %v1830 = vpop.f32.mrf.mxu0
    %v1831 = vadd.f32 %v1761, %v1830
    %v1832 = vpop.f32.mrf.mxu0
    %v1833 = vadd.f32 %v1761, %v1832
    %1834 = vdwg.mxu0
    %v1835 = vadd.f32 %v1672, %v1821
    %v1836 = vadd.f32 %v1673, %v1823
    %v1837 = vadd.f32 %v1674, %v1826
    %v1838 = vadd.f32 %v1675, %v1828
    %v1839 = vadd.f32 %v1676, %v1831
    %v1840 = vadd.f32 %v1677, %v1833
    %v1841 = vsel %vm179, %v1835, 0.0
    %1842 = vadd.xlane.f32.xlu0 %v1841
    %v1843 = vpop.xlane.xlu0 %1842
    %v1844 = vsel %vm179, %v1836, 0.0
    %1845 = vadd.xlane.f32.xlu0 %v1844
    %v1846 = vpop.xlane.xlu0 %1845
    %v1847 = vsel %vm179, %v1837, 0.0
    %1848 = vadd.xlane.f32.xlu0 %v1847
    %v1849 = vpop.xlane.xlu0 %1848
    %v1850 = vsel %vm179, %v1838, 0.0
    %1851 = vadd.xlane.f32.xlu0 %v1850
    %v1852 = vpop.xlane.xlu0 %1851
    %v1853 = vsel %vm179, %v1839, 0.0
    %1854 = vadd.xlane.f32.xlu0 %v1853
    %v1855 = vpop.xlane.xlu0 %1854
    %v1856 = vsel %vm179, %v1840, 0.0
    %1857 = vadd.xlane.f32.xlu0 %v1856
    %v1858 = vpop.xlane.xlu0 %1857
    %v1859 = vmul.f32 %v1843, %v1545
    %v1860 = vmul.f32 %v1846, %v1545
    %v1861 = vmul.f32 %v1849, %v1545
    %v1862 = vmul.f32 %v1852, %v1545
    %v1863 = vmul.f32 %v1855, %v1545
    %v1864 = vmul.f32 %v1858, %v1545
    %v1865 = vsub.f32 %v1835, %v1859
    %v1866 = vsub.f32 %v1836, %v1860
    %v1867 = vsub.f32 %v1837, %v1861
    %v1868 = vsub.f32 %v1838, %v1862
    %v1869 = vsub.f32 %v1839, %v1863
    %v1870 = vsub.f32 %v1840, %v1864
    %v1871 = vmul.f32 %v1865, %v1865
    %v1872 = vmul.f32 %v1866, %v1866
    %v1873 = vmul.f32 %v1867, %v1867
    %v1874 = vmul.f32 %v1868, %v1868
    %v1875 = vmul.f32 %v1869, %v1869
    %v1876 = vmul.f32 %v1870, %v1870
    %v1877 = vsel %vm179, %v1871, 0.0
    %1878 = vadd.xlane.f32.xlu0 %v1877
    %v1879 = vpop.xlane.xlu0 %1878
    %v1880 = vsel %vm179, %v1872, 0.0
    %1881 = vadd.xlane.f32.xlu0 %v1880
    %v1882 = vpop.xlane.xlu0 %1881
    %v1883 = vsel %vm179, %v1873, 0.0
    %1884 = vadd.xlane.f32.xlu0 %v1883
    %v1885 = vpop.xlane.xlu0 %1884
    %v1886 = vsel %vm179, %v1874, 0.0
    %1887 = vadd.xlane.f32.xlu0 %v1886
    %v1888 = vpop.xlane.xlu0 %1887
    %v1889 = vsel %vm179, %v1875, 0.0
    %1890 = vadd.xlane.f32.xlu0 %v1889
    %v1891 = vpop.xlane.xlu0 %1890
    %v1892 = vsel %vm179, %v1876, 0.0
    %1893 = vadd.xlane.f32.xlu0 %v1892
    %v1894 = vpop.xlane.xlu0 %1893
    %v1895 = vmul.f32 %v1879, %v1545
    %v1896 = vmul.f32 %v1882, %v1545
    %v1897 = vmul.f32 %v1885, %v1545
    %v1898 = vmul.f32 %v1888, %v1545
    %v1899 = vmul.f32 %v1891, %v1545
    %v1900 = vmul.f32 %v1894, %v1545
    %v1901 = vadd.f32 %v1895, 1e-05
    %v1902 = vadd.f32 %v1896, 1e-05
    %v1903 = vadd.f32 %v1897, 1e-05
    %v1904 = vadd.f32 %v1898, 1e-05
    %v1905 = vadd.f32 %v1899, 1e-05
    %v1906 = vadd.f32 %v1900, 1e-05
    %v1907 = vrsqrt.pop %v1901
    %v1908 = vmul.f32 %v1907, %v1901
    %v1909 = vmul.f32 %v1908, %v1907
    %v1910 = vmul.f32 0.5, %v1909
    %v1911 = vsub.f32 1.5, %v1910
    %v1912 = vmul.f32 %v1907, %v1911
    %vm1913 = vweird.f32 %v1901
    %vm1914 = vweird.f32 %v1907
    %vm1915 = vmor %vm1913, %vm1914
    %v1916 = vsel %vm1915, %v1907, %v1912
    %v1917 = vrsqrt.pop %v1902
    %v1918 = vmul.f32 %v1917, %v1902
    %v1919 = vmul.f32 %v1918, %v1917
    %v1920 = vmul.f32 0.5, %v1919
    %v1921 = vsub.f32 1.5, %v1920
    %v1922 = vmul.f32 %v1917, %v1921
    %vm1923 = vweird.f32 %v1902
    %vm1924 = vweird.f32 %v1917
    %vm1925 = vmor %vm1923, %vm1924
    %v1926 = vsel %vm1925, %v1917, %v1922
    %v1927 = vrsqrt.pop %v1903
    %v1928 = vmul.f32 %v1927, %v1903
    %v1929 = vmul.f32 %v1928, %v1927
    %v1930 = vmul.f32 0.5, %v1929
    %v1931 = vsub.f32 1.5, %v1930
    %v1932 = vmul.f32 %v1927, %v1931
    %vm1933 = vweird.f32 %v1903
    %vm1934 = vweird.f32 %v1927
    %vm1935 = vmor %vm1933, %vm1934
    %v1936 = vsel %vm1935, %v1927, %v1932
    %v1937 = vrsqrt.pop %v1904
    %v1938 = vmul.f32 %v1937, %v1904
    %v1939 = vmul.f32 %v1938, %v1937
    %v1940 = vmul.f32 0.5, %v1939
    %v1941 = vsub.f32 1.5, %v1940
    %v1942 = vmul.f32 %v1937, %v1941
    %vm1943 = vweird.f32 %v1904
    %vm1944 = vweird.f32 %v1937
    %vm1945 = vmor %vm1943, %vm1944
    %v1946 = vsel %vm1945, %v1937, %v1942
    %v1947 = vrsqrt.pop %v1905
    %v1948 = vmul.f32 %v1947, %v1905
    %v1949 = vmul.f32 %v1948, %v1947
    %v1950 = vmul.f32 0.5, %v1949
    %v1951 = vsub.f32 1.5, %v1950
    %v1952 = vmul.f32 %v1947, %v1951
    %vm1953 = vweird.f32 %v1905
    %vm1954 = vweird.f32 %v1947
    %vm1955 = vmor %vm1953, %vm1954
    %v1956 = vsel %vm1955, %v1947, %v1952
    %v1957 = vrsqrt.pop %v1906
    %v1958 = vmul.f32 %v1957, %v1906
    %v1959 = vmul.f32 %v1958, %v1957
    %v1960 = vmul.f32 0.5, %v1959
    %v1961 = vsub.f32 1.5, %v1960
    %v1962 = vmul.f32 %v1957, %v1961
    %vm1963 = vweird.f32 %v1906
    %vm1964 = vweird.f32 %v1957
    %vm1965 = vmor %vm1963, %vm1964
    %v1966 = vsel %vm1965, %v1957, %v1962
    %v1967 = vmul.f32 %v1865, %v1916
    %v1968 = vmul.f32 %v1866, %v1926
    %v1969 = vmul.f32 %v1867, %v1936
    %v1970 = vmul.f32 %v1868, %v1946
    %v1971 = vmul.f32 %v1869, %v1956
    %v1972 = vmul.f32 %v1870, %v1966
    %v1974 = vperm.slane %v154, 0
    %v1976 = vmul.f32 %v1967, %v1974
    %v1977 = vmul.f32 %v1968, %v1974
    %v1978 = vmul.f32 %v1969, %v1974
    %v1979 = vmul.f32 %v1970, %v1974
    %v1980 = vmul.f32 %v1971, %v1974
    %v1981 = vmul.f32 %v1972, %v1974
    %v1983 = vperm.slane %v155, 0
    %v1985 = vadd.f32 %v1976, %v1983
    %v1986 = vadd.f32 %v1977, %v1983
    %v1987 = vadd.f32 %v1978, %v1983
    %v1988 = vadd.f32 %v1979, %v1983
    %v1989 = vadd.f32 %v1980, %v1983
    %v1990 = vadd.f32 %v1981, %v1983
    %s1991 = scalar_lea.vmem %s17, 1
    %v1992 = vld [vmem:[%s1991] sm:$0x1]
    %s1993 = scalar_lea.vmem %s18, 1
    %v1994 = vld [vmem:[%s1993] sm:$0x1]
    %s1995 = scalar_lea.vmem %s19, 1
    %v1996 = vld [vmem:[%s1995] sm:$0x1]
    %s1997 = scalar_lea.vmem %s20, 1
    %v1998 = vld [vmem:[%s1997] sm:$0x1]
    %v1999 = vpack.c.bf16 %v1986, %v1985
    %v2000 = vpack.c.bf16 %v1988, %v1987
    %v2001 = vpack.c.bf16 %v1990, %v1989
    %s2002 = scalar_lea.vmem %s5, 64
    %v2003 = vld [vmem:[%s2002] sm:$0xf]
    %v2004 = vld [vmem:[%s2002 + $0x4] sm:$0xf]
    %v2005 = vld [vmem:[%s2002 + $0x8] sm:$0xf]
    %v2006 = vld [vmem:[%s2002 + $0xc] sm:$0xf]
    %s2007 = scalar_lea.vmem %s8, 4
    %v2008 = vld [vmem:[%s2007] sm:$0x1]
    %v2010 = vperm.slane %v2008, 0
    %v2016 = vunpack.c.l.b16 %v2003
    %v2017 = vunpack.c.l.b16 %v2004
    %v2018 = vunpack.c.l.b16 %v2005
    %v2019 = vunpack.c.l.b16 %v2006
    %v2020 = vpack.c.b16 %v2017, %v2016
    %v2021 = vpack.c.b16 %v2019, %v2018
    %v2025 = vsel %vm179, %v1999, 0
    %v2028 = vsel %vm179, %v2000, 0
    %v2031 = vsel %vm179, %v2001, 0
    %2033 = vmatpush.bf16.msra.mxu0 0
    %2034 = vmatpush.bf16.msra.mxu0 0
    %2035 = vmatpush.bf16.msra.mxu0 0
    %2036 = vmatpush.bf16.msra.mxu0 0
    %2037 = vmatpush.bf16.msra.mxu0 0
    %2038 = vmatpush.bf16.msra.mxu0 0
    %2039 = vmatpush.bf16.msra.mxu0 %v2021
    %2040 = vmatpush.bf16.msra.mxu0 %v2020
    %2041 = vmatmul.bf16.gmra.mxu0 %v2025
    %v2042 = vpop.f32.mrf.mxu0
    %v2043 = vadd.f32 %v2010, %v2042
    %v2044 = vpop.f32.mrf.mxu0
    %v2045 = vadd.f32 %v2010, %v2044
    %2046 = vmatmul.bf16.gmra.mxu0 %v2028
    %v2047 = vpop.f32.mrf.mxu0
    %v2048 = vadd.f32 %v2010, %v2047
    %v2049 = vpop.f32.mrf.mxu0
    %v2050 = vadd.f32 %v2010, %v2049
    %2051 = vmatmul.bf16.gmra.mxu0 %v2031
    %v2052 = vpop.f32.mrf.mxu0
    %v2053 = vadd.f32 %v2010, %v2052
    %v2054 = vpop.f32.mrf.mxu0
    %v2055 = vadd.f32 %v2010, %v2054
    %2056 = vdwg.mxu0
    %s2057 = scalar_lea.vmem %s6, 64
    %v2058 = vld [vmem:[%s2057] sm:$0xf]
    %v2059 = vld [vmem:[%s2057 + $0x4] sm:$0xf]
    %v2060 = vld [vmem:[%s2057 + $0x8] sm:$0xf]
    %v2061 = vld [vmem:[%s2057 + $0xc] sm:$0xf]
    %s2062 = scalar_lea.vmem %s9, 4
    %v2063 = vld [vmem:[%s2062] sm:$0x1]
    %v2065 = vperm.slane %v2063, 0
    %v2071 = vunpack.c.l.b16 %v2058
    %v2072 = vunpack.c.l.b16 %v2059
    %v2073 = vunpack.c.l.b16 %v2060
    %v2074 = vunpack.c.l.b16 %v2061
    %v2075 = vpack.c.b16 %v2072, %v2071
    %v2076 = vpack.c.b16 %v2074, %v2073
    %2079 = vmatpush.bf16.msra.mxu0 0
    %2080 = vmatpush.bf16.msra.mxu0 0
    %2081 = vmatpush.bf16.msra.mxu0 0
    %2082 = vmatpush.bf16.msra.mxu0 0
    %2083 = vmatpush.bf16.msra.mxu0 0
    %2084 = vmatpush.bf16.msra.mxu0 0
    %2085 = vmatpush.bf16.msra.mxu0 %v2076
    %2086 = vmatpush.bf16.msra.mxu0 %v2075
    %2087 = vmatmul.bf16.gmra.mxu0 %v2025
    %v2088 = vpop.f32.mrf.mxu0
    %v2089 = vadd.f32 %v2065, %v2088
    %v2090 = vpop.f32.mrf.mxu0
    %v2091 = vadd.f32 %v2065, %v2090
    %2092 = vmatmul.bf16.gmra.mxu0 %v2028
    %v2093 = vpop.f32.mrf.mxu0
    %v2094 = vadd.f32 %v2065, %v2093
    %v2095 = vpop.f32.mrf.mxu0
    %v2096 = vadd.f32 %v2065, %v2095
    %2097 = vmatmul.bf16.gmra.mxu0 %v2031
    %v2098 = vpop.f32.mrf.mxu0
    %v2099 = vadd.f32 %v2065, %v2098
    %v2100 = vpop.f32.mrf.mxu0
    %v2101 = vadd.f32 %v2065, %v2100
    %2102 = vdwg.mxu0
    %s2103 = scalar_lea.vmem %s7, 64
    %v2104 = vld [vmem:[%s2103] sm:$0xf]
    %v2105 = vld [vmem:[%s2103 + $0x4] sm:$0xf]
    %v2106 = vld [vmem:[%s2103 + $0x8] sm:$0xf]
    %v2107 = vld [vmem:[%s2103 + $0xc] sm:$0xf]
    %s2108 = scalar_lea.vmem %s10, 4
    %v2109 = vld [vmem:[%s2108] sm:$0x1]
    %v2111 = vperm.slane %v2109, 0
    %v2117 = vunpack.c.l.b16 %v2104
    %v2118 = vunpack.c.l.b16 %v2105
    %v2119 = vunpack.c.l.b16 %v2106
    %v2120 = vunpack.c.l.b16 %v2107
    %v2121 = vpack.c.b16 %v2118, %v2117
    %v2122 = vpack.c.b16 %v2120, %v2119
    %2125 = vmatpush.bf16.msra.mxu0 0
    %2126 = vmatpush.bf16.msra.mxu0 0
    %2127 = vmatpush.bf16.msra.mxu0 0
    %2128 = vmatpush.bf16.msra.mxu0 0
    %2129 = vmatpush.bf16.msra.mxu0 0
    %2130 = vmatpush.bf16.msra.mxu0 0
    %2131 = vmatpush.bf16.msra.mxu0 %v2122
    %2132 = vmatpush.bf16.msra.mxu0 %v2121
    %2133 = vmatmul.bf16.gmra.mxu0 %v2025
    %v2134 = vpop.f32.mrf.mxu0
    %v2135 = vadd.f32 %v2111, %v2134
    %v2136 = vpop.f32.mrf.mxu0
    %v2137 = vadd.f32 %v2111, %v2136
    %2138 = vmatmul.bf16.gmra.mxu0 %v2028
    %v2139 = vpop.f32.mrf.mxu0
    %v2140 = vadd.f32 %v2111, %v2139
    %v2141 = vpop.f32.mrf.mxu0
    %v2142 = vadd.f32 %v2111, %v2141
    %2143 = vmatmul.bf16.gmra.mxu0 %v2031
    %v2144 = vpop.f32.mrf.mxu0
    %v2145 = vadd.f32 %v2111, %v2144
    %v2146 = vpop.f32.mrf.mxu0
    %v2147 = vadd.f32 %v2111, %v2146
    %2148 = vdwg.mxu0
    %v2149 = vpack.c.bf16 %v2045, %v2043
    %v2150 = vpack.c.bf16 %v2050, %v2048
    %v2151 = vpack.c.bf16 %v2055, %v2053
    %v2152 = vpack.c.bf16 %v2091, %v2089
    %v2153 = vpack.c.bf16 %v2096, %v2094
    %v2154 = vpack.c.bf16 %v2101, %v2099
    %v2156 = vsel %vm307, %v2149, 0
    %v2159 = vsel %vm307, %v2150, 0
    %v2162 = vsel %vm307, %v2151, 0
    %v2165 = vsel %vm307, %v2152, 0
    %v2168 = vsel %vm307, %v2153, 0
    %v2171 = vsel %vm307, %v2154, 0
    %2173 = vmatpush.bf16.xpose.msra.mxu0 0
    %2174 = vmatpush.bf16.xpose.msra.mxu0 0
    %2175 = vmatpush.bf16.xpose.msra.mxu0 0
    %2176 = vmatpush.bf16.xpose.msra.mxu0 0
    %2177 = vmatpush.bf16.xpose.msra.mxu0 0
    %2178 = vmatpush.bf16.xpose.msra.mxu0 %v2171
    %2179 = vmatpush.bf16.xpose.msra.mxu0 %v2168
    %2180 = vmatpush.bf16.xpose.msra.mxu0 %v2165
    %2181 = vmatmul.bf16.gmra.mxu0 %v2156
    %v2182 = vpop.f32.mrf.mxu0
    %v2183 = vadd.f32 %v146, %v2182
    %v2184 = vpop.f32.mrf.mxu0
    %v2185 = vadd.f32 %v147, %v2184
    %2186 = vmatmul.bf16.gmra.mxu0 %v2159
    %v2187 = vpop.f32.mrf.mxu0
    %v2188 = vadd.f32 %v148, %v2187
    %v2189 = vpop.f32.mrf.mxu0
    %v2190 = vadd.f32 %v149, %v2189
    %2191 = vmatmul.bf16.gmra.mxu0 %v2162
    %v2192 = vpop.f32.mrf.mxu0
    %v2193 = vadd.f32 %v150, %v2192
    %v2194 = vpop.f32.mrf.mxu0
    %v2195 = vadd.f32 %v151, %v2194
    %2196 = vdwg.mxu0
    %v2197 = vsel %vm350, %v2183, -inf
    %2198 = vmax.xlane.f32.xlu0 %v2197
    %v2199 = vpop.xlane.xlu0 %2198
    %v2200 = vsel %vm350, %v2185, -inf
    %2201 = vmax.xlane.f32.xlu0 %v2200
    %v2202 = vpop.xlane.xlu0 %2201
    %v2203 = vsel %vm350, %v2188, -inf
    %2204 = vmax.xlane.f32.xlu0 %v2203
    %v2205 = vpop.xlane.xlu0 %2204
    %v2206 = vsel %vm350, %v2190, -inf
    %2207 = vmax.xlane.f32.xlu0 %v2206
    %v2208 = vpop.xlane.xlu0 %2207
    %v2209 = vsel %vm350, %v2193, -inf
    %2210 = vmax.xlane.f32.xlu0 %v2209
    %v2211 = vpop.xlane.xlu0 %2210
    %v2212 = vsel %vm350, %v2195, -inf
    %2213 = vmax.xlane.f32.xlu0 %v2212
    %v2214 = vpop.xlane.xlu0 %2213
    %v2215 = vsub.f32 %v2183, %v2199
    %v2216 = vsub.f32 %v2185, %v2202
    %v2217 = vsub.f32 %v2188, %v2205
    %v2218 = vsub.f32 %v2190, %v2208
    %v2219 = vsub.f32 %v2193, %v2211
    %v2220 = vsub.f32 %v2195, %v2214
    %v2221 = vmul.f32 %v2215, 1.442695
    %v2222 = vpow.pop %v2221
    %v2223 = vmul.f32 %v2216, 1.442695
    %v2224 = vpow.pop %v2223
    %v2225 = vmul.f32 %v2217, 1.442695
    %v2226 = vpow.pop %v2225
    %v2227 = vmul.f32 %v2218, 1.442695
    %v2228 = vpow.pop %v2227
    %v2229 = vmul.f32 %v2219, 1.442695
    %v2230 = vpow.pop %v2229
    %v2231 = vmul.f32 %v2220, 1.442695
    %v2232 = vpow.pop %v2231
    %v2233 = vsel %vm350, %v2222, 0.0
    %2234 = vadd.xlane.f32.xlu0 %v2233
    %v2235 = vpop.xlane.xlu0 %2234
    %v2236 = vsel %vm350, %v2224, 0.0
    %2237 = vadd.xlane.f32.xlu0 %v2236
    %v2238 = vpop.xlane.xlu0 %2237
    %v2239 = vsel %vm350, %v2226, 0.0
    %2240 = vadd.xlane.f32.xlu0 %v2239
    %v2241 = vpop.xlane.xlu0 %2240
    %v2242 = vsel %vm350, %v2228, 0.0
    %2243 = vadd.xlane.f32.xlu0 %v2242
    %v2244 = vpop.xlane.xlu0 %2243
    %v2245 = vsel %vm350, %v2230, 0.0
    %2246 = vadd.xlane.f32.xlu0 %v2245
    %v2247 = vpop.xlane.xlu0 %2246
    %v2248 = vsel %vm350, %v2232, 0.0
    %2249 = vadd.xlane.f32.xlu0 %v2248
    %v2250 = vpop.xlane.xlu0 %2249
    %v2251 = vrcp.pop %v2235
    %v2252 = vrcp.pop %v2238
    %v2253 = vrcp.pop %v2241
    %v2254 = vrcp.pop %v2244
    %v2255 = vrcp.pop %v2247
    %v2256 = vrcp.pop %v2250
    %v2257 = vmul.f32 %v2222, %v2251
    %v2258 = vmul.f32 %v2224, %v2252
    %v2259 = vmul.f32 %v2226, %v2253
    %v2260 = vmul.f32 %v2228, %v2254
    %v2261 = vmul.f32 %v2230, %v2255
    %v2262 = vmul.f32 %v2232, %v2256
    %v2263 = vpack.c.bf16 %v2258, %v2257
    %v2264 = vpack.c.bf16 %v2260, %v2259
    %v2265 = vpack.c.bf16 %v2262, %v2261
    %v2266 = vpack.c.bf16 %v2137, %v2135
    %v2267 = vpack.c.bf16 %v2142, %v2140
    %v2268 = vpack.c.bf16 %v2147, %v2145
    %v2270 = vsel %vm350, %v2263, 0
    %v2273 = vsel %vm350, %v2264, 0
    %v2276 = vsel %vm350, %v2265, 0
    %2278 = vmatpush.bf16.msra.mxu0 0
    %2279 = vmatpush.bf16.msra.mxu0 0
    %2280 = vmatpush.bf16.msra.mxu0 0
    %2281 = vmatpush.bf16.msra.mxu0 0
    %2282 = vmatpush.bf16.msra.mxu0 0
    %2283 = vmatpush.bf16.msra.mxu0 %v2268
    %2284 = vmatpush.bf16.msra.mxu0 %v2267
    %2285 = vmatpush.bf16.msra.mxu0 %v2266
    %2286 = vmatmul.bf16.gmra.mxu0 %v2270
    %v2287 = vpop.f32.mrf.mxu0
    %v2288 = vadd.f32 0.0, %v2287
    %v2289 = vpop.f32.mrf.mxu0
    %v2290 = vadd.f32 0.0, %v2289
    %2291 = vmatmul.bf16.gmra.mxu0 %v2273
    %v2292 = vpop.f32.mrf.mxu0
    %v2293 = vadd.f32 0.0, %v2292
    %v2294 = vpop.f32.mrf.mxu0
    %v2295 = vadd.f32 0.0, %v2294
    %2296 = vmatmul.bf16.gmra.mxu0 %v2276
    %v2297 = vpop.f32.mrf.mxu0
    %v2298 = vadd.f32 0.0, %v2297
    %v2299 = vpop.f32.mrf.mxu0
    %v2300 = vadd.f32 0.0, %v2299
    %2301 = vdwg.mxu0
    %v2302 = vpack.c.bf16 %v2290, %v2288
    %v2303 = vpack.c.bf16 %v2295, %v2293
    %v2304 = vpack.c.bf16 %v2300, %v2298
    %s2305 = scalar_lea.vmem %s11, 16
    %v2306 = vld [vmem:[%s2305] sm:$0xf]
    %s2307 = scalar_lea.vmem %s5, 80
    %v2308 = vld [vmem:[%s2307] sm:$0xf]
    %v2309 = vld [vmem:[%s2307 + $0x4] sm:$0xf]
    %v2310 = vld [vmem:[%s2307 + $0x8] sm:$0xf]
    %v2311 = vld [vmem:[%s2307 + $0xc] sm:$0xf]
    %s2312 = scalar_lea.vmem %s8, 5
    %v2313 = vld [vmem:[%s2312] sm:$0x1]
    %v2315 = vperm.slane %v2313, 0
    %v2321 = vunpack.c.l.b16 %v2308
    %v2322 = vunpack.c.l.b16 %v2309
    %v2323 = vunpack.c.l.b16 %v2310
    %v2324 = vunpack.c.l.b16 %v2311
    %v2325 = vpack.c.b16 %v2322, %v2321
    %v2326 = vpack.c.b16 %v2324, %v2323
    %2329 = vmatpush.bf16.msra.mxu0 0
    %2330 = vmatpush.bf16.msra.mxu0 0
    %2331 = vmatpush.bf16.msra.mxu0 0
    %2332 = vmatpush.bf16.msra.mxu0 0
    %2333 = vmatpush.bf16.msra.mxu0 0
    %2334 = vmatpush.bf16.msra.mxu0 0
    %2335 = vmatpush.bf16.msra.mxu0 %v2326
    %2336 = vmatpush.bf16.msra.mxu0 %v2325
    %2337 = vmatmul.bf16.gmra.mxu0 %v2025
    %v2338 = vpop.f32.mrf.mxu0
    %v2339 = vadd.f32 %v2315, %v2338
    %v2340 = vpop.f32.mrf.mxu0
    %v2341 = vadd.f32 %v2315, %v2340
    %2342 = vmatmul.bf16.gmra.mxu0 %v2028
    %v2343 = vpop.f32.mrf.mxu0
    %v2344 = vadd.f32 %v2315, %v2343
    %v2345 = vpop.f32.mrf.mxu0
    %v2346 = vadd.f32 %v2315, %v2345
    %2347 = vmatmul.bf16.gmra.mxu0 %v2031
    %v2348 = vpop.f32.mrf.mxu0
    %v2349 = vadd.f32 %v2315, %v2348
    %v2350 = vpop.f32.mrf.mxu0
    %v2351 = vadd.f32 %v2315, %v2350
    %2352 = vdwg.mxu0
    %s2353 = scalar_lea.vmem %s6, 80
    %v2354 = vld [vmem:[%s2353] sm:$0xf]
    %v2355 = vld [vmem:[%s2353 + $0x4] sm:$0xf]
    %v2356 = vld [vmem:[%s2353 + $0x8] sm:$0xf]
    %v2357 = vld [vmem:[%s2353 + $0xc] sm:$0xf]
    %s2358 = scalar_lea.vmem %s9, 5
    %v2359 = vld [vmem:[%s2358] sm:$0x1]
    %v2361 = vperm.slane %v2359, 0
    %v2367 = vunpack.c.l.b16 %v2354
    %v2368 = vunpack.c.l.b16 %v2355
    %v2369 = vunpack.c.l.b16 %v2356
    %v2370 = vunpack.c.l.b16 %v2357
    %v2371 = vpack.c.b16 %v2368, %v2367
    %v2372 = vpack.c.b16 %v2370, %v2369
    %2375 = vmatpush.bf16.msra.mxu0 0
    %2376 = vmatpush.bf16.msra.mxu0 0
    %2377 = vmatpush.bf16.msra.mxu0 0
    %2378 = vmatpush.bf16.msra.mxu0 0
    %2379 = vmatpush.bf16.msra.mxu0 0
    %2380 = vmatpush.bf16.msra.mxu0 0
    %2381 = vmatpush.bf16.msra.mxu0 %v2372
    %2382 = vmatpush.bf16.msra.mxu0 %v2371
    %2383 = vmatmul.bf16.gmra.mxu0 %v2025
    %v2384 = vpop.f32.mrf.mxu0
    %v2385 = vadd.f32 %v2361, %v2384
    %v2386 = vpop.f32.mrf.mxu0
    %v2387 = vadd.f32 %v2361, %v2386
    %2388 = vmatmul.bf16.gmra.mxu0 %v2028
    %v2389 = vpop.f32.mrf.mxu0
    %v2390 = vadd.f32 %v2361, %v2389
    %v2391 = vpop.f32.mrf.mxu0
    %v2392 = vadd.f32 %v2361, %v2391
    %2393 = vmatmul.bf16.gmra.mxu0 %v2031
    %v2394 = vpop.f32.mrf.mxu0
    %v2395 = vadd.f32 %v2361, %v2394
    %v2396 = vpop.f32.mrf.mxu0
    %v2397 = vadd.f32 %v2361, %v2396
    %2398 = vdwg.mxu0
    %s2399 = scalar_lea.vmem %s7, 80
    %v2400 = vld [vmem:[%s2399] sm:$0xf]
    %v2401 = vld [vmem:[%s2399 + $0x4] sm:$0xf]
    %v2402 = vld [vmem:[%s2399 + $0x8] sm:$0xf]
    %v2403 = vld [vmem:[%s2399 + $0xc] sm:$0xf]
    %s2404 = scalar_lea.vmem %s10, 5
    %v2405 = vld [vmem:[%s2404] sm:$0x1]
    %v2407 = vperm.slane %v2405, 0
    %v2413 = vunpack.c.l.b16 %v2400
    %v2414 = vunpack.c.l.b16 %v2401
    %v2415 = vunpack.c.l.b16 %v2402
    %v2416 = vunpack.c.l.b16 %v2403
    %v2417 = vpack.c.b16 %v2414, %v2413
    %v2418 = vpack.c.b16 %v2416, %v2415
    %2421 = vmatpush.bf16.msra.mxu0 0
    %2422 = vmatpush.bf16.msra.mxu0 0
    %2423 = vmatpush.bf16.msra.mxu0 0
    %2424 = vmatpush.bf16.msra.mxu0 0
    %2425 = vmatpush.bf16.msra.mxu0 0
    %2426 = vmatpush.bf16.msra.mxu0 0
    %2427 = vmatpush.bf16.msra.mxu0 %v2418
    %2428 = vmatpush.bf16.msra.mxu0 %v2417
    %2429 = vmatmul.bf16.gmra.mxu0 %v2025
    %v2430 = vpop.f32.mrf.mxu0
    %v2431 = vadd.f32 %v2407, %v2430
    %v2432 = vpop.f32.mrf.mxu0
    %v2433 = vadd.f32 %v2407, %v2432
    %2434 = vmatmul.bf16.gmra.mxu0 %v2028
    %v2435 = vpop.f32.mrf.mxu0
    %v2436 = vadd.f32 %v2407, %v2435
    %v2437 = vpop.f32.mrf.mxu0
    %v2438 = vadd.f32 %v2407, %v2437
    %2439 = vmatmul.bf16.gmra.mxu0 %v2031
    %v2440 = vpop.f32.mrf.mxu0
    %v2441 = vadd.f32 %v2407, %v2440
    %v2442 = vpop.f32.mrf.mxu0
    %v2443 = vadd.f32 %v2407, %v2442
    %2444 = vdwg.mxu0
    %v2445 = vpack.c.bf16 %v2341, %v2339
    %v2446 = vpack.c.bf16 %v2346, %v2344
    %v2447 = vpack.c.bf16 %v2351, %v2349
    %v2448 = vpack.c.bf16 %v2387, %v2385
    %v2449 = vpack.c.bf16 %v2392, %v2390
    %v2450 = vpack.c.bf16 %v2397, %v2395
    %v2452 = vsel %vm307, %v2445, 0
    %v2455 = vsel %vm307, %v2446, 0
    %v2458 = vsel %vm307, %v2447, 0
    %v2461 = vsel %vm307, %v2448, 0
    %v2464 = vsel %vm307, %v2449, 0
    %v2467 = vsel %vm307, %v2450, 0
    %2469 = vmatpush.bf16.xpose.msra.mxu0 0
    %2470 = vmatpush.bf16.xpose.msra.mxu0 0
    %2471 = vmatpush.bf16.xpose.msra.mxu0 0
    %2472 = vmatpush.bf16.xpose.msra.mxu0 0
    %2473 = vmatpush.bf16.xpose.msra.mxu0 0
    %2474 = vmatpush.bf16.xpose.msra.mxu0 %v2467
    %2475 = vmatpush.bf16.xpose.msra.mxu0 %v2464
    %2476 = vmatpush.bf16.xpose.msra.mxu0 %v2461
    %2477 = vmatmul.bf16.gmra.mxu0 %v2452
    %v2478 = vpop.f32.mrf.mxu0
    %v2479 = vadd.f32 %v146, %v2478
    %v2480 = vpop.f32.mrf.mxu0
    %v2481 = vadd.f32 %v147, %v2480
    %2482 = vmatmul.bf16.gmra.mxu0 %v2455
    %v2483 = vpop.f32.mrf.mxu0
    %v2484 = vadd.f32 %v148, %v2483
    %v2485 = vpop.f32.mrf.mxu0
    %v2486 = vadd.f32 %v149, %v2485
    %2487 = vmatmul.bf16.gmra.mxu0 %v2458
    %v2488 = vpop.f32.mrf.mxu0
    %v2489 = vadd.f32 %v150, %v2488
    %v2490 = vpop.f32.mrf.mxu0
    %v2491 = vadd.f32 %v151, %v2490
    %2492 = vdwg.mxu0
    %v2493 = vsel %vm350, %v2479, -inf
    %2494 = vmax.xlane.f32.xlu0 %v2493
    %v2495 = vpop.xlane.xlu0 %2494
    %v2496 = vsel %vm350, %v2481, -inf
    %2497 = vmax.xlane.f32.xlu0 %v2496
    %v2498 = vpop.xlane.xlu0 %2497
    %v2499 = vsel %vm350, %v2484, -inf
    %2500 = vmax.xlane.f32.xlu0 %v2499
    %v2501 = vpop.xlane.xlu0 %2500
    %v2502 = vsel %vm350, %v2486, -inf
    %2503 = vmax.xlane.f32.xlu0 %v2502
    %v2504 = vpop.xlane.xlu0 %2503
    %v2505 = vsel %vm350, %v2489, -inf
    %2506 = vmax.xlane.f32.xlu0 %v2505
    %v2507 = vpop.xlane.xlu0 %2506
    %v2508 = vsel %vm350, %v2491, -inf
    %2509 = vmax.xlane.f32.xlu0 %v2508
    %v2510 = vpop.xlane.xlu0 %2509
    %v2511 = vsub.f32 %v2479, %v2495
    %v2512 = vsub.f32 %v2481, %v2498
    %v2513 = vsub.f32 %v2484, %v2501
    %v2514 = vsub.f32 %v2486, %v2504
    %v2515 = vsub.f32 %v2489, %v2507
    %v2516 = vsub.f32 %v2491, %v2510
    %v2517 = vmul.f32 %v2511, 1.442695
    %v2518 = vpow.pop %v2517
    %v2519 = vmul.f32 %v2512, 1.442695
    %v2520 = vpow.pop %v2519
    %v2521 = vmul.f32 %v2513, 1.442695
    %v2522 = vpow.pop %v2521
    %v2523 = vmul.f32 %v2514, 1.442695
    %v2524 = vpow.pop %v2523
    %v2525 = vmul.f32 %v2515, 1.442695
    %v2526 = vpow.pop %v2525
    %v2527 = vmul.f32 %v2516, 1.442695
    %v2528 = vpow.pop %v2527
    %v2529 = vsel %vm350, %v2518, 0.0
    %2530 = vadd.xlane.f32.xlu0 %v2529
    %v2531 = vpop.xlane.xlu0 %2530
    %v2532 = vsel %vm350, %v2520, 0.0
    %2533 = vadd.xlane.f32.xlu0 %v2532
    %v2534 = vpop.xlane.xlu0 %2533
    %v2535 = vsel %vm350, %v2522, 0.0
    %2536 = vadd.xlane.f32.xlu0 %v2535
    %v2537 = vpop.xlane.xlu0 %2536
    %v2538 = vsel %vm350, %v2524, 0.0
    %2539 = vadd.xlane.f32.xlu0 %v2538
    %v2540 = vpop.xlane.xlu0 %2539
    %v2541 = vsel %vm350, %v2526, 0.0
    %2542 = vadd.xlane.f32.xlu0 %v2541
    %v2543 = vpop.xlane.xlu0 %2542
    %v2544 = vsel %vm350, %v2528, 0.0
    %2545 = vadd.xlane.f32.xlu0 %v2544
    %v2546 = vpop.xlane.xlu0 %2545
    %v2547 = vrcp.pop %v2531
    %v2548 = vrcp.pop %v2534
    %v2549 = vrcp.pop %v2537
    %v2550 = vrcp.pop %v2540
    %v2551 = vrcp.pop %v2543
    %v2552 = vrcp.pop %v2546
    %v2553 = vmul.f32 %v2518, %v2547
    %v2554 = vmul.f32 %v2520, %v2548
    %v2555 = vmul.f32 %v2522, %v2549
    %v2556 = vmul.f32 %v2524, %v2550
    %v2557 = vmul.f32 %v2526, %v2551
    %v2558 = vmul.f32 %v2528, %v2552
    %v2559 = vpack.c.bf16 %v2554, %v2553
    %v2560 = vpack.c.bf16 %v2556, %v2555
    %v2561 = vpack.c.bf16 %v2558, %v2557
    %v2562 = vpack.c.bf16 %v2433, %v2431
    %v2563 = vpack.c.bf16 %v2438, %v2436
    %v2564 = vpack.c.bf16 %v2443, %v2441
    %v2566 = vsel %vm350, %v2559, 0
    %v2569 = vsel %vm350, %v2560, 0
    %v2572 = vsel %vm350, %v2561, 0
    %2574 = vmatpush.bf16.msra.mxu0 0
    %2575 = vmatpush.bf16.msra.mxu0 0
    %2576 = vmatpush.bf16.msra.mxu0 0
    %2577 = vmatpush.bf16.msra.mxu0 0
    %2578 = vmatpush.bf16.msra.mxu0 0
    %2579 = vmatpush.bf16.msra.mxu0 %v2564
    %2580 = vmatpush.bf16.msra.mxu0 %v2563
    %2581 = vmatpush.bf16.msra.mxu0 %v2562
    %2582 = vmatmul.bf16.gmra.mxu0 %v2566
    %v2583 = vpop.f32.mrf.mxu0
    %v2584 = vadd.f32 0.0, %v2583
    %v2585 = vpop.f32.mrf.mxu0
    %v2586 = vadd.f32 0.0, %v2585
    %2587 = vmatmul.bf16.gmra.mxu0 %v2569
    %v2588 = vpop.f32.mrf.mxu0
    %v2589 = vadd.f32 0.0, %v2588
    %v2590 = vpop.f32.mrf.mxu0
    %v2591 = vadd.f32 0.0, %v2590
    %2592 = vmatmul.bf16.gmra.mxu0 %v2572
    %v2593 = vpop.f32.mrf.mxu0
    %v2594 = vadd.f32 0.0, %v2593
    %v2595 = vpop.f32.mrf.mxu0
    %v2596 = vadd.f32 0.0, %v2595
    %2597 = vdwg.mxu0
    %v2598 = vpack.c.bf16 %v2586, %v2584
    %v2599 = vpack.c.bf16 %v2591, %v2589
    %v2600 = vpack.c.bf16 %v2596, %v2594
    %s2601 = scalar_lea.vmem %s11, 20
    %v2602 = vld [vmem:[%s2601] sm:$0xf]
    %v2604 = vsel %vm307, %v2598, 0
    %v2607 = vsel %vm307, %v2599, 0
    %v2610 = vsel %vm307, %v2600, 0
    %v2613 = vsel %vm765, %v2602, 0
    %2615 = vmatpush.bf16.msra.mxu0 0
    %2616 = vmatpush.bf16.msra.mxu0 0
    %2617 = vmatpush.bf16.msra.mxu0 0
    %2618 = vmatpush.bf16.msra.mxu0 0
    %2619 = vmatpush.bf16.msra.mxu0 0
    %2620 = vmatpush.bf16.msra.mxu0 0
    %2621 = vmatpush.bf16.msra.mxu0 0
    %2622 = vmatpush.bf16.msra.mxu0 %v2613
    %2623 = vmatmul.bf16.gmra.mxu0 %v2604
    %v2624 = vpop.f32.mrf.mxu0
    %v2625 = vadd.f32 0.0, %v2624
    %v2626 = vpop.f32.mrf.mxu0
    %v2627 = vadd.f32 0.0, %v2626
    %2628 = vmatmul.bf16.gmra.mxu0 %v2607
    %v2629 = vpop.f32.mrf.mxu0
    %v2630 = vadd.f32 0.0, %v2629
    %v2631 = vpop.f32.mrf.mxu0
    %v2632 = vadd.f32 0.0, %v2631
    %2633 = vmatmul.bf16.gmra.mxu0 %v2610
    %v2634 = vpop.f32.mrf.mxu0
    %v2635 = vadd.f32 0.0, %v2634
    %v2636 = vpop.f32.mrf.mxu0
    %v2637 = vadd.f32 0.0, %v2636
    %2638 = vdwg.mxu0
    %v2640 = vsel %vm307, %v2302, 0
    %v2643 = vsel %vm307, %v2303, 0
    %v2646 = vsel %vm307, %v2304, 0
    %v2649 = vsel %vm765, %v2306, 0
    %2651 = vmatpush.bf16.msra.mxu0 0
    %2652 = vmatpush.bf16.msra.mxu0 0
    %2653 = vmatpush.bf16.msra.mxu0 0
    %2654 = vmatpush.bf16.msra.mxu0 0
    %2655 = vmatpush.bf16.msra.mxu0 0
    %2656 = vmatpush.bf16.msra.mxu0 0
    %2657 = vmatpush.bf16.msra.mxu0 0
    %2658 = vmatpush.bf16.msra.mxu0 %v2649
    %2659 = vmatmul.bf16.gmra.mxu0 %v2640
    %v2660 = vpop.f32.mrf.mxu0
    %v2661 = vadd.f32 %v2625, %v2660
    %v2662 = vpop.f32.mrf.mxu0
    %v2663 = vadd.f32 %v2627, %v2662
    %2664 = vmatmul.bf16.gmra.mxu0 %v2643
    %v2665 = vpop.f32.mrf.mxu0
    %v2666 = vadd.f32 %v2630, %v2665
    %v2667 = vpop.f32.mrf.mxu0
    %v2668 = vadd.f32 %v2632, %v2667
    %2669 = vmatmul.bf16.gmra.mxu0 %v2646
    %v2670 = vpop.f32.mrf.mxu0
    %v2671 = vadd.f32 %v2635, %v2670
    %v2672 = vpop.f32.mrf.mxu0
    %v2673 = vadd.f32 %v2637, %v2672
    %2674 = vdwg.mxu0
    %s2675 = scalar_lea.vmem %s5, 96
    %v2676 = vld [vmem:[%s2675] sm:$0xf]
    %v2677 = vld [vmem:[%s2675 + $0x4] sm:$0xf]
    %v2678 = vld [vmem:[%s2675 + $0x8] sm:$0xf]
    %v2679 = vld [vmem:[%s2675 + $0xc] sm:$0xf]
    %s2680 = scalar_lea.vmem %s8, 6
    %v2681 = vld [vmem:[%s2680] sm:$0x1]
    %v2683 = vperm.slane %v2681, 0
    %v2689 = vunpack.c.l.b16 %v2676
    %v2690 = vunpack.c.l.b16 %v2677
    %v2691 = vunpack.c.l.b16 %v2678
    %v2692 = vunpack.c.l.b16 %v2679
    %v2693 = vpack.c.b16 %v2690, %v2689
    %v2694 = vpack.c.b16 %v2692, %v2691
    %2697 = vmatpush.bf16.msra.mxu0 0
    %2698 = vmatpush.bf16.msra.mxu0 0
    %2699 = vmatpush.bf16.msra.mxu0 0
    %2700 = vmatpush.bf16.msra.mxu0 0
    %2701 = vmatpush.bf16.msra.mxu0 0
    %2702 = vmatpush.bf16.msra.mxu0 0
    %2703 = vmatpush.bf16.msra.mxu0 %v2694
    %2704 = vmatpush.bf16.msra.mxu0 %v2693
    %2705 = vmatmul.bf16.gmra.mxu0 %v2025
    %v2706 = vpop.f32.mrf.mxu0
    %v2707 = vadd.f32 %v2683, %v2706
    %v2708 = vpop.f32.mrf.mxu0
    %v2709 = vadd.f32 %v2683, %v2708
    %2710 = vmatmul.bf16.gmra.mxu0 %v2028
    %v2711 = vpop.f32.mrf.mxu0
    %v2712 = vadd.f32 %v2683, %v2711
    %v2713 = vpop.f32.mrf.mxu0
    %v2714 = vadd.f32 %v2683, %v2713
    %2715 = vmatmul.bf16.gmra.mxu0 %v2031
    %v2716 = vpop.f32.mrf.mxu0
    %v2717 = vadd.f32 %v2683, %v2716
    %v2718 = vpop.f32.mrf.mxu0
    %v2719 = vadd.f32 %v2683, %v2718
    %2720 = vdwg.mxu0
    %s2721 = scalar_lea.vmem %s6, 96
    %v2722 = vld [vmem:[%s2721] sm:$0xf]
    %v2723 = vld [vmem:[%s2721 + $0x4] sm:$0xf]
    %v2724 = vld [vmem:[%s2721 + $0x8] sm:$0xf]
    %v2725 = vld [vmem:[%s2721 + $0xc] sm:$0xf]
    %s2726 = scalar_lea.vmem %s9, 6
    %v2727 = vld [vmem:[%s2726] sm:$0x1]
    %v2729 = vperm.slane %v2727, 0
    %v2735 = vunpack.c.l.b16 %v2722
    %v2736 = vunpack.c.l.b16 %v2723
    %v2737 = vunpack.c.l.b16 %v2724
    %v2738 = vunpack.c.l.b16 %v2725
    %v2739 = vpack.c.b16 %v2736, %v2735
    %v2740 = vpack.c.b16 %v2738, %v2737
    %2743 = vmatpush.bf16.msra.mxu0 0
    %2744 = vmatpush.bf16.msra.mxu0 0
    %2745 = vmatpush.bf16.msra.mxu0 0
    %2746 = vmatpush.bf16.msra.mxu0 0
    %2747 = vmatpush.bf16.msra.mxu0 0
    %2748 = vmatpush.bf16.msra.mxu0 0
    %2749 = vmatpush.bf16.msra.mxu0 %v2740
    %2750 = vmatpush.bf16.msra.mxu0 %v2739
    %2751 = vmatmul.bf16.gmra.mxu0 %v2025
    %v2752 = vpop.f32.mrf.mxu0
    %v2753 = vadd.f32 %v2729, %v2752
    %v2754 = vpop.f32.mrf.mxu0
    %v2755 = vadd.f32 %v2729, %v2754
    %2756 = vmatmul.bf16.gmra.mxu0 %v2028
    %v2757 = vpop.f32.mrf.mxu0
    %v2758 = vadd.f32 %v2729, %v2757
    %v2759 = vpop.f32.mrf.mxu0
    %v2760 = vadd.f32 %v2729, %v2759
    %2761 = vmatmul.bf16.gmra.mxu0 %v2031
    %v2762 = vpop.f32.mrf.mxu0
    %v2763 = vadd.f32 %v2729, %v2762
    %v2764 = vpop.f32.mrf.mxu0
    %v2765 = vadd.f32 %v2729, %v2764
    %2766 = vdwg.mxu0
    %s2767 = scalar_lea.vmem %s7, 96
    %v2768 = vld [vmem:[%s2767] sm:$0xf]
    %v2769 = vld [vmem:[%s2767 + $0x4] sm:$0xf]
    %v2770 = vld [vmem:[%s2767 + $0x8] sm:$0xf]
    %v2771 = vld [vmem:[%s2767 + $0xc] sm:$0xf]
    %s2772 = scalar_lea.vmem %s10, 6
    %v2773 = vld [vmem:[%s2772] sm:$0x1]
    %v2775 = vperm.slane %v2773, 0
    %v2781 = vunpack.c.l.b16 %v2768
    %v2782 = vunpack.c.l.b16 %v2769
    %v2783 = vunpack.c.l.b16 %v2770
    %v2784 = vunpack.c.l.b16 %v2771
    %v2785 = vpack.c.b16 %v2782, %v2781
    %v2786 = vpack.c.b16 %v2784, %v2783
    %2789 = vmatpush.bf16.msra.mxu0 0
    %2790 = vmatpush.bf16.msra.mxu0 0
    %2791 = vmatpush.bf16.msra.mxu0 0
    %2792 = vmatpush.bf16.msra.mxu0 0
    %2793 = vmatpush.bf16.msra.mxu0 0
    %2794 = vmatpush.bf16.msra.mxu0 0
    %2795 = vmatpush.bf16.msra.mxu0 %v2786
    %2796 = vmatpush.bf16.msra.mxu0 %v2785
    %2797 = vmatmul.bf16.gmra.mxu0 %v2025
    %v2798 = vpop.f32.mrf.mxu0
    %v2799 = vadd.f32 %v2775, %v2798
    %v2800 = vpop.f32.mrf.mxu0
    %v2801 = vadd.f32 %v2775, %v2800
    %2802 = vmatmul.bf16.gmra.mxu0 %v2028
    %v2803 = vpop.f32.mrf.mxu0
    %v2804 = vadd.f32 %v2775, %v2803
    %v2805 = vpop.f32.mrf.mxu0
    %v2806 = vadd.f32 %v2775, %v2805
    %2807 = vmatmul.bf16.gmra.mxu0 %v2031
    %v2808 = vpop.f32.mrf.mxu0
    %v2809 = vadd.f32 %v2775, %v2808
    %v2810 = vpop.f32.mrf.mxu0
    %v2811 = vadd.f32 %v2775, %v2810
    %2812 = vdwg.mxu0
    %v2813 = vpack.c.bf16 %v2709, %v2707
    %v2814 = vpack.c.bf16 %v2714, %v2712
    %v2815 = vpack.c.bf16 %v2719, %v2717
    %v2816 = vpack.c.bf16 %v2755, %v2753
    %v2817 = vpack.c.bf16 %v2760, %v2758
    %v2818 = vpack.c.bf16 %v2765, %v2763
    %v2820 = vsel %vm307, %v2813, 0
    %v2823 = vsel %vm307, %v2814, 0
    %v2826 = vsel %vm307, %v2815, 0
    %v2829 = vsel %vm307, %v2816, 0
    %v2832 = vsel %vm307, %v2817, 0
    %v2835 = vsel %vm307, %v2818, 0
    %2837 = vmatpush.bf16.xpose.msra.mxu0 0
    %2838 = vmatpush.bf16.xpose.msra.mxu0 0
    %2839 = vmatpush.bf16.xpose.msra.mxu0 0
    %2840 = vmatpush.bf16.xpose.msra.mxu0 0
    %2841 = vmatpush.bf16.xpose.msra.mxu0 0
    %2842 = vmatpush.bf16.xpose.msra.mxu0 %v2835
    %2843 = vmatpush.bf16.xpose.msra.mxu0 %v2832
    %2844 = vmatpush.bf16.xpose.msra.mxu0 %v2829
    %2845 = vmatmul.bf16.gmra.mxu0 %v2820
    %v2846 = vpop.f32.mrf.mxu0
    %v2847 = vadd.f32 %v146, %v2846
    %v2848 = vpop.f32.mrf.mxu0
    %v2849 = vadd.f32 %v147, %v2848
    %2850 = vmatmul.bf16.gmra.mxu0 %v2823
    %v2851 = vpop.f32.mrf.mxu0
    %v2852 = vadd.f32 %v148, %v2851
    %v2853 = vpop.f32.mrf.mxu0
    %v2854 = vadd.f32 %v149, %v2853
    %2855 = vmatmul.bf16.gmra.mxu0 %v2826
    %v2856 = vpop.f32.mrf.mxu0
    %v2857 = vadd.f32 %v150, %v2856
    %v2858 = vpop.f32.mrf.mxu0
    %v2859 = vadd.f32 %v151, %v2858
    %2860 = vdwg.mxu0
    %v2861 = vsel %vm350, %v2847, -inf
    %2862 = vmax.xlane.f32.xlu0 %v2861
    %v2863 = vpop.xlane.xlu0 %2862
    %v2864 = vsel %vm350, %v2849, -inf
    %2865 = vmax.xlane.f32.xlu0 %v2864
    %v2866 = vpop.xlane.xlu0 %2865
    %v2867 = vsel %vm350, %v2852, -inf
    %2868 = vmax.xlane.f32.xlu0 %v2867
    %v2869 = vpop.xlane.xlu0 %2868
    %v2870 = vsel %vm350, %v2854, -inf
    %2871 = vmax.xlane.f32.xlu0 %v2870
    %v2872 = vpop.xlane.xlu0 %2871
    %v2873 = vsel %vm350, %v2857, -inf
    %2874 = vmax.xlane.f32.xlu0 %v2873
    %v2875 = vpop.xlane.xlu0 %2874
    %v2876 = vsel %vm350, %v2859, -inf
    %2877 = vmax.xlane.f32.xlu0 %v2876
    %v2878 = vpop.xlane.xlu0 %2877
    %v2879 = vsub.f32 %v2847, %v2863
    %v2880 = vsub.f32 %v2849, %v2866
    %v2881 = vsub.f32 %v2852, %v2869
    %v2882 = vsub.f32 %v2854, %v2872
    %v2883 = vsub.f32 %v2857, %v2875
    %v2884 = vsub.f32 %v2859, %v2878
    %v2885 = vmul.f32 %v2879, 1.442695
    %v2886 = vpow.pop %v2885
    %v2887 = vmul.f32 %v2880, 1.442695
    %v2888 = vpow.pop %v2887
    %v2889 = vmul.f32 %v2881, 1.442695
    %v2890 = vpow.pop %v2889
    %v2891 = vmul.f32 %v2882, 1.442695
    %v2892 = vpow.pop %v2891
    %v2893 = vmul.f32 %v2883, 1.442695
    %v2894 = vpow.pop %v2893
    %v2895 = vmul.f32 %v2884, 1.442695
    %v2896 = vpow.pop %v2895
    %v2897 = vsel %vm350, %v2886, 0.0
    %2898 = vadd.xlane.f32.xlu0 %v2897
    %v2899 = vpop.xlane.xlu0 %2898
    %v2900 = vsel %vm350, %v2888, 0.0
    %2901 = vadd.xlane.f32.xlu0 %v2900
    %v2902 = vpop.xlane.xlu0 %2901
    %v2903 = vsel %vm350, %v2890, 0.0
    %2904 = vadd.xlane.f32.xlu0 %v2903
    %v2905 = vpop.xlane.xlu0 %2904
    %v2906 = vsel %vm350, %v2892, 0.0
    %2907 = vadd.xlane.f32.xlu0 %v2906
    %v2908 = vpop.xlane.xlu0 %2907
    %v2909 = vsel %vm350, %v2894, 0.0
    %2910 = vadd.xlane.f32.xlu0 %v2909
    %v2911 = vpop.xlane.xlu0 %2910
    %v2912 = vsel %vm350, %v2896, 0.0
    %2913 = vadd.xlane.f32.xlu0 %v2912
    %v2914 = vpop.xlane.xlu0 %2913
    %v2915 = vrcp.pop %v2899
    %v2916 = vrcp.pop %v2902
    %v2917 = vrcp.pop %v2905
    %v2918 = vrcp.pop %v2908
    %v2919 = vrcp.pop %v2911
    %v2920 = vrcp.pop %v2914
    %v2921 = vmul.f32 %v2886, %v2915
    %v2922 = vmul.f32 %v2888, %v2916
    %v2923 = vmul.f32 %v2890, %v2917
    %v2924 = vmul.f32 %v2892, %v2918
    %v2925 = vmul.f32 %v2894, %v2919
    %v2926 = vmul.f32 %v2896, %v2920
    %v2927 = vpack.c.bf16 %v2922, %v2921
    %v2928 = vpack.c.bf16 %v2924, %v2923
    %v2929 = vpack.c.bf16 %v2926, %v2925
    %v2930 = vpack.c.bf16 %v2801, %v2799
    %v2931 = vpack.c.bf16 %v2806, %v2804
    %v2932 = vpack.c.bf16 %v2811, %v2809
    %v2934 = vsel %vm350, %v2927, 0
    %v2937 = vsel %vm350, %v2928, 0
    %v2940 = vsel %vm350, %v2929, 0
    %2942 = vmatpush.bf16.msra.mxu0 0
    %2943 = vmatpush.bf16.msra.mxu0 0
    %2944 = vmatpush.bf16.msra.mxu0 0
    %2945 = vmatpush.bf16.msra.mxu0 0
    %2946 = vmatpush.bf16.msra.mxu0 0
    %2947 = vmatpush.bf16.msra.mxu0 %v2932
    %2948 = vmatpush.bf16.msra.mxu0 %v2931
    %2949 = vmatpush.bf16.msra.mxu0 %v2930
    %2950 = vmatmul.bf16.gmra.mxu0 %v2934
    %v2951 = vpop.f32.mrf.mxu0
    %v2952 = vadd.f32 0.0, %v2951
    %v2953 = vpop.f32.mrf.mxu0
    %v2954 = vadd.f32 0.0, %v2953
    %2955 = vmatmul.bf16.gmra.mxu0 %v2937
    %v2956 = vpop.f32.mrf.mxu0
    %v2957 = vadd.f32 0.0, %v2956
    %v2958 = vpop.f32.mrf.mxu0
    %v2959 = vadd.f32 0.0, %v2958
    %2960 = vmatmul.bf16.gmra.mxu0 %v2940
    %v2961 = vpop.f32.mrf.mxu0
    %v2962 = vadd.f32 0.0, %v2961
    %v2963 = vpop.f32.mrf.mxu0
    %v2964 = vadd.f32 0.0, %v2963
    %2965 = vdwg.mxu0
    %v2966 = vpack.c.bf16 %v2954, %v2952
    %v2967 = vpack.c.bf16 %v2959, %v2957
    %v2968 = vpack.c.bf16 %v2964, %v2962
    %s2969 = scalar_lea.vmem %s11, 24
    %v2970 = vld [vmem:[%s2969] sm:$0xf]
    %v2972 = vsel %vm307, %v2966, 0
    %v2975 = vsel %vm307, %v2967, 0
    %v2978 = vsel %vm307, %v2968, 0
    %v2981 = vsel %vm765, %v2970, 0
    %2983 = vmatpush.bf16.msra.mxu0 0
    %2984 = vmatpush.bf16.msra.mxu0 0
    %2985 = vmatpush.bf16.msra.mxu0 0
    %2986 = vmatpush.bf16.msra.mxu0 0
    %2987 = vmatpush.bf16.msra.mxu0 0
    %2988 = vmatpush.bf16.msra.mxu0 0
    %2989 = vmatpush.bf16.msra.mxu0 0
    %2990 = vmatpush.bf16.msra.mxu0 %v2981
    %2991 = vmatmul.bf16.gmra.mxu0 %v2972
    %v2992 = vpop.f32.mrf.mxu0
    %v2993 = vadd.f32 0.0, %v2992
    %v2994 = vpop.f32.mrf.mxu0
    %v2995 = vadd.f32 0.0, %v2994
    %2996 = vmatmul.bf16.gmra.mxu0 %v2975
    %v2997 = vpop.f32.mrf.mxu0
    %v2998 = vadd.f32 0.0, %v2997
    %v2999 = vpop.f32.mrf.mxu0
    %v3000 = vadd.f32 0.0, %v2999
    %3001 = vmatmul.bf16.gmra.mxu0 %v2978
    %v3002 = vpop.f32.mrf.mxu0
    %v3003 = vadd.f32 0.0, %v3002
    %v3004 = vpop.f32.mrf.mxu0
    %v3005 = vadd.f32 0.0, %v3004
    %3006 = vdwg.mxu0
    %v3007 = vadd.f32 %v2661, %v2993
    %v3008 = vadd.f32 %v2663, %v2995
    %v3009 = vadd.f32 %v2666, %v2998
    %v3010 = vadd.f32 %v2668, %v3000
    %v3011 = vadd.f32 %v2671, %v3003
    %v3012 = vadd.f32 %v2673, %v3005
    %s3013 = scalar_lea.vmem %s5, 112
    %v3014 = vld [vmem:[%s3013] sm:$0xf]
    %v3015 = vld [vmem:[%s3013 + $0x4] sm:$0xf]
    %v3016 = vld [vmem:[%s3013 + $0x8] sm:$0xf]
    %v3017 = vld [vmem:[%s3013 + $0xc] sm:$0xf]
    %s3018 = scalar_lea.vmem %s8, 7
    %v3019 = vld [vmem:[%s3018] sm:$0x1]
    %v3021 = vperm.slane %v3019, 0
    %v3027 = vunpack.c.l.b16 %v3014
    %v3028 = vunpack.c.l.b16 %v3015
    %v3029 = vunpack.c.l.b16 %v3016
    %v3030 = vunpack.c.l.b16 %v3017
    %v3031 = vpack.c.b16 %v3028, %v3027
    %v3032 = vpack.c.b16 %v3030, %v3029
    %3035 = vmatpush.bf16.msra.mxu0 0
    %3036 = vmatpush.bf16.msra.mxu0 0
    %3037 = vmatpush.bf16.msra.mxu0 0
    %3038 = vmatpush.bf16.msra.mxu0 0
    %3039 = vmatpush.bf16.msra.mxu0 0
    %3040 = vmatpush.bf16.msra.mxu0 0
    %3041 = vmatpush.bf16.msra.mxu0 %v3032
    %3042 = vmatpush.bf16.msra.mxu0 %v3031
    %3043 = vmatmul.bf16.gmra.mxu0 %v2025
    %v3044 = vpop.f32.mrf.mxu0
    %v3045 = vadd.f32 %v3021, %v3044
    %v3046 = vpop.f32.mrf.mxu0
    %v3047 = vadd.f32 %v3021, %v3046
    %3048 = vmatmul.bf16.gmra.mxu0 %v2028
    %v3049 = vpop.f32.mrf.mxu0
    %v3050 = vadd.f32 %v3021, %v3049
    %v3051 = vpop.f32.mrf.mxu0
    %v3052 = vadd.f32 %v3021, %v3051
    %3053 = vmatmul.bf16.gmra.mxu0 %v2031
    %v3054 = vpop.f32.mrf.mxu0
    %v3055 = vadd.f32 %v3021, %v3054
    %v3056 = vpop.f32.mrf.mxu0
    %v3057 = vadd.f32 %v3021, %v3056
    %3058 = vdwg.mxu0
    %s3059 = scalar_lea.vmem %s6, 112
    %v3060 = vld [vmem:[%s3059] sm:$0xf]
    %v3061 = vld [vmem:[%s3059 + $0x4] sm:$0xf]
    %v3062 = vld [vmem:[%s3059 + $0x8] sm:$0xf]
    %v3063 = vld [vmem:[%s3059 + $0xc] sm:$0xf]
    %s3064 = scalar_lea.vmem %s9, 7
    %v3065 = vld [vmem:[%s3064] sm:$0x1]
    %v3067 = vperm.slane %v3065, 0
    %v3073 = vunpack.c.l.b16 %v3060
    %v3074 = vunpack.c.l.b16 %v3061
    %v3075 = vunpack.c.l.b16 %v3062
    %v3076 = vunpack.c.l.b16 %v3063
    %v3077 = vpack.c.b16 %v3074, %v3073
    %v3078 = vpack.c.b16 %v3076, %v3075
    %3081 = vmatpush.bf16.msra.mxu0 0
    %3082 = vmatpush.bf16.msra.mxu0 0
    %3083 = vmatpush.bf16.msra.mxu0 0
    %3084 = vmatpush.bf16.msra.mxu0 0
    %3085 = vmatpush.bf16.msra.mxu0 0
    %3086 = vmatpush.bf16.msra.mxu0 0
    %3087 = vmatpush.bf16.msra.mxu0 %v3078
    %3088 = vmatpush.bf16.msra.mxu0 %v3077
    %3089 = vmatmul.bf16.gmra.mxu0 %v2025
    %v3090 = vpop.f32.mrf.mxu0
    %v3091 = vadd.f32 %v3067, %v3090
    %v3092 = vpop.f32.mrf.mxu0
    %v3093 = vadd.f32 %v3067, %v3092
    %3094 = vmatmul.bf16.gmra.mxu0 %v2028
    %v3095 = vpop.f32.mrf.mxu0
    %v3096 = vadd.f32 %v3067, %v3095
    %v3097 = vpop.f32.mrf.mxu0
    %v3098 = vadd.f32 %v3067, %v3097
    %3099 = vmatmul.bf16.gmra.mxu0 %v2031
    %v3100 = vpop.f32.mrf.mxu0
    %v3101 = vadd.f32 %v3067, %v3100
    %v3102 = vpop.f32.mrf.mxu0
    %v3103 = vadd.f32 %v3067, %v3102
    %3104 = vdwg.mxu0
    %s3105 = scalar_lea.vmem %s7, 112
    %v3106 = vld [vmem:[%s3105] sm:$0xf]
    %v3107 = vld [vmem:[%s3105 + $0x4] sm:$0xf]
    %v3108 = vld [vmem:[%s3105 + $0x8] sm:$0xf]
    %v3109 = vld [vmem:[%s3105 + $0xc] sm:$0xf]
    %s3110 = scalar_lea.vmem %s10, 7
    %v3111 = vld [vmem:[%s3110] sm:$0x1]
    %v3113 = vperm.slane %v3111, 0
    %v3119 = vunpack.c.l.b16 %v3106
    %v3120 = vunpack.c.l.b16 %v3107
    %v3121 = vunpack.c.l.b16 %v3108
    %v3122 = vunpack.c.l.b16 %v3109
    %v3123 = vpack.c.b16 %v3120, %v3119
    %v3124 = vpack.c.b16 %v3122, %v3121
    %3127 = vmatpush.bf16.msra.mxu0 0
    %3128 = vmatpush.bf16.msra.mxu0 0
    %3129 = vmatpush.bf16.msra.mxu0 0
    %3130 = vmatpush.bf16.msra.mxu0 0
    %3131 = vmatpush.bf16.msra.mxu0 0
    %3132 = vmatpush.bf16.msra.mxu0 0
    %3133 = vmatpush.bf16.msra.mxu0 %v3124
    %3134 = vmatpush.bf16.msra.mxu0 %v3123
    %3135 = vmatmul.bf16.gmra.mxu0 %v2025
    %v3136 = vpop.f32.mrf.mxu0
    %v3137 = vadd.f32 %v3113, %v3136
    %v3138 = vpop.f32.mrf.mxu0
    %v3139 = vadd.f32 %v3113, %v3138
    %3140 = vmatmul.bf16.gmra.mxu0 %v2028
    %v3141 = vpop.f32.mrf.mxu0
    %v3142 = vadd.f32 %v3113, %v3141
    %v3143 = vpop.f32.mrf.mxu0
    %v3144 = vadd.f32 %v3113, %v3143
    %3145 = vmatmul.bf16.gmra.mxu0 %v2031
    %v3146 = vpop.f32.mrf.mxu0
    %v3147 = vadd.f32 %v3113, %v3146
    %v3148 = vpop.f32.mrf.mxu0
    %v3149 = vadd.f32 %v3113, %v3148
    %3150 = vdwg.mxu0
    %v3151 = vpack.c.bf16 %v3047, %v3045
    %v3152 = vpack.c.bf16 %v3052, %v3050
    %v3153 = vpack.c.bf16 %v3057, %v3055
    %v3154 = vpack.c.bf16 %v3093, %v3091
    %v3155 = vpack.c.bf16 %v3098, %v3096
    %v3156 = vpack.c.bf16 %v3103, %v3101
    %v3158 = vsel %vm307, %v3151, 0
    %v3161 = vsel %vm307, %v3152, 0
    %v3164 = vsel %vm307, %v3153, 0
    %v3167 = vsel %vm307, %v3154, 0
    %v3170 = vsel %vm307, %v3155, 0
    %v3173 = vsel %vm307, %v3156, 0
    %3175 = vmatpush.bf16.xpose.msra.mxu0 0
    %3176 = vmatpush.bf16.xpose.msra.mxu0 0
    %3177 = vmatpush.bf16.xpose.msra.mxu0 0
    %3178 = vmatpush.bf16.xpose.msra.mxu0 0
    %3179 = vmatpush.bf16.xpose.msra.mxu0 0
    %3180 = vmatpush.bf16.xpose.msra.mxu0 %v3173
    %3181 = vmatpush.bf16.xpose.msra.mxu0 %v3170
    %3182 = vmatpush.bf16.xpose.msra.mxu0 %v3167
    %3183 = vmatmul.bf16.gmra.mxu0 %v3158
    %v3184 = vpop.f32.mrf.mxu0
    %v3185 = vadd.f32 %v146, %v3184
    %v3186 = vpop.f32.mrf.mxu0
    %v3187 = vadd.f32 %v147, %v3186
    %3188 = vmatmul.bf16.gmra.mxu0 %v3161
    %v3189 = vpop.f32.mrf.mxu0
    %v3190 = vadd.f32 %v148, %v3189
    %v3191 = vpop.f32.mrf.mxu0
    %v3192 = vadd.f32 %v149, %v3191
    %3193 = vmatmul.bf16.gmra.mxu0 %v3164
    %v3194 = vpop.f32.mrf.mxu0
    %v3195 = vadd.f32 %v150, %v3194
    %v3196 = vpop.f32.mrf.mxu0
    %v3197 = vadd.f32 %v151, %v3196
    %3198 = vdwg.mxu0
    %v3199 = vsel %vm350, %v3185, -inf
    %3200 = vmax.xlane.f32.xlu0 %v3199
    %v3201 = vpop.xlane.xlu0 %3200
    %v3202 = vsel %vm350, %v3187, -inf
    %3203 = vmax.xlane.f32.xlu0 %v3202
    %v3204 = vpop.xlane.xlu0 %3203
    %v3205 = vsel %vm350, %v3190, -inf
    %3206 = vmax.xlane.f32.xlu0 %v3205
    %v3207 = vpop.xlane.xlu0 %3206
    %v3208 = vsel %vm350, %v3192, -inf
    %3209 = vmax.xlane.f32.xlu0 %v3208
    %v3210 = vpop.xlane.xlu0 %3209
    %v3211 = vsel %vm350, %v3195, -inf
    %3212 = vmax.xlane.f32.xlu0 %v3211
    %v3213 = vpop.xlane.xlu0 %3212
    %v3214 = vsel %vm350, %v3197, -inf
    %3215 = vmax.xlane.f32.xlu0 %v3214
    %v3216 = vpop.xlane.xlu0 %3215
    %v3217 = vsub.f32 %v3185, %v3201
    %v3218 = vsub.f32 %v3187, %v3204
    %v3219 = vsub.f32 %v3190, %v3207
    %v3220 = vsub.f32 %v3192, %v3210
    %v3221 = vsub.f32 %v3195, %v3213
    %v3222 = vsub.f32 %v3197, %v3216
    %v3223 = vmul.f32 %v3217, 1.442695
    %v3224 = vpow.pop %v3223
    %v3225 = vmul.f32 %v3218, 1.442695
    %v3226 = vpow.pop %v3225
    %v3227 = vmul.f32 %v3219, 1.442695
    %v3228 = vpow.pop %v3227
    %v3229 = vmul.f32 %v3220, 1.442695
    %v3230 = vpow.pop %v3229
    %v3231 = vmul.f32 %v3221, 1.442695
    %v3232 = vpow.pop %v3231
    %v3233 = vmul.f32 %v3222, 1.442695
    %v3234 = vpow.pop %v3233
    %v3235 = vsel %vm350, %v3224, 0.0
    %3236 = vadd.xlane.f32.xlu0 %v3235
    %v3237 = vpop.xlane.xlu0 %3236
    %v3238 = vsel %vm350, %v3226, 0.0
    %3239 = vadd.xlane.f32.xlu0 %v3238
    %v3240 = vpop.xlane.xlu0 %3239
    %v3241 = vsel %vm350, %v3228, 0.0
    %3242 = vadd.xlane.f32.xlu0 %v3241
    %v3243 = vpop.xlane.xlu0 %3242
    %v3244 = vsel %vm350, %v3230, 0.0
    %3245 = vadd.xlane.f32.xlu0 %v3244
    %v3246 = vpop.xlane.xlu0 %3245
    %v3247 = vsel %vm350, %v3232, 0.0
    %3248 = vadd.xlane.f32.xlu0 %v3247
    %v3249 = vpop.xlane.xlu0 %3248
    %v3250 = vsel %vm350, %v3234, 0.0
    %3251 = vadd.xlane.f32.xlu0 %v3250
    %v3252 = vpop.xlane.xlu0 %3251
    %v3253 = vrcp.pop %v3237
    %v3254 = vrcp.pop %v3240
    %v3255 = vrcp.pop %v3243
    %v3256 = vrcp.pop %v3246
    %v3257 = vrcp.pop %v3249
    %v3258 = vrcp.pop %v3252
    %v3259 = vmul.f32 %v3224, %v3253
    %v3260 = vmul.f32 %v3226, %v3254
    %v3261 = vmul.f32 %v3228, %v3255
    %v3262 = vmul.f32 %v3230, %v3256
    %v3263 = vmul.f32 %v3232, %v3257
    %v3264 = vmul.f32 %v3234, %v3258
    %v3265 = vpack.c.bf16 %v3260, %v3259
    %v3266 = vpack.c.bf16 %v3262, %v3261
    %v3267 = vpack.c.bf16 %v3264, %v3263
    %v3268 = vpack.c.bf16 %v3139, %v3137
    %v3269 = vpack.c.bf16 %v3144, %v3142
    %v3270 = vpack.c.bf16 %v3149, %v3147
    %v3272 = vsel %vm350, %v3265, 0
    %v3275 = vsel %vm350, %v3266, 0
    %v3278 = vsel %vm350, %v3267, 0
    %3280 = vmatpush.bf16.msra.mxu0 0
    %3281 = vmatpush.bf16.msra.mxu0 0
    %3282 = vmatpush.bf16.msra.mxu0 0
    %3283 = vmatpush.bf16.msra.mxu0 0
    %3284 = vmatpush.bf16.msra.mxu0 0
    %3285 = vmatpush.bf16.msra.mxu0 %v3270
    %3286 = vmatpush.bf16.msra.mxu0 %v3269
    %3287 = vmatpush.bf16.msra.mxu0 %v3268
    %3288 = vmatmul.bf16.gmra.mxu0 %v3272
    %v3289 = vpop.f32.mrf.mxu0
    %v3290 = vadd.f32 0.0, %v3289
    %v3291 = vpop.f32.mrf.mxu0
    %v3292 = vadd.f32 0.0, %v3291
    %3293 = vmatmul.bf16.gmra.mxu0 %v3275
    %v3294 = vpop.f32.mrf.mxu0
    %v3295 = vadd.f32 0.0, %v3294
    %v3296 = vpop.f32.mrf.mxu0
    %v3297 = vadd.f32 0.0, %v3296
    %3298 = vmatmul.bf16.gmra.mxu0 %v3278
    %v3299 = vpop.f32.mrf.mxu0
    %v3300 = vadd.f32 0.0, %v3299
    %v3301 = vpop.f32.mrf.mxu0
    %v3302 = vadd.f32 0.0, %v3301
    %3303 = vdwg.mxu0
    %v3304 = vpack.c.bf16 %v3292, %v3290
    %v3305 = vpack.c.bf16 %v3297, %v3295
    %v3306 = vpack.c.bf16 %v3302, %v3300
    %s3307 = scalar_lea.vmem %s11, 28
    %v3308 = vld [vmem:[%s3307] sm:$0xf]
    %v3310 = vsel %vm307, %v3304, 0
    %v3313 = vsel %vm307, %v3305, 0
    %v3316 = vsel %vm307, %v3306, 0
    %v3319 = vsel %vm765, %v3308, 0
    %3321 = vmatpush.bf16.msra.mxu0 0
    %3322 = vmatpush.bf16.msra.mxu0 0
    %3323 = vmatpush.bf16.msra.mxu0 0
    %3324 = vmatpush.bf16.msra.mxu0 0
    %3325 = vmatpush.bf16.msra.mxu0 0
    %3326 = vmatpush.bf16.msra.mxu0 0
    %3327 = vmatpush.bf16.msra.mxu0 0
    %3328 = vmatpush.bf16.msra.mxu0 %v3319
    %3329 = vmatmul.bf16.gmra.mxu0 %v3310
    %v3330 = vpop.f32.mrf.mxu0
    %v3331 = vadd.f32 0.0, %v3330
    %v3332 = vpop.f32.mrf.mxu0
    %v3333 = vadd.f32 0.0, %v3332
    %3334 = vmatmul.bf16.gmra.mxu0 %v3313
    %v3335 = vpop.f32.mrf.mxu0
    %v3336 = vadd.f32 0.0, %v3335
    %v3337 = vpop.f32.mrf.mxu0
    %v3338 = vadd.f32 0.0, %v3337
    %3339 = vmatmul.bf16.gmra.mxu0 %v3316
    %v3340 = vpop.f32.mrf.mxu0
    %v3341 = vadd.f32 0.0, %v3340
    %v3342 = vpop.f32.mrf.mxu0
    %v3343 = vadd.f32 0.0, %v3342
    %3344 = vdwg.mxu0
    %v3345 = vadd.f32 %v3007, %v3331
    %v3346 = vadd.f32 %v3008, %v3333
    %v3347 = vadd.f32 %v3009, %v3336
    %v3348 = vadd.f32 %v3010, %v3338
    %v3349 = vadd.f32 %v3011, %v3341
    %v3350 = vadd.f32 %v3012, %v3343
    %s3351 = scalar_lea.vmem %s12, 1
    %v3352 = vld [vmem:[%s3351] sm:$0x1]
    %v3354 = vperm.slane %v3352, 0
    %v3356 = vadd.f32 %v3345, %v3354
    %v3357 = vadd.f32 %v3346, %v3354
    %v3358 = vadd.f32 %v3347, %v3354
    %v3359 = vadd.f32 %v3348, %v3354
    %v3360 = vadd.f32 %v3349, %v3354
    %v3361 = vadd.f32 %v3350, %v3354
    %v3362 = vadd.f32 %v1985, %v3356
    %v3363 = vadd.f32 %v1986, %v3357
    %v3364 = vadd.f32 %v1987, %v3358
    %v3365 = vadd.f32 %v1988, %v3359
    %v3366 = vadd.f32 %v1989, %v3360
    %v3367 = vadd.f32 %v1990, %v3361
    %v3368 = vsel %vm179, %v3362, 0.0
    %3369 = vadd.xlane.f32.xlu0 %v3368
    %v3370 = vpop.xlane.xlu0 %3369
    %v3371 = vsel %vm179, %v3363, 0.0
    %3372 = vadd.xlane.f32.xlu0 %v3371
    %v3373 = vpop.xlane.xlu0 %3372
    %v3374 = vsel %vm179, %v3364, 0.0
    %3375 = vadd.xlane.f32.xlu0 %v3374
    %v3376 = vpop.xlane.xlu0 %3375
    %v3377 = vsel %vm179, %v3365, 0.0
    %3378 = vadd.xlane.f32.xlu0 %v3377
    %v3379 = vpop.xlane.xlu0 %3378
    %v3380 = vsel %vm179, %v3366, 0.0
    %3381 = vadd.xlane.f32.xlu0 %v3380
    %v3382 = vpop.xlane.xlu0 %3381
    %v3383 = vsel %vm179, %v3367, 0.0
    %3384 = vadd.xlane.f32.xlu0 %v3383
    %v3385 = vpop.xlane.xlu0 %3384
    %v3386 = vmul.f32 %v3370, %v1545
    %v3387 = vmul.f32 %v3373, %v1545
    %v3388 = vmul.f32 %v3376, %v1545
    %v3389 = vmul.f32 %v3379, %v1545
    %v3390 = vmul.f32 %v3382, %v1545
    %v3391 = vmul.f32 %v3385, %v1545
    %v3392 = vsub.f32 %v3362, %v3386
    %v3393 = vsub.f32 %v3363, %v3387
    %v3394 = vsub.f32 %v3364, %v3388
    %v3395 = vsub.f32 %v3365, %v3389
    %v3396 = vsub.f32 %v3366, %v3390
    %v3397 = vsub.f32 %v3367, %v3391
    %v3398 = vmul.f32 %v3392, %v3392
    %v3399 = vmul.f32 %v3393, %v3393
    %v3400 = vmul.f32 %v3394, %v3394
    %v3401 = vmul.f32 %v3395, %v3395
    %v3402 = vmul.f32 %v3396, %v3396
    %v3403 = vmul.f32 %v3397, %v3397
    %v3404 = vsel %vm179, %v3398, 0.0
    %3405 = vadd.xlane.f32.xlu0 %v3404
    %v3406 = vpop.xlane.xlu0 %3405
    %v3407 = vsel %vm179, %v3399, 0.0
    %3408 = vadd.xlane.f32.xlu0 %v3407
    %v3409 = vpop.xlane.xlu0 %3408
    %v3410 = vsel %vm179, %v3400, 0.0
    %3411 = vadd.xlane.f32.xlu0 %v3410
    %v3412 = vpop.xlane.xlu0 %3411
    %v3413 = vsel %vm179, %v3401, 0.0
    %3414 = vadd.xlane.f32.xlu0 %v3413
    %v3415 = vpop.xlane.xlu0 %3414
    %v3416 = vsel %vm179, %v3402, 0.0
    %3417 = vadd.xlane.f32.xlu0 %v3416
    %v3418 = vpop.xlane.xlu0 %3417
    %v3419 = vsel %vm179, %v3403, 0.0
    %3420 = vadd.xlane.f32.xlu0 %v3419
    %v3421 = vpop.xlane.xlu0 %3420
    %v3422 = vmul.f32 %v3406, %v1545
    %v3423 = vmul.f32 %v3409, %v1545
    %v3424 = vmul.f32 %v3412, %v1545
    %v3425 = vmul.f32 %v3415, %v1545
    %v3426 = vmul.f32 %v3418, %v1545
    %v3427 = vmul.f32 %v3421, %v1545
    %v3428 = vadd.f32 %v3422, 1e-05
    %v3429 = vadd.f32 %v3423, 1e-05
    %v3430 = vadd.f32 %v3424, 1e-05
    %v3431 = vadd.f32 %v3425, 1e-05
    %v3432 = vadd.f32 %v3426, 1e-05
    %v3433 = vadd.f32 %v3427, 1e-05
    %v3434 = vrsqrt.pop %v3428
    %v3435 = vmul.f32 %v3434, %v3428
    %v3436 = vmul.f32 %v3435, %v3434
    %v3437 = vmul.f32 0.5, %v3436
    %v3438 = vsub.f32 1.5, %v3437
    %v3439 = vmul.f32 %v3434, %v3438
    %vm3440 = vweird.f32 %v3428
    %vm3441 = vweird.f32 %v3434
    %vm3442 = vmor %vm3440, %vm3441
    %v3443 = vsel %vm3442, %v3434, %v3439
    %v3444 = vrsqrt.pop %v3429
    %v3445 = vmul.f32 %v3444, %v3429
    %v3446 = vmul.f32 %v3445, %v3444
    %v3447 = vmul.f32 0.5, %v3446
    %v3448 = vsub.f32 1.5, %v3447
    %v3449 = vmul.f32 %v3444, %v3448
    %vm3450 = vweird.f32 %v3429
    %vm3451 = vweird.f32 %v3444
    %vm3452 = vmor %vm3450, %vm3451
    %v3453 = vsel %vm3452, %v3444, %v3449
    %v3454 = vrsqrt.pop %v3430
    %v3455 = vmul.f32 %v3454, %v3430
    %v3456 = vmul.f32 %v3455, %v3454
    %v3457 = vmul.f32 0.5, %v3456
    %v3458 = vsub.f32 1.5, %v3457
    %v3459 = vmul.f32 %v3454, %v3458
    %vm3460 = vweird.f32 %v3430
    %vm3461 = vweird.f32 %v3454
    %vm3462 = vmor %vm3460, %vm3461
    %v3463 = vsel %vm3462, %v3454, %v3459
    %v3464 = vrsqrt.pop %v3431
    %v3465 = vmul.f32 %v3464, %v3431
    %v3466 = vmul.f32 %v3465, %v3464
    %v3467 = vmul.f32 0.5, %v3466
    %v3468 = vsub.f32 1.5, %v3467
    %v3469 = vmul.f32 %v3464, %v3468
    %vm3470 = vweird.f32 %v3431
    %vm3471 = vweird.f32 %v3464
    %vm3472 = vmor %vm3470, %vm3471
    %v3473 = vsel %vm3472, %v3464, %v3469
    %v3474 = vrsqrt.pop %v3432
    %v3475 = vmul.f32 %v3474, %v3432
    %v3476 = vmul.f32 %v3475, %v3474
    %v3477 = vmul.f32 0.5, %v3476
    %v3478 = vsub.f32 1.5, %v3477
    %v3479 = vmul.f32 %v3474, %v3478
    %vm3480 = vweird.f32 %v3432
    %vm3481 = vweird.f32 %v3474
    %vm3482 = vmor %vm3480, %vm3481
    %v3483 = vsel %vm3482, %v3474, %v3479
    %v3484 = vrsqrt.pop %v3433
    %v3485 = vmul.f32 %v3484, %v3433
    %v3486 = vmul.f32 %v3485, %v3484
    %v3487 = vmul.f32 0.5, %v3486
    %v3488 = vsub.f32 1.5, %v3487
    %v3489 = vmul.f32 %v3484, %v3488
    %vm3490 = vweird.f32 %v3433
    %vm3491 = vweird.f32 %v3484
    %vm3492 = vmor %vm3490, %vm3491
    %v3493 = vsel %vm3492, %v3484, %v3489
    %v3494 = vmul.f32 %v3392, %v3443
    %v3495 = vmul.f32 %v3393, %v3453
    %v3496 = vmul.f32 %v3394, %v3463
    %v3497 = vmul.f32 %v3395, %v3473
    %v3498 = vmul.f32 %v3396, %v3483
    %v3499 = vmul.f32 %v3397, %v3493
    %v3501 = vperm.slane %v1992, 0
    %v3503 = vmul.f32 %v3494, %v3501
    %v3504 = vmul.f32 %v3495, %v3501
    %v3505 = vmul.f32 %v3496, %v3501
    %v3506 = vmul.f32 %v3497, %v3501
    %v3507 = vmul.f32 %v3498, %v3501
    %v3508 = vmul.f32 %v3499, %v3501
    %v3510 = vperm.slane %v1994, 0
    %v3512 = vadd.f32 %v3503, %v3510
    %v3513 = vadd.f32 %v3504, %v3510
    %v3514 = vadd.f32 %v3505, %v3510
    %v3515 = vadd.f32 %v3506, %v3510
    %v3516 = vadd.f32 %v3507, %v3510
    %v3517 = vadd.f32 %v3508, %v3510
    %v3518 = vpack.c.bf16 %v3513, %v3512
    %v3519 = vpack.c.bf16 %v3515, %v3514
    %v3520 = vpack.c.bf16 %v3517, %v3516
    %s3521 = scalar_lea.vmem %s13, 16
    %v3522 = vld [vmem:[%s3521] sm:$0xf]
    %v3523 = vld [vmem:[%s3521 + $0x4] sm:$0xf]
    %v3524 = vld [vmem:[%s3521 + $0x8] sm:$0xf]
    %v3525 = vld [vmem:[%s3521 + $0xc] sm:$0xf]
    %s3526 = scalar_lea.vmem %s14, 1
    %v3527 = vld [vmem:[%s3526] sm:$0x1]
    %v3529 = vperm.slane %v3527, 0
    %v3535 = vunpack.c.l.b16 %v3522
    %v3536 = vunpack.c.l.b16 %v3523
    %v3537 = vunpack.c.l.b16 %v3524
    %v3538 = vunpack.c.l.b16 %v3525
    %v3539 = vpack.c.b16 %v3536, %v3535
    %v3540 = vpack.c.b16 %v3538, %v3537
    %v3544 = vsel %vm179, %v3518, 0
    %v3547 = vsel %vm179, %v3519, 0
    %v3550 = vsel %vm179, %v3520, 0
    %3552 = vmatpush.bf16.msra.mxu0 0
    %3553 = vmatpush.bf16.msra.mxu0 0
    %3554 = vmatpush.bf16.msra.mxu0 0
    %3555 = vmatpush.bf16.msra.mxu0 0
    %3556 = vmatpush.bf16.msra.mxu0 0
    %3557 = vmatpush.bf16.msra.mxu0 0
    %3558 = vmatpush.bf16.msra.mxu0 %v3540
    %3559 = vmatpush.bf16.msra.mxu0 %v3539
    %3560 = vmatmul.bf16.gmra.mxu0 %v3544
    %v3561 = vpop.f32.mrf.mxu0
    %v3562 = vadd.f32 %v3529, %v3561
    %v3563 = vpop.f32.mrf.mxu0
    %v3564 = vadd.f32 %v3529, %v3563
    %3565 = vmatmul.bf16.gmra.mxu0 %v3547
    %v3566 = vpop.f32.mrf.mxu0
    %v3567 = vadd.f32 %v3529, %v3566
    %v3568 = vpop.f32.mrf.mxu0
    %v3569 = vadd.f32 %v3529, %v3568
    %3570 = vmatmul.bf16.gmra.mxu0 %v3550
    %v3571 = vpop.f32.mrf.mxu0
    %v3572 = vadd.f32 %v3529, %v3571
    %v3573 = vpop.f32.mrf.mxu0
    %v3574 = vadd.f32 %v3529, %v3573
    %3575 = vdwg.mxu0
    %v3576 = vmax.f32 %v3562, 0.0
    %v3577 = vmax.f32 %v3564, 0.0
    %v3578 = vmax.f32 %v3567, 0.0
    %v3579 = vmax.f32 %v3569, 0.0
    %v3580 = vmax.f32 %v3572, 0.0
    %v3581 = vmax.f32 %v3574, 0.0
    %v3582 = vpack.c.bf16 %v3577, %v3576
    %v3583 = vpack.c.bf16 %v3579, %v3578
    %v3584 = vpack.c.bf16 %v3581, %v3580
    %s3585 = scalar_lea.vmem %s15, 64
    %v3586 = vld [vmem:[%s3585] sm:$0xf]
    %v3587 = vld [vmem:[%s3585 + $0x4] sm:$0xf]
    %v3588 = vld [vmem:[%s3585 + $0x8] sm:$0xf]
    %v3589 = vld [vmem:[%s3585 + $0xc] sm:$0xf]
    %v3590 = vld [vmem:[%s3585 + $0x10] sm:$0xf]
    %v3591 = vld [vmem:[%s3585 + $0x14] sm:$0xf]
    %v3592 = vld [vmem:[%s3585 + $0x18] sm:$0xf]
    %v3593 = vld [vmem:[%s3585 + $0x1c] sm:$0xf]
    %v3594 = vld [vmem:[%s3585 + $0x20] sm:$0xf]
    %v3595 = vld [vmem:[%s3585 + $0x24] sm:$0xf]
    %v3596 = vld [vmem:[%s3585 + $0x28] sm:$0xf]
    %v3597 = vld [vmem:[%s3585 + $0x2c] sm:$0xf]
    %v3598 = vld [vmem:[%s3585 + $0x30] sm:$0xf]
    %v3599 = vld [vmem:[%s3585 + $0x34] sm:$0xf]
    %v3600 = vld [vmem:[%s3585 + $0x38] sm:$0xf]
    %v3601 = vld [vmem:[%s3585 + $0x3c] sm:$0xf]
    %s3602 = scalar_lea.vmem %s16, 1
    %v3603 = vld [vmem:[%s3602] sm:$0x1]
    %v3605 = vperm.slane %v3603, 0
    %v3623 = vunpack.c.l.b16 %v3586
    %v3624 = vunpack.c.l.b16 %v3587
    %v3625 = vunpack.c.l.b16 %v3588
    %v3626 = vunpack.c.l.b16 %v3589
    %v3627 = vunpack.c.l.b16 %v3590
    %v3628 = vunpack.c.l.b16 %v3591
    %v3629 = vunpack.c.l.b16 %v3592
    %v3630 = vunpack.c.l.b16 %v3593
    %v3631 = vunpack.c.l.b16 %v3594
    %v3632 = vunpack.c.l.b16 %v3595
    %v3633 = vunpack.c.l.b16 %v3596
    %v3634 = vunpack.c.l.b16 %v3597
    %v3635 = vunpack.c.l.b16 %v3598
    %v3636 = vunpack.c.l.b16 %v3599
    %v3637 = vunpack.c.l.b16 %v3600
    %v3638 = vunpack.c.l.b16 %v3601
    %v3639 = vpack.c.b16 %v3624, %v3623
    %v3640 = vpack.c.b16 %v3626, %v3625
    %v3641 = vpack.c.b16 %v3628, %v3627
    %v3642 = vpack.c.b16 %v3630, %v3629
    %v3643 = vpack.c.b16 %v3632, %v3631
    %v3644 = vpack.c.b16 %v3634, %v3633
    %v3645 = vpack.c.b16 %v3636, %v3635
    %v3646 = vpack.c.b16 %v3638, %v3637
    %3655 = vmatpush.bf16.msra.mxu0 %v3646
    %3656 = vmatpush.bf16.msra.mxu0 %v3645
    %3657 = vmatpush.bf16.msra.mxu0 %v3644
    %3658 = vmatpush.bf16.msra.mxu0 %v3643
    %3659 = vmatpush.bf16.msra.mxu0 %v3642
    %3660 = vmatpush.bf16.msra.mxu0 %v3641
    %3661 = vmatpush.bf16.msra.mxu0 %v3640
    %3662 = vmatpush.bf16.msra.mxu0 %v3639
    %3663 = vmatmul.bf16.gmra.mxu0 %v3582
    %v3664 = vpop.f32.mrf.mxu0
    %v3665 = vadd.f32 %v3605, %v3664
    %v3666 = vpop.f32.mrf.mxu0
    %v3667 = vadd.f32 %v3605, %v3666
    %3668 = vmatmul.bf16.gmra.mxu0 %v3583
    %v3669 = vpop.f32.mrf.mxu0
    %v3670 = vadd.f32 %v3605, %v3669
    %v3671 = vpop.f32.mrf.mxu0
    %v3672 = vadd.f32 %v3605, %v3671
    %3673 = vmatmul.bf16.gmra.mxu0 %v3584
    %v3674 = vpop.f32.mrf.mxu0
    %v3675 = vadd.f32 %v3605, %v3674
    %v3676 = vpop.f32.mrf.mxu0
    %v3677 = vadd.f32 %v3605, %v3676
    %3678 = vdwg.mxu0
    %v3679 = vadd.f32 %v3512, %v3665
    %v3680 = vadd.f32 %v3513, %v3667
    %v3681 = vadd.f32 %v3514, %v3670
    %v3682 = vadd.f32 %v3515, %v3672
    %v3683 = vadd.f32 %v3516, %v3675
    %v3684 = vadd.f32 %v3517, %v3677
    %v3685 = vsel %vm179, %v3679, 0.0
    %3686 = vadd.xlane.f32.xlu0 %v3685
    %v3687 = vpop.xlane.xlu0 %3686
    %v3688 = vsel %vm179, %v3680, 0.0
    %3689 = vadd.xlane.f32.xlu0 %v3688
    %v3690 = vpop.xlane.xlu0 %3689
    %v3691 = vsel %vm179, %v3681, 0.0
    %3692 = vadd.xlane.f32.xlu0 %v3691
    %v3693 = vpop.xlane.xlu0 %3692
    %v3694 = vsel %vm179, %v3682, 0.0
    %3695 = vadd.xlane.f32.xlu0 %v3694
    %v3696 = vpop.xlane.xlu0 %3695
    %v3697 = vsel %vm179, %v3683, 0.0
    %3698 = vadd.xlane.f32.xlu0 %v3697
    %v3699 = vpop.xlane.xlu0 %3698
    %v3700 = vsel %vm179, %v3684, 0.0
    %3701 = vadd.xlane.f32.xlu0 %v3700
    %v3702 = vpop.xlane.xlu0 %3701
    %v3703 = vmul.f32 %v3687, %v1545
    %v3704 = vmul.f32 %v3690, %v1545
    %v3705 = vmul.f32 %v3693, %v1545
    %v3706 = vmul.f32 %v3696, %v1545
    %v3707 = vmul.f32 %v3699, %v1545
    %v3708 = vmul.f32 %v3702, %v1545
    %v3709 = vsub.f32 %v3679, %v3703
    %v3710 = vsub.f32 %v3680, %v3704
    %v3711 = vsub.f32 %v3681, %v3705
    %v3712 = vsub.f32 %v3682, %v3706
    %v3713 = vsub.f32 %v3683, %v3707
    %v3714 = vsub.f32 %v3684, %v3708
    %v3715 = vmul.f32 %v3709, %v3709
    %v3716 = vmul.f32 %v3710, %v3710
    %v3717 = vmul.f32 %v3711, %v3711
    %v3718 = vmul.f32 %v3712, %v3712
    %v3719 = vmul.f32 %v3713, %v3713
    %v3720 = vmul.f32 %v3714, %v3714
    %v3721 = vsel %vm179, %v3715, 0.0
    %3722 = vadd.xlane.f32.xlu0 %v3721
    %v3723 = vpop.xlane.xlu0 %3722
    %v3724 = vsel %vm179, %v3716, 0.0
    %3725 = vadd.xlane.f32.xlu0 %v3724
    %v3726 = vpop.xlane.xlu0 %3725
    %v3727 = vsel %vm179, %v3717, 0.0
    %3728 = vadd.xlane.f32.xlu0 %v3727
    %v3729 = vpop.xlane.xlu0 %3728
    %v3730 = vsel %vm179, %v3718, 0.0
    %3731 = vadd.xlane.f32.xlu0 %v3730
    %v3732 = vpop.xlane.xlu0 %3731
    %v3733 = vsel %vm179, %v3719, 0.0
    %3734 = vadd.xlane.f32.xlu0 %v3733
    %v3735 = vpop.xlane.xlu0 %3734
    %v3736 = vsel %vm179, %v3720, 0.0
    %3737 = vadd.xlane.f32.xlu0 %v3736
    %v3738 = vpop.xlane.xlu0 %3737
    %v3739 = vmul.f32 %v3723, %v1545
    %v3740 = vmul.f32 %v3726, %v1545
    %v3741 = vmul.f32 %v3729, %v1545
    %v3742 = vmul.f32 %v3732, %v1545
    %v3743 = vmul.f32 %v3735, %v1545
    %v3744 = vmul.f32 %v3738, %v1545
    %v3745 = vadd.f32 %v3739, 1e-05
    %v3746 = vadd.f32 %v3740, 1e-05
    %v3747 = vadd.f32 %v3741, 1e-05
    %v3748 = vadd.f32 %v3742, 1e-05
    %v3749 = vadd.f32 %v3743, 1e-05
    %v3750 = vadd.f32 %v3744, 1e-05
    %v3751 = vrsqrt.pop %v3745
    %v3752 = vmul.f32 %v3751, %v3745
    %v3753 = vmul.f32 %v3752, %v3751
    %v3754 = vmul.f32 0.5, %v3753
    %v3755 = vsub.f32 1.5, %v3754
    %v3756 = vmul.f32 %v3751, %v3755
    %vm3757 = vweird.f32 %v3745
    %vm3758 = vweird.f32 %v3751
    %vm3759 = vmor %vm3757, %vm3758
    %v3760 = vsel %vm3759, %v3751, %v3756
    %v3761 = vrsqrt.pop %v3746
    %v3762 = vmul.f32 %v3761, %v3746
    %v3763 = vmul.f32 %v3762, %v3761
    %v3764 = vmul.f32 0.5, %v3763
    %v3765 = vsub.f32 1.5, %v3764
    %v3766 = vmul.f32 %v3761, %v3765
    %vm3767 = vweird.f32 %v3746
    %vm3768 = vweird.f32 %v3761
    %vm3769 = vmor %vm3767, %vm3768
    %v3770 = vsel %vm3769, %v3761, %v3766
    %v3771 = vrsqrt.pop %v3747
    %v3772 = vmul.f32 %v3771, %v3747
    %v3773 = vmul.f32 %v3772, %v3771
    %v3774 = vmul.f32 0.5, %v3773
    %v3775 = vsub.f32 1.5, %v3774
    %v3776 = vmul.f32 %v3771, %v3775
    %vm3777 = vweird.f32 %v3747
    %vm3778 = vweird.f32 %v3771
    %vm3779 = vmor %vm3777, %vm3778
    %v3780 = vsel %vm3779, %v3771, %v3776
    %v3781 = vrsqrt.pop %v3748
    %v3782 = vmul.f32 %v3781, %v3748
    %v3783 = vmul.f32 %v3782, %v3781
    %v3784 = vmul.f32 0.5, %v3783
    %v3785 = vsub.f32 1.5, %v3784
    %v3786 = vmul.f32 %v3781, %v3785
    %vm3787 = vweird.f32 %v3748
    %vm3788 = vweird.f32 %v3781
    %vm3789 = vmor %vm3787, %vm3788
    %v3790 = vsel %vm3789, %v3781, %v3786
    %v3791 = vrsqrt.pop %v3749
    %v3792 = vmul.f32 %v3791, %v3749
    %v3793 = vmul.f32 %v3792, %v3791
    %v3794 = vmul.f32 0.5, %v3793
    %v3795 = vsub.f32 1.5, %v3794
    %v3796 = vmul.f32 %v3791, %v3795
    %vm3797 = vweird.f32 %v3749
    %vm3798 = vweird.f32 %v3791
    %vm3799 = vmor %vm3797, %vm3798
    %v3800 = vsel %vm3799, %v3791, %v3796
    %v3801 = vrsqrt.pop %v3750
    %v3802 = vmul.f32 %v3801, %v3750
    %v3803 = vmul.f32 %v3802, %v3801
    %v3804 = vmul.f32 0.5, %v3803
    %v3805 = vsub.f32 1.5, %v3804
    %v3806 = vmul.f32 %v3801, %v3805
    %vm3807 = vweird.f32 %v3750
    %vm3808 = vweird.f32 %v3801
    %vm3809 = vmor %vm3807, %vm3808
    %v3810 = vsel %vm3809, %v3801, %v3806
    %v3811 = vmul.f32 %v3709, %v3760
    %v3812 = vmul.f32 %v3710, %v3770
    %v3813 = vmul.f32 %v3711, %v3780
    %v3814 = vmul.f32 %v3712, %v3790
    %v3815 = vmul.f32 %v3713, %v3800
    %v3816 = vmul.f32 %v3714, %v3810
    %v3818 = vperm.slane %v1996, 0
    %v3820 = vmul.f32 %v3811, %v3818
    %v3821 = vmul.f32 %v3812, %v3818
    %v3822 = vmul.f32 %v3813, %v3818
    %v3823 = vmul.f32 %v3814, %v3818
    %v3824 = vmul.f32 %v3815, %v3818
    %v3825 = vmul.f32 %v3816, %v3818
    %v3827 = vperm.slane %v1998, 0
    %v3829 = vadd.f32 %v3820, %v3827
    %v3830 = vadd.f32 %v3821, %v3827
    %v3831 = vadd.f32 %v3822, %v3827
    %v3832 = vadd.f32 %v3823, %v3827
    %v3833 = vadd.f32 %v3824, %v3827
    %v3834 = vadd.f32 %v3825, %v3827
    %3835 = vst.msk [vmem:[#allocation2] sm:$0xff] %vm179, %v3829
    %3836 = vst.msk [vmem:[#allocation2 + $0x8] sm:$0xff] %vm179, %v3830
    %3837 = vst.msk [vmem:[#allocation2 + $0x10] sm:$0xff] %vm179, %v3831
    %3838 = vst.msk [vmem:[#allocation2 + $0x18] sm:$0xff] %vm179, %v3832
    %3839 = vst.msk [vmem:[#allocation2 + $0x20] sm:$0xff] %vm179, %v3833
    %3840 = vst.msk [vmem:[#allocation2 + $0x28] sm:$0xff] %vm179, %v3834
    // Predicated region
    $region86: #{mtr_decoder_forward.1} parent=1 // pred_check
      _
    $region87: #{mtr_decoder_forward.1} parent=1 // pred_check_branch
      %3842 = sbr.rel (0) target = $region89
    $region88: #{mtr_decoder_forward.1} parent=1 // pred_region
      %3844 = vsyncadd [#allocation3], 0
      %s3845 = sshll.u32 [#allocation2], 4
      %s3846 = int_to_ptr.vmem [resolvable:$true] %s3845
      %s3847 = sshll.u32 %s21, 4
      %s3848 = int_to_ptr.hbm [resolvable:$true] %s3847
      %3853 = dma.vmem_to_hbm [thread:$0]  %s3846, 768, %s3848, [#allocation3], 128, 128, 8
    $region89: #{mtr_decoder_forward.1} parent=1 // pred_fallthru
      _
    // Predicated region
    $region90: #{mtr_decoder_forward.1} parent=1 // pred_check
      _
    $region91: #{mtr_decoder_forward.1} parent=1 // pred_check_branch
      %3855 = sbr.rel (0) target = $region93
    $region92: #{mtr_decoder_forward.1} parent=1 // pred_region
      %3857 = dma.done [#allocation3], 768
    $region93: #{mtr_decoder_forward.1} parent=1 // pred_fallthru
      _
    %3858 = vsyncpa [#allocation3], 1

</llo_original>
